<compile_context>
chip_gen: v7x
topology: tpu7x:2x2x1
jax: 0.10.0
libtpu: 0.0.40
codegen_flags: <defaults>
</compile_context>

<pallas_src>
import functools

import jax
import jax.numpy as jnp
from jax.experimental import pallas as pl
from jax.experimental.pallas import tpu as pltpu


def _round_up(a, b):
    return (a + b - 1) // b * b


def _aspp_conv_kernel(x_ref, w_ref, scale_ref, bias_ref, o_ref, *, shifts, m_ext):
    # x_ref:     (1, Hp*Wp, Cin)   bf16 zero-padded NHWC image, spatially flattened
    # w_ref:     (9, Cin, TCOUT)   bf16 conv weight, one (Cin, TCOUT) slab per tap
    # scale_ref: (1, TCOUT)        f32 folded BN scale  (gamma / sqrt(var+eps))
    # bias_ref:  (1, TCOUT)        f32 folded BN bias   (beta - mean*scale)
    # o_ref:     (1, m_ext, TCOUT) f32
    acc = jnp.zeros((m_ext, o_ref.shape[2]), jnp.float32)
    for t, s in enumerate(shifts):            # 9 static taps -> 9 MXU matmuls
        x_t = x_ref[0, pl.ds(s, m_ext), :]    # shifted window, no HBM re-read
        acc = acc + jnp.dot(x_t, w_ref[t], preferred_element_type=jnp.float32)
    y = acc * scale_ref[...] + bias_ref[...]             # fused BN (eval mode)
    o_ref[0] = jnp.maximum(y, 0.0).astype(o_ref.dtype)   # ReLU


def aspp_conv_forward(x_nchw, weight, gamma, beta, running_mean, running_var,
                      *, rate, eps=1e-5):
    """Forward pass of _ASPPConv.

    x_nchw:  (N, Cin, H, W)      float32
    weight:  (Cout, Cin, 3, 3)   conv weight (PyTorch layout), bias=False
    gamma/beta/running_mean/running_var: (Cout,)  BatchNorm2d params (eval mode)
    returns: (N, Cout, H, W)     float32
    """
    N, Cin, H, W = x_nchw.shape
    Cout = weight.shape[0]
    r = rate
    Hp, Wp = H + 2 * r, W + 2 * r
    # Kernel computes y[j] for flat j = h*Wp + w, j in [0, m_ext); columns with
    # w in [W, Wp) are throwaway and sliced off below.  Max read index is
    # (m_ext - 1) + max(shift) == Hp*Wp - 1, so every tap load is in bounds.
    m_ext = (H - 1) * Wp + W
    shifts = tuple(dy * r * Wp + dx * r for dy in range(3) for dx in range(3))

    # Lane-dense output tile; 256 fills the v6e/v7x MXU when Cout is large.
    # (On v5e, 128 remains the natural MXU width; only the >128 case differs.)
    TCOUT = 128 if Cout <= 128 else 256
    cout_pad = _round_up(Cout, TCOUT)
    n_ci = cout_pad // TCOUT

    # --- wrapper glue (one fused XLA pass: transpose + pad + cast) -----------
    x = jnp.transpose(x_nchw, (0, 2, 3, 1))                       # NHWC
    xp = jnp.pad(x, ((0, 0), (r, r), (r, r), (0, 0)))             # zero halo
    xp = xp.astype(jnp.bfloat16).reshape(N, Hp * Wp, Cin)         # flatten spatial

    # weight (Cout, Cin, 3, 3) -> (3, 3, Cin, Cout) -> (9, Cin, cout_pad), bf16
    w = jnp.transpose(weight, (2, 3, 1, 0)).reshape(9, Cin, Cout)
    w = jnp.pad(w, ((0, 0), (0, 0), (0, cout_pad - Cout))).astype(jnp.bfloat16)

    # BatchNorm (eval) folded to per-channel scale/bias (kept in f32).
    scale = gamma / jnp.sqrt(running_var + eps)
    bias = beta - running_mean * scale
    scale = jnp.pad(scale, (0, cout_pad - Cout)).reshape(1, cout_pad).astype(jnp.float32)
    bias = jnp.pad(bias, (0, cout_pad - Cout)).reshape(1, cout_pad).astype(jnp.float32)

    # --- explicit VMEM budget (v5e scoped default is only 16 MiB) ------------
    est_vmem = (
        2 * Hp * Wp * max(Cin, 8) * 2        # double-buffered activation block (bf16)
        + 2 * 9 * Cin * TCOUT * 2            # weight block (bf16)
        + 4 * m_ext * TCOUT * 4              # double-buffered out block + f32 acc
        + 2 * m_ext * max(Cin, 128) * 2      # per-tap shifted-load temporaries
    )
    vmem_limit = int(min(max(est_vmem * 1.3, 32 * 2 ** 20), 48 * 2 ** 20))

    grid = (N, n_ci)
    kernel = functools.partial(_aspp_conv_kernel, shifts=shifts, m_ext=m_ext)

    out = pl.pallas_call(
        kernel,
        out_shape=jax.ShapeDtypeStruct((N, m_ext, cout_pad), jnp.float32),
        grid_spec=pltpu.PrefetchScalarGridSpec(
            num_scalar_prefetch=0,
            grid=grid,
            in_specs=[
                # Activation block index is constant over the inner ci axis, so
                # the padded image is DMA'd exactly once per batch element.
                pl.BlockSpec((1, Hp * Wp, Cin), lambda n, ci: (n, 0, 0)),
                pl.BlockSpec((9, Cin, TCOUT), lambda n, ci: (0, 0, ci)),
                pl.BlockSpec((1, TCOUT), lambda n, ci: (0, ci)),
                pl.BlockSpec((1, TCOUT), lambda n, ci: (0, ci)),
            ],
            out_specs=pl.BlockSpec((1, m_ext, TCOUT), lambda n, ci: (n, 0, ci)),
        ),
        compiler_params=pltpu.CompilerParams(
            dimension_semantics=("parallel", "parallel"),
            vmem_limit_bytes=vmem_limit),
    )(xp, w, scale, bias)

    # (N, m_ext, cout_pad) -> pad to H*Wp rows -> (N, H, Wp, Cout) -> drop the
    # throwaway columns + padded channels -> NCHW.  One fused XLA pass.
    out = jnp.pad(out, ((0, 0), (0, H * Wp - m_ext), (0, 0)))
    out = out.reshape(N, H, Wp, cout_pad)[:, :, :W, :Cout]
    return jnp.transpose(out, (0, 3, 1, 2))


def _reference(x_nchw, weight, gamma, beta, running_mean, running_var,
               *, rate, eps=1e-5):
    y = jax.lax.conv_general_dilated(
        x_nchw, weight,
        window_strides=(1, 1),
        padding=((rate, rate), (rate, rate)),
        rhs_dilation=(rate, rate),
        dimension_numbers=("NCHW", "OIHW", "NCHW"),
    )
    scale = gamma / jnp.sqrt(running_var + eps)
    bias = beta - running_mean * scale
    y = y * scale[None, :, None, None] + bias[None, :, None, None]
    return jnp.maximum(y, 0.0)


if __name__ == "__main__":
    key = jax.random.PRNGKey(0)
    k_x, k_w, k_g, k_b, k_m, k_v = jax.random.split(key, 6)

    N, Cin, Cout, H, W = 2, 4, 8, 16, 16
    rate = 2  # atrous_rate

    x = jax.random.normal(k_x, (N, Cin, H, W), jnp.float32)
    weight = jax.random.normal(k_w, (Cout, Cin, 3, 3), jnp.float32) * 0.1
    gamma = jax.random.normal(k_g, (Cout,), jnp.float32) * 0.1 + 1.0
    beta = jax.random.normal(k_b, (Cout,), jnp.float32) * 0.1
    running_mean = jax.random.normal(k_m, (Cout,), jnp.float32) * 0.1
    running_var = jax.nn.softplus(jax.random.normal(k_v, (Cout,), jnp.float32)) + 0.5

    fwd = jax.jit(functools.partial(aspp_conv_forward, rate=rate))
    out = jax.block_until_ready(
        fwd(x, weight, gamma, beta, running_mean, running_var))

    ref = _reference(x, weight, gamma, beta, running_mean, running_var, rate=rate)
    assert out.shape == (N, Cout, H, W)
    # bf16 MXU operands with f32 accumulation -> relaxed tolerance.
    assert jnp.allclose(out, ref, atol=2e-2, rtol=2e-2), \
        float(jnp.max(jnp.abs(out - ref)))

    print("KERNEL_OK")
</pallas_src>

<mosaic_0001>
module attributes {stable_mosaic.version = 11 : i64} {
  func.func @_aspp_conv_kernel(%arg0: i32, %arg1: i32, %arg2: memref<1x400x4xbf16, #tpu.memory_space<vmem>>, %arg3: memref<9x4x128xbf16, #tpu.memory_space<vmem>>, %arg4: memref<1x128xf32, #tpu.memory_space<vmem>>, %arg5: memref<1x128xf32, #tpu.memory_space<vmem>>, %arg6: memref<1x316x128xf32, #tpu.memory_space<vmem>>) attributes {dimension_semantics = [#tpu.dimension_semantics<parallel>, #tpu.dimension_semantics<parallel>], iteration_bounds = array<i64: 2, 1>, scalar_prefetch = 0 : i64, scratch_operands = 0 : i64, tpu.core_type = #tpu.core_type<tc>, window_params = [{transform_indices = @transform_0, window_bounds = array<i64: 1, 400, 4>}, {transform_indices = @transform_1, window_bounds = array<i64: 9, 4, 128>}, {transform_indices = @transform_2, window_bounds = array<i64: 1, 128>}, {transform_indices = @transform_3, window_bounds = array<i64: 1, 128>}, {transform_indices = @transform_4, window_bounds = array<i64: 1, 316, 128>}]} {
    %cst = arith.constant 0.000000e+00 : f32
    %0 = vector.broadcast %cst : f32 to vector<316x128xf32>
    %c0 = arith.constant 0 : index
    %c0_0 = arith.constant 0 : index
    %c0_1 = arith.constant 0 : index
    %1 = vector.load %arg2[%c0, %c0_0, %c0_1] : memref<1x400x4xbf16, #tpu.memory_space<vmem>>, vector<1x316x4xbf16>
    %2 = vector.shape_cast %1 : vector<1x316x4xbf16> to vector<316x4xbf16>
    %c0_2 = arith.constant 0 : index
    %c0_3 = arith.constant 0 : index
    %c0_4 = arith.constant 0 : index
    %3 = vector.load %arg3[%c0_2, %c0_3, %c0_4] : memref<9x4x128xbf16, #tpu.memory_space<vmem>>, vector<1x4x128xbf16>
    %4 = vector.shape_cast %3 : vector<1x4x128xbf16> to vector<4x128xbf16>
    %cst_5 = arith.constant dense<0.000000e+00> : vector<316x128xf32>
    %5 = tpu.matmul %2, %4, %cst_5 {dimension_numbers = #tpu.dot_dimension_numbers<[1], [0], [0], [1], [0, 0, 1, 1], [], []>} : vector<316x4xbf16>, vector<4x128xbf16>, vector<316x128xf32> -> vector<316x128xf32>
    %6 = arith.addf %0, %5 : vector<316x128xf32>
    %c0_6 = arith.constant 0 : index
    %c2 = arith.constant 2 : index
    %c0_7 = arith.constant 0 : index
    %7 = vector.load %arg2[%c0_6, %c2, %c0_7] : memref<1x400x4xbf16, #tpu.memory_space<vmem>>, vector<1x316x4xbf16>
    %8 = vector.shape_cast %7 : vector<1x316x4xbf16> to vector<316x4xbf16>
    %c1 = arith.constant 1 : index
    %c0_8 = arith.constant 0 : index
    %c0_9 = arith.constant 0 : index
    %9 = vector.load %arg3[%c1, %c0_8, %c0_9] : memref<9x4x128xbf16, #tpu.memory_space<vmem>>, vector<1x4x128xbf16>
    %10 = vector.shape_cast %9 : vector<1x4x128xbf16> to vector<4x128xbf16>
    %cst_10 = arith.constant dense<0.000000e+00> : vector<316x128xf32>
    %11 = tpu.matmul %8, %10, %cst_10 {dimension_numbers = #tpu.dot_dimension_numbers<[1], [0], [0], [1], [0, 0, 1, 1], [], []>} : vector<316x4xbf16>, vector<4x128xbf16>, vector<316x128xf32> -> vector<316x128xf32>
    %12 = arith.addf %6, %11 : vector<316x128xf32>
    %c0_11 = arith.constant 0 : index
    %c4 = arith.constant 4 : index
    %c0_12 = arith.constant 0 : index
    %13 = vector.load %arg2[%c0_11, %c4, %c0_12] : memref<1x400x4xbf16, #tpu.memory_space<vmem>>, vector<1x316x4xbf16>
    %14 = vector.shape_cast %13 : vector<1x316x4xbf16> to vector<316x4xbf16>
    %c2_13 = arith.constant 2 : index
    %c0_14 = arith.constant 0 : index
    %c0_15 = arith.constant 0 : index
    %15 = vector.load %arg3[%c2_13, %c0_14, %c0_15] : memref<9x4x128xbf16, #tpu.memory_space<vmem>>, vector<1x4x128xbf16>
    %16 = vector.shape_cast %15 : vector<1x4x128xbf16> to vector<4x128xbf16>
    %cst_16 = arith.constant dense<0.000000e+00> : vector<316x128xf32>
    %17 = tpu.matmul %14, %16, %cst_16 {dimension_numbers = #tpu.dot_dimension_numbers<[1], [0], [0], [1], [0, 0, 1, 1], [], []>} : vector<316x4xbf16>, vector<4x128xbf16>, vector<316x128xf32> -> vector<316x128xf32>
    %18 = arith.addf %12, %17 : vector<316x128xf32>
    %c0_17 = arith.constant 0 : index
    %c40 = arith.constant 40 : index
    %c0_18 = arith.constant 0 : index
    %19 = vector.load %arg2[%c0_17, %c40, %c0_18] : memref<1x400x4xbf16, #tpu.memory_space<vmem>>, vector<1x316x4xbf16>
    %20 = vector.shape_cast %19 : vector<1x316x4xbf16> to vector<316x4xbf16>
    %c3 = arith.constant 3 : index
    %c0_19 = arith.constant 0 : index
    %c0_20 = arith.constant 0 : index
    %21 = vector.load %arg3[%c3, %c0_19, %c0_20] : memref<9x4x128xbf16, #tpu.memory_space<vmem>>, vector<1x4x128xbf16>
    %22 = vector.shape_cast %21 : vector<1x4x128xbf16> to vector<4x128xbf16>
    %cst_21 = arith.constant dense<0.000000e+00> : vector<316x128xf32>
    %23 = tpu.matmul %20, %22, %cst_21 {dimension_numbers = #tpu.dot_dimension_numbers<[1], [0], [0], [1], [0, 0, 1, 1], [], []>} : vector<316x4xbf16>, vector<4x128xbf16>, vector<316x128xf32> -> vector<316x128xf32>
    %24 = arith.addf %18, %23 : vector<316x128xf32>
    %c0_22 = arith.constant 0 : index
    %c42 = arith.constant 42 : index
    %c0_23 = arith.constant 0 : index
    %25 = vector.load %arg2[%c0_22, %c42, %c0_23] : memref<1x400x4xbf16, #tpu.memory_space<vmem>>, vector<1x316x4xbf16>
    %26 = vector.shape_cast %25 : vector<1x316x4xbf16> to vector<316x4xbf16>
    %c4_24 = arith.constant 4 : index
    %c0_25 = arith.constant 0 : index
    %c0_26 = arith.constant 0 : index
    %27 = vector.load %arg3[%c4_24, %c0_25, %c0_26] : memref<9x4x128xbf16, #tpu.memory_space<vmem>>, vector<1x4x128xbf16>
    %28 = vector.shape_cast %27 : vector<1x4x128xbf16> to vector<4x128xbf16>
    %cst_27 = arith.constant dense<0.000000e+00> : vector<316x128xf32>
    %29 = tpu.matmul %26, %28, %cst_27 {dimension_numbers = #tpu.dot_dimension_numbers<[1], [0], [0], [1], [0, 0, 1, 1], [], []>} : vector<316x4xbf16>, vector<4x128xbf16>, vector<316x128xf32> -> vector<316x128xf32>
    %30 = arith.addf %24, %29 : vector<316x128xf32>
    %c0_28 = arith.constant 0 : index
    %c44 = arith.constant 44 : index
    %c0_29 = arith.constant 0 : index
    %31 = vector.load %arg2[%c0_28, %c44, %c0_29] : memref<1x400x4xbf16, #tpu.memory_space<vmem>>, vector<1x316x4xbf16>
    %32 = vector.shape_cast %31 : vector<1x316x4xbf16> to vector<316x4xbf16>
    %c5 = arith.constant 5 : index
    %c0_30 = arith.constant 0 : index
    %c0_31 = arith.constant 0 : index
    %33 = vector.load %arg3[%c5, %c0_30, %c0_31] : memref<9x4x128xbf16, #tpu.memory_space<vmem>>, vector<1x4x128xbf16>
    %34 = vector.shape_cast %33 : vector<1x4x128xbf16> to vector<4x128xbf16>
    %cst_32 = arith.constant dense<0.000000e+00> : vector<316x128xf32>
    %35 = tpu.matmul %32, %34, %cst_32 {dimension_numbers = #tpu.dot_dimension_numbers<[1], [0], [0], [1], [0, 0, 1, 1], [], []>} : vector<316x4xbf16>, vector<4x128xbf16>, vector<316x128xf32> -> vector<316x128xf32>
    %36 = arith.addf %30, %35 : vector<316x128xf32>
    %c0_33 = arith.constant 0 : index
    %c80 = arith.constant 80 : index
    %c0_34 = arith.constant 0 : index
    %37 = vector.load %arg2[%c0_33, %c80, %c0_34] : memref<1x400x4xbf16, #tpu.memory_space<vmem>>, vector<1x316x4xbf16>
    %38 = vector.shape_cast %37 : vector<1x316x4xbf16> to vector<316x4xbf16>
    %c6 = arith.constant 6 : index
    %c0_35 = arith.constant 0 : index
    %c0_36 = arith.constant 0 : index
    %39 = vector.load %arg3[%c6, %c0_35, %c0_36] : memref<9x4x128xbf16, #tpu.memory_space<vmem>>, vector<1x4x128xbf16>
    %40 = vector.shape_cast %39 : vector<1x4x128xbf16> to vector<4x128xbf16>
    %cst_37 = arith.constant dense<0.000000e+00> : vector<316x128xf32>
    %41 = tpu.matmul %38, %40, %cst_37 {dimension_numbers = #tpu.dot_dimension_numbers<[1], [0], [0], [1], [0, 0, 1, 1], [], []>} : vector<316x4xbf16>, vector<4x128xbf16>, vector<316x128xf32> -> vector<316x128xf32>
    %42 = arith.addf %36, %41 : vector<316x128xf32>
    %c0_38 = arith.constant 0 : index
    %c82 = arith.constant 82 : index
    %c0_39 = arith.constant 0 : index
    %43 = vector.load %arg2[%c0_38, %c82, %c0_39] : memref<1x400x4xbf16, #tpu.memory_space<vmem>>, vector<1x316x4xbf16>
    %44 = vector.shape_cast %43 : vector<1x316x4xbf16> to vector<316x4xbf16>
    %c7 = arith.constant 7 : index
    %c0_40 = arith.constant 0 : index
    %c0_41 = arith.constant 0 : index
    %45 = vector.load %arg3[%c7, %c0_40, %c0_41] : memref<9x4x128xbf16, #tpu.memory_space<vmem>>, vector<1x4x128xbf16>
    %46 = vector.shape_cast %45 : vector<1x4x128xbf16> to vector<4x128xbf16>
    %cst_42 = arith.constant dense<0.000000e+00> : vector<316x128xf32>
    %47 = tpu.matmul %44, %46, %cst_42 {dimension_numbers = #tpu.dot_dimension_numbers<[1], [0], [0], [1], [0, 0, 1, 1], [], []>} : vector<316x4xbf16>, vector<4x128xbf16>, vector<316x128xf32> -> vector<316x128xf32>
    %48 = arith.addf %42, %47 : vector<316x128xf32>
    %c0_43 = arith.constant 0 : index
    %c84 = arith.constant 84 : index
    %c0_44 = arith.constant 0 : index
    %49 = vector.load %arg2[%c0_43, %c84, %c0_44] : memref<1x400x4xbf16, #tpu.memory_space<vmem>>, vector<1x316x4xbf16>
    %50 = vector.shape_cast %49 : vector<1x316x4xbf16> to vector<316x4xbf16>
    %c8 = arith.constant 8 : index
    %c0_45 = arith.constant 0 : index
    %c0_46 = arith.constant 0 : index
    %51 = vector.load %arg3[%c8, %c0_45, %c0_46] : memref<9x4x128xbf16, #tpu.memory_space<vmem>>, vector<1x4x128xbf16>
    %52 = vector.shape_cast %51 : vector<1x4x128xbf16> to vector<4x128xbf16>
    %cst_47 = arith.constant dense<0.000000e+00> : vector<316x128xf32>
    %53 = tpu.matmul %50, %52, %cst_47 {dimension_numbers = #tpu.dot_dimension_numbers<[1], [0], [0], [1], [0, 0, 1, 1], [], []>} : vector<316x4xbf16>, vector<4x128xbf16>, vector<316x128xf32> -> vector<316x128xf32>
    %54 = arith.addf %48, %53 : vector<316x128xf32>
    %c0_48 = arith.constant 0 : index
    %c0_49 = arith.constant 0 : index
    %55 = vector.load %arg4[%c0_48, %c0_49] : memref<1x128xf32, #tpu.memory_space<vmem>>, vector<1x128xf32>
    %56 = vector.broadcast %55 : vector<1x128xf32> to vector<316x128xf32>
    %57 = arith.mulf %54, %56 : vector<316x128xf32>
    %c0_50 = arith.constant 0 : index
    %c0_51 = arith.constant 0 : index
    %58 = vector.load %arg5[%c0_50, %c0_51] : memref<1x128xf32, #tpu.memory_space<vmem>>, vector<1x128xf32>
    %59 = vector.broadcast %58 : vector<1x128xf32> to vector<316x128xf32>
    %60 = arith.addf %57, %59 : vector<316x128xf32>
    %cst_52 = arith.constant 0.000000e+00 : f32
    %61 = vector.broadcast %cst_52 : f32 to vector<316x128xf32>
    %62 = arith.maximumf %60, %61 : vector<316x128xf32>
    %c0_53 = arith.constant 0 : index
    %c0_54 = arith.constant 0 : index
    %c0_55 = arith.constant 0 : index
    %63 = vector.load %arg6[%c0_53, %c0_54, %c0_55] : memref<1x316x128xf32, #tpu.memory_space<vmem>>, vector<1x316x128xf32>
    %64 = vector.shape_cast %63 : vector<1x316x128xf32> to vector<316x128xf32>
    %65 = vector.shape_cast %62 : vector<316x128xf32> to vector<1x316x128xf32>
    tpu.vector_store %arg6[%c0_53, %c0_54, %c0_55], %65 {strides = array<i32>} : memref<1x316x128xf32, #tpu.memory_space<vmem>>, vector<1x316x128xf32>,
    return
  }
  func.func @transform_0(%arg0: i32, %arg1: i32) -> (i32, i32, i32) {
    %c0_i32 = arith.constant 0 : i32
    %c0_i32_0 = arith.constant 0 : i32
    %c0_i32_1 = arith.constant 0 : i32
    return %arg0, %c0_i32, %c0_i32_0 : i32, i32, i32
  }
  func.func @transform_1(%arg0: i32, %arg1: i32) -> (i32, i32, i32) {
    %c0_i32 = arith.constant 0 : i32
    %c0_i32_0 = arith.constant 0 : i32
    %c0_i32_1 = arith.constant 0 : i32
    return %c0_i32, %c0_i32_0, %arg1 : i32, i32, i32
  }
  func.func @transform_2(%arg0: i32, %arg1: i32) -> (i32, i32) {
    %c0_i32 = arith.constant 0 : i32
    %c0_i32_0 = arith.constant 0 : i32
    return %c0_i32, %arg1 : i32, i32
  }
  func.func @transform_3(%arg0: i32, %arg1: i32) -> (i32, i32) {
    %c0_i32 = arith.constant 0 : i32
    %c0_i32_0 = arith.constant 0 : i32
    return %c0_i32, %arg1 : i32, i32
  }
  func.func @transform_4(%arg0: i32, %arg1: i32) -> (i32, i32, i32) {
    %c0_i32 = arith.constant 0 : i32
    %c0_i32_0 = arith.constant 0 : i32
    return %arg0, %c0_i32, %arg1 : i32, i32, i32
  }
}

</mosaic_0001>

<llo_original>
// kernel: aspp_conv_forward.1
$region0: #{aspp_conv_forward.1}
  #allocation0 [shape = 'u32[]', space=smem, size = 0x4, offset = 0x4, fixed_abs, tag = 'smem constant byte address 0x4 - core index']
  #allocation1 [shape = 'u32[144,128]{1,0:T(1,128)}', space=vmem, size = 0x12000, scoped, tag = 'internal scratch']
  %s0 = inlined_call_operand.vmem [shape: bf16[2,400,4], index: 0, kind: input, shape index: {}]
  %s1 = inlined_call_operand.vmem [shape: bf16[9,4,128], index: 1, kind: input, shape index: {}]
  %s2 = inlined_call_operand.vmem [shape: f32[1,128], index: 2, kind: input, shape index: {}]
  %s3 = inlined_call_operand.vmem [shape: f32[1,128], index: 3, kind: input, shape index: {}]
  %s4 = inlined_call_operand.vmem [shape: f32[2,316,128], index: 4, kind: output, shape index: {}]
  %s5 = sld [smem:[#allocation0]]
  $region49: #{aspp_conv_forward.1} parent=0
    _
  %s7 = ssub.s32 1, %s5
  %s8 = scalar_select 0, %s7, %s5
  loop: start=0, step=1, limit=4
  $region2: #{aspp_conv_forward.1} parent=0 // loop_pre_header
    _
  $region3: #{aspp_conv_forward.1} parent=0 // loop_header
    %s10 = sphi 0, %s14
    %p11 = scmp.ge.s32.totalorder %s10, 4
    %s17 = sphi 0, %s29
    %s18 = sphi 0, %s25
    %s19 = sphi 0, %s17
    %s20 = sphi 0, %s18
    %s21 = sphi 0, %s19
    %s22 = sphi 0, %s20
    %s32 = sphi 0, %s34
    %s35 = sphi 0, %s32
    %s36 = sphi 0, %s35
    %s52 = sphi 0, %s36
    %s58 = sphi 0, %s60
    %s61 = sphi 0, %s58
    %s62 = sphi 0, %s61
    %s78 = sphi 0, %s62
    %s84 = sphi 0, %s86
    %s87 = sphi 0, %s84
    %s88 = sphi 0, %s87
    %s104 = sphi 0, %s88
    %s110 = sphi 0, %s112
    %s113 = sphi 0, %s110
    %s114 = sphi 0, %s113
    %s130 = sphi 0, %s114
    %s138 = sphi 0, %s140
    %s141 = sphi 0, %s138
    %s142 = sphi 0, %s141
    %s158 = sphi 0, %s142
  $region4: #{aspp_conv_forward.1} parent=0 // loop_header_branch
    %13 = sbr.rel (%p11) target = $region8
  $region5: #{aspp_conv_forward.1} parent=0 // loop_body
    %s15 = ssub.s32 %s10, 1
    %s16 = ssub.s32 %s10, 2
    %s23 = sadd.s32 1, %s18
    %p24 = scmp.ge.s32.totalorder %s23, 1
    %s25 = scalar_select %p24, 0, %s23
    %s26 = sadd.s32 1, %s17
    %s27 = scalar_select %p24, %s26, %s17
    %p28 = scmp.ge.s32.totalorder %s27, 2
    %s29 = scalar_select %p28, 0, %s27
    %s30 = ssub.s32 %s17, %s29
    %p31 = scmp.eq.s32.totalorder %s30, 0
    %s33 = sadd.s32 %s32, 1
    %s34 = scalar_select %p31, %s32, %s33
    %p37 = pneg %p31
    %p38 = scmp.eq.s32.totalorder %s10, 1
    %p39 = por %p37, %p38
    %p40 = scmp.ne.s32.totalorder %s32, %s35
    %p41 = scmp.eq.s32.totalorder %s10, 0
    %p42 = por %p40, %p41
    %p43 = scmp.ne.s32.totalorder %s32, %s35
    %p44 = scmp.eq.s32.totalorder %s15, 1
    %p45 = por %p43, %p44
    %p46 = scmp.ne.s32.totalorder %s35, %s36
    %p47 = scmp.eq.s32.totalorder %s15, 0
    %p48 = por %p46, %p47
    %p49 = scmp.ne.s32.totalorder %s35, %s36
    %p50 = scmp.eq.s32.totalorder %s16, 1
    %p51 = por %p49, %p50
    %p53 = scmp.ne.s32.totalorder %s36, %s52
    %p54 = scmp.eq.s32.totalorder %s16, 0
    %p55 = por %p53, %p54
    %s56 = ssub.s32 %s18, %s25
    %p57 = scmp.eq.s32.totalorder %s56, 0
    %s59 = sadd.s32 %s58, 1
    %s60 = scalar_select %p57, %s58, %s59
    %p63 = pneg %p57
    %p64 = scmp.eq.s32.totalorder %s10, 1
    %p65 = por %p63, %p64
    %p66 = scmp.ne.s32.totalorder %s58, %s61
    %p67 = scmp.eq.s32.totalorder %s10, 0
    %p68 = por %p66, %p67
    %p69 = scmp.ne.s32.totalorder %s58, %s61
    %p70 = scmp.eq.s32.totalorder %s15, 1
    %p71 = por %p69, %p70
    %p72 = scmp.ne.s32.totalorder %s61, %s62
    %p73 = scmp.eq.s32.totalorder %s15, 0
    %p74 = por %p72, %p73
    %p75 = scmp.ne.s32.totalorder %s61, %s62
    %p76 = scmp.eq.s32.totalorder %s16, 1
    %p77 = por %p75, %p76
    %p79 = scmp.ne.s32.totalorder %s62, %s78
    %p80 = scmp.eq.s32.totalorder %s16, 0
    %p81 = por %p79, %p80
    %s82 = ssub.s32 %s18, %s25
    %p83 = scmp.eq.s32.totalorder %s82, 0
    %s85 = sadd.s32 %s84, 1
    %s86 = scalar_select %p83, %s84, %s85
    %p89 = pneg %p83
    %p90 = scmp.eq.s32.totalorder %s10, 1
    %p91 = por %p89, %p90
    %p92 = scmp.ne.s32.totalorder %s84, %s87
    %p93 = scmp.eq.s32.totalorder %s10, 0
    %p94 = por %p92, %p93
    %p95 = scmp.ne.s32.totalorder %s84, %s87
    %p96 = scmp.eq.s32.totalorder %s15, 1
    %p97 = por %p95, %p96
    %p98 = scmp.ne.s32.totalorder %s87, %s88
    %p99 = scmp.eq.s32.totalorder %s15, 0
    %p100 = por %p98, %p99
    %p101 = scmp.ne.s32.totalorder %s87, %s88
    %p102 = scmp.eq.s32.totalorder %s16, 1
    %p103 = por %p101, %p102
    %p105 = scmp.ne.s32.totalorder %s88, %s104
    %p106 = scmp.eq.s32.totalorder %s16, 0
    %p107 = por %p105, %p106
    %s108 = ssub.s32 %s18, %s25
    %p109 = scmp.eq.s32.totalorder %s108, 0
    %s111 = sadd.s32 %s110, 1
    %s112 = scalar_select %p109, %s110, %s111
    %p115 = pneg %p109
    %p116 = scmp.eq.s32.totalorder %s10, 1
    %p117 = por %p115, %p116
    %p118 = scmp.ne.s32.totalorder %s110, %s113
    %p119 = scmp.eq.s32.totalorder %s10, 0
    %p120 = por %p118, %p119
    %p121 = scmp.ne.s32.totalorder %s110, %s113
    %p122 = scmp.eq.s32.totalorder %s15, 1
    %p123 = por %p121, %p122
    %p124 = scmp.ne.s32.totalorder %s113, %s114
    %p125 = scmp.eq.s32.totalorder %s15, 0
    %p126 = por %p124, %p125
    %p127 = scmp.ne.s32.totalorder %s113, %s114
    %p128 = scmp.eq.s32.totalorder %s16, 1
    %p129 = por %p127, %p128
    %p131 = scmp.ne.s32.totalorder %s114, %s130
    %p132 = scmp.eq.s32.totalorder %s16, 0
    %p133 = por %p131, %p132
    %s134 = ssub.s32 %s17, %s29
    %s135 = ssub.s32 %s18, %s25
    %s136 = sor.u32 %s134, %s135
    %p137 = scmp.eq.s32.totalorder %s136, 0
    %s139 = sadd.s32 %s138, 1
    %s140 = scalar_select %p137, %s138, %s139
    %p143 = pneg %p137
    %p144 = scmp.eq.s32.totalorder %s10, 1
    %p145 = por %p143, %p144
    %p146 = scmp.ne.s32.totalorder %s138, %s141
    %p147 = scmp.eq.s32.totalorder %s10, 0
    %p148 = por %p146, %p147
    %p149 = scmp.ne.s32.totalorder %s138, %s141
    %p150 = scmp.eq.s32.totalorder %s15, 1
    %p151 = por %p149, %p150
    %p152 = scmp.ne.s32.totalorder %s141, %s142
    %p153 = scmp.eq.s32.totalorder %s15, 0
    %p154 = por %p152, %p153
    %p155 = scmp.ne.s32.totalorder %s141, %s142
    %p156 = scmp.eq.s32.totalorder %s16, 1
    %p157 = por %p155, %p156
    %p159 = scmp.ne.s32.totalorder %s142, %s158
    %p160 = scmp.eq.s32.totalorder %s16, 0
    %p161 = por %p159, %p160
    %p162 = scmp.le.s32.totalorder 1, %s10
    %p163 = scmp.lt.s32.totalorder %s10, 3
    %p164 = pnand %p162, %p163
    %p165 = pneg %p164
    // Predicated region
    $region9: #{aspp_conv_forward.1} parent=5 // pred_check
      _
    $region10: #{aspp_conv_forward.1} parent=5 // pred_check_branch
      %167 = sbr.rel (%p164) target = $region12
    $region11: #{aspp_conv_forward.1} parent=5 // pred_region
      %s168 = ssub.s32 %s10, 1
      // Predicated region
      $region13: #{aspp_conv_forward.1} parent=11 // pred_check
        %p169 = pneg %p74
      $region14: #{aspp_conv_forward.1} parent=11 // pred_check_branch
        %171 = sbr.rel (%p169) target = $region16
      $region15: #{aspp_conv_forward.1} parent=11 // pred_region
        %p172 = scmp.lt.s32.totalorder %s20, 0
        %s173 = scalar_select %p172, %s20, 0
        %s174 = smul.addr %s173, 2
        %s175 = scalar_lea.vmem %s1, %s174
      $region16: #{aspp_conv_forward.1} parent=11 // pred_fallthru
        _
      // Predicated region
      $region17: #{aspp_conv_forward.1} parent=11 // pred_check
        %p176 = pneg %p100
      $region18: #{aspp_conv_forward.1} parent=11 // pred_check_branch
        %178 = sbr.rel (%p176) target = $region20
      $region19: #{aspp_conv_forward.1} parent=11 // pred_region
        %p179 = scmp.lt.s32.totalorder %s20, 0
        %s180 = scalar_select %p179, %s20, 0
        %s181 = scalar_lea.vmem %s2, %s180
      $region20: #{aspp_conv_forward.1} parent=11 // pred_fallthru
        _
      // Predicated region
      $region21: #{aspp_conv_forward.1} parent=11 // pred_check
        %p182 = pneg %p126
      $region22: #{aspp_conv_forward.1} parent=11 // pred_check_branch
        %184 = sbr.rel (%p182) target = $region24
      $region23: #{aspp_conv_forward.1} parent=11 // pred_region
        %p185 = scmp.lt.s32.totalorder %s20, 0
        %s186 = scalar_select %p185, %s20, 0
        %s187 = scalar_lea.vmem %s3, %s186
      $region24: #{aspp_conv_forward.1} parent=11 // pred_fallthru
        _
    $region12: #{aspp_conv_forward.1} parent=5 // pred_fallthru
      _
    %p188 = scmp.lt.s32.totalorder %s10, 2
    // Predicated region
    $region25: #{aspp_conv_forward.1} parent=5 // pred_check
      %p189 = pneg %p188
    $region26: #{aspp_conv_forward.1} parent=5 // pred_check_branch
      %191 = sbr.rel (%p189) target = $region28
    $region27: #{aspp_conv_forward.1} parent=5 // pred_region
      // Predicated region
      $region29: #{aspp_conv_forward.1} parent=27 // pred_check
        %p192 = pneg %p42
      $region30: #{aspp_conv_forward.1} parent=27 // pred_check_branch
        %194 = sbr.rel (%p192) target = $region32
      $region31: #{aspp_conv_forward.1} parent=27 // pred_region
        %p195 = scmp.lt.s32.totalorder %s17, 1
        %s196 = scalar_select %p195, %s17, 1
        %s197 = smul.addr %s196, 50
        %s198 = smul.addr %s197, 4
        %s199 = scalar_lea.vmem %s0, %s198
      $region32: #{aspp_conv_forward.1} parent=27 // pred_fallthru
        _
    $region28: #{aspp_conv_forward.1} parent=5 // pred_fallthru
      _
    %p200 = scmp.le.s32.totalorder 1, %s10
    %p201 = scmp.lt.s32.totalorder %s10, 3
    %p202 = pnand %p200, %p201
    %p203 = pneg %p202
    // Predicated region
    $region33: #{aspp_conv_forward.1} parent=5 // pred_check
      _
    $region34: #{aspp_conv_forward.1} parent=5 // pred_check_branch
      %205 = sbr.rel (%p202) target = $region36
    $region35: #{aspp_conv_forward.1} parent=5 // pred_region
      %s206 = ssub.s32 %s10, 1
      %p207 = scmp.lt.s32.totalorder %s19, 1
      %s208 = scalar_select %p207, %s19, 1
      %s209 = smul.addr %s208, 50
      %s210 = smul.addr %s209, 4
      %s211 = scalar_lea.vmem %s0, %s210
      %p212 = pneg %p48
      %p213 = pneg %p45
      %p214 = scmp.lt.s32.totalorder %s20, 0
      %s215 = scalar_select %p214, %s20, 0
      %s216 = smul.addr %s215, 2
      %s217 = scalar_lea.vmem %s1, %s216
      %p218 = pneg %p74
      %p219 = pneg %p71
      %p220 = scmp.lt.s32.totalorder %s20, 0
      %s221 = scalar_select %p220, %s20, 0
      %s222 = scalar_lea.vmem %s2, %s221
      %p223 = pneg %p100
      %p224 = pneg %p97
      %p225 = scmp.lt.s32.totalorder %s20, 0
      %s226 = scalar_select %p225, %s20, 0
      %s227 = scalar_lea.vmem %s3, %s226
      %p228 = pneg %p126
      %p229 = pneg %p123
      %p230 = pneg %p154
      %p231 = pneg %p151
      %p232 = scmp.lt.s32.totalorder %s19, 1
      %s233 = scalar_select %p232, %s19, 1
      %p234 = scmp.lt.s32.totalorder %s20, 0
      %s235 = scalar_select %p234, %s20, 0
      %s236 = smul.addr %s233, 40
      %s237 = sadd.s32 %s235, %s236
      %s238 = smul.addr %s237, 8
      %s239 = scalar_lea.vmem %s4, %s238
      %p240 = scmp.lt.s32.totalorder %s19, 1
      %s241 = scalar_select %p240, %s19, 1
      %s242 = smul.addr %s241, 50
      %s243 = smul.addr %s242, 4
      %s244 = scalar_lea.vmem %s0, %s243
      %p245 = scmp.lt.s32.totalorder %s20, 0
      %s246 = scalar_select %p245, %s20, 0
      %s247 = smul.addr %s246, 2
      %s248 = scalar_lea.vmem %s1, %s247
      %p249 = scmp.lt.s32.totalorder %s20, 0
      %s250 = scalar_select %p249, %s20, 0
      %s251 = scalar_lea.vmem %s2, %s250
      %p252 = scmp.lt.s32.totalorder %s20, 0
      %s253 = scalar_select %p252, %s20, 0
      %s254 = scalar_lea.vmem %s3, %s253
      %p255 = scmp.lt.s32.totalorder %s19, 1
      %s256 = scalar_select %p255, %s19, 1
      %p257 = scmp.lt.s32.totalorder %s20, 0
      %s258 = scalar_select %p257, %s20, 0
      %s259 = smul.addr %s256, 40
      %s260 = sadd.s32 %s258, %s259
      %s261 = smul.addr %s260, 8
      %s262 = scalar_lea.vmem %s4, %s261
      %v264 = vld [vmem:[%s244] sm:$0xf]
      %v265 = vld [vmem:[%s244 + $0x4] sm:$0xf]
      %v266 = vld [vmem:[%s244 + $0x8] sm:$0xf]
      %v267 = vld [vmem:[%s244 + $0xc] sm:$0xf]
      %v268 = vld [vmem:[%s244 + $0x10] sm:$0xf]
      %v269 = vld [vmem:[%s244 + $0x14] sm:$0xf]
      %v270 = vld [vmem:[%s244 + $0x18] sm:$0xf]
      %v271 = vld [vmem:[%s244 + $0x1c] sm:$0xf]
      %v272 = vld [vmem:[%s244 + $0x20] sm:$0xf]
      %v273 = vld [vmem:[%s244 + $0x24] sm:$0xf]
      %v274 = vld [vmem:[%s244 + $0x28] sm:$0xf]
      %v275 = vld [vmem:[%s244 + $0x2c] sm:$0xf]
      %v276 = vld [vmem:[%s244 + $0x30] sm:$0xf]
      %v277 = vld [vmem:[%s244 + $0x34] sm:$0xf]
      %v278 = vld [vmem:[%s244 + $0x38] sm:$0xf]
      %v279 = vld [vmem:[%s244 + $0x3c] sm:$0xf]
      %v280 = vld [vmem:[%s244 + $0x40] sm:$0xf]
      %v281 = vld [vmem:[%s244 + $0x44] sm:$0xf]
      %v282 = vld [vmem:[%s244 + $0x48] sm:$0xf]
      %v283 = vld [vmem:[%s244 + $0x4c] sm:$0xf]
      %v284 = vld [vmem:[%s244 + $0x50] sm:$0xf]
      %v285 = vld [vmem:[%s244 + $0x54] sm:$0xf]
      %v286 = vld [vmem:[%s244 + $0x58] sm:$0xf]
      %v287 = vld [vmem:[%s244 + $0x5c] sm:$0xf]
      %v288 = vld [vmem:[%s244 + $0x60] sm:$0xf]
      %v289 = vld [vmem:[%s244 + $0x64] sm:$0xf]
      %v290 = vld [vmem:[%s244 + $0x68] sm:$0xf]
      %v291 = vld [vmem:[%s244 + $0x6c] sm:$0xf]
      %v292 = vld [vmem:[%s244 + $0x70] sm:$0xf]
      %v293 = vld [vmem:[%s244 + $0x74] sm:$0xf]
      %v294 = vld [vmem:[%s244 + $0x78] sm:$0xf]
      %v295 = vld [vmem:[%s244 + $0x7c] sm:$0xf]
      %v296 = vld [vmem:[%s244 + $0x80] sm:$0xf]
      %v297 = vld [vmem:[%s244 + $0x84] sm:$0xf]
      %v298 = vld [vmem:[%s244 + $0x88] sm:$0xf]
      %v299 = vld [vmem:[%s244 + $0x8c] sm:$0xf]
      %v300 = vld [vmem:[%s244 + $0x90] sm:$0xf]
      %v301 = vld [vmem:[%s244 + $0x94] sm:$0xf]
      %v302 = vld [vmem:[%s244 + $0x98] sm:$0xf]
      %v303 = vld [vmem:[%s244 + $0x9c] sm:$0x3]
      %v304 = vld [vmem:[%s248] sm:$0x3]
      %v305 = vld [vmem:[%s244] sm:$0xe]
      %v306 = vld [vmem:[%s244 + $0x9c] sm:$0x7]
      %s307 = scalar_lea.vmem %s248, 2
      %v308 = vld [vmem:[%s307] sm:$0x3]
      %v349 = vunpack.c.l.b16 %v305
      %v350 = vunpack.c.l.b16 %v265
      %v351 = vunpack.c.l.b16 %v266
      %v352 = vunpack.c.l.b16 %v267
      %v353 = vunpack.c.l.b16 %v268
      %v354 = vunpack.c.l.b16 %v269
      %v355 = vunpack.c.l.b16 %v270
      %v356 = vunpack.c.l.b16 %v271
      %v357 = vunpack.c.l.b16 %v272
      %v358 = vunpack.c.l.b16 %v273
      %v359 = vunpack.c.l.b16 %v274
      %v360 = vunpack.c.l.b16 %v275
      %v361 = vunpack.c.l.b16 %v276
      %v362 = vunpack.c.l.b16 %v277
      %v363 = vunpack.c.l.b16 %v278
      %v364 = vunpack.c.l.b16 %v279
      %v365 = vunpack.c.l.b16 %v280
      %v366 = vunpack.c.l.b16 %v281
      %v367 = vunpack.c.l.b16 %v282
      %v368 = vunpack.c.l.b16 %v283
      %v369 = vunpack.c.l.b16 %v284
      %v370 = vunpack.c.l.b16 %v285
      %v371 = vunpack.c.l.b16 %v286
      %v372 = vunpack.c.l.b16 %v287
      %v373 = vunpack.c.l.b16 %v288
      %v374 = vunpack.c.l.b16 %v289
      %v375 = vunpack.c.l.b16 %v290
      %v376 = vunpack.c.l.b16 %v291
      %v377 = vunpack.c.l.b16 %v292
      %v378 = vunpack.c.l.b16 %v293
      %v379 = vunpack.c.l.b16 %v294
      %v380 = vunpack.c.l.b16 %v295
      %v381 = vunpack.c.l.b16 %v296
      %v382 = vunpack.c.l.b16 %v297
      %v383 = vunpack.c.l.b16 %v298
      %v384 = vunpack.c.l.b16 %v299
      %v385 = vunpack.c.l.b16 %v300
      %v386 = vunpack.c.l.b16 %v301
      %v387 = vunpack.c.l.b16 %v302
      %v388 = vunpack.c.l.b16 %v306
      %v389 = vpack.c.b16 %v350, %v349
      %v390 = vpack.c.b16 %v352, %v351
      %v391 = vpack.c.b16 %v354, %v353
      %v392 = vpack.c.b16 %v356, %v355
      %v393 = vpack.c.b16 %v358, %v357
      %v394 = vpack.c.b16 %v360, %v359
      %v395 = vpack.c.b16 %v362, %v361
      %v396 = vpack.c.b16 %v364, %v363
      %v397 = vpack.c.b16 %v366, %v365
      %v398 = vpack.c.b16 %v368, %v367
      %v399 = vpack.c.b16 %v370, %v369
      %v400 = vpack.c.b16 %v372, %v371
      %v401 = vpack.c.b16 %v374, %v373
      %v402 = vpack.c.b16 %v376, %v375
      %v403 = vpack.c.b16 %v378, %v377
      %v404 = vpack.c.b16 %v380, %v379
      %v405 = vpack.c.b16 %v382, %v381
      %v406 = vpack.c.b16 %v384, %v383
      %v407 = vpack.c.b16 %v386, %v385
      %v408 = vpack.c.b16 %v388, %v387
      %vm409 = vcmask 1046528
      %v410 = vrot.slane %v389, 1
      %v411 = vrot.slane %v390, 1
      %v412 = vsel %vm409, %v410, %v411
      %v413 = vrot.slane %v391, 1
      %v414 = vsel %vm409, %v411, %v413
      %v415 = vrot.slane %v392, 1
      %v416 = vsel %vm409, %v413, %v415
      %v417 = vrot.slane %v393, 1
      %v418 = vsel %vm409, %v415, %v417
      %v419 = vrot.slane %v394, 1
      %v420 = vsel %vm409, %v417, %v419
      %v421 = vrot.slane %v395, 1
      %v422 = vsel %vm409, %v419, %v421
      %v423 = vrot.slane %v396, 1
      %v424 = vsel %vm409, %v421, %v423
      %v425 = vrot.slane %v397, 1
      %v426 = vsel %vm409, %v423, %v425
      %v427 = vrot.slane %v398, 1
      %v428 = vsel %vm409, %v425, %v427
      %v429 = vrot.slane %v399, 1
      %v430 = vsel %vm409, %v427, %v429
      %v431 = vrot.slane %v400, 1
      %v432 = vsel %vm409, %v429, %v431
      %v433 = vrot.slane %v401, 1
      %v434 = vsel %vm409, %v431, %v433
      %v435 = vrot.slane %v402, 1
      %v436 = vsel %vm409, %v433, %v435
      %v437 = vrot.slane %v403, 1
      %v438 = vsel %vm409, %v435, %v437
      %v439 = vrot.slane %v404, 1
      %v440 = vsel %vm409, %v437, %v439
      %v441 = vrot.slane %v405, 1
      %v442 = vsel %vm409, %v439, %v441
      %v443 = vrot.slane %v406, 1
      %v444 = vsel %vm409, %v441, %v443
      %v445 = vrot.slane %v407, 1
      %v446 = vsel %vm409, %v443, %v445
      %v447 = vrot.slane %v408, 1
      %v448 = vsel %vm409, %v445, %v447
      %vm449 = vcmask 31744
      %v451 = vsel %vm449, %v412, 0
      %v454 = vsel %vm449, %v414, 0
      %v457 = vsel %vm449, %v416, 0
      %v460 = vsel %vm449, %v418, 0
      %v463 = vsel %vm449, %v420, 0
      %v466 = vsel %vm449, %v422, 0
      %v469 = vsel %vm449, %v424, 0
      %v472 = vsel %vm449, %v426, 0
      %v475 = vsel %vm449, %v428, 0
      %v478 = vsel %vm449, %v430, 0
      %v481 = vsel %vm449, %v432, 0
      %v484 = vsel %vm449, %v434, 0
      %v487 = vsel %vm449, %v436, 0
      %v490 = vsel %vm449, %v438, 0
      %v493 = vsel %vm449, %v440, 0
      %v496 = vsel %vm449, %v442, 0
      %v499 = vsel %vm449, %v444, 0
      %v502 = vsel %vm449, %v446, 0
      %v505 = vsel %vm449, %v448, 0
      %v508 = vsel %vm449, %v447, 0
      %vm510 = vcmask 1041408
      %v512 = vsel %vm510, %v308, 0
      %514 = vmatprep.subr.bf16.mxu0 0
      %515 = vmatpush1.bf16.msra.mxu0 %v512
      %516 = vmatprep.subr.bf16.mxu0 0
      %517 = vmatpush1.bf16.msra.mxu0 0
      %518 = vmatprep.subr.bf16.mxu0 0
      %519 = vmatpush1.bf16.msra.mxu0 0
      %520 = vmatprep.subr.bf16.mxu0 0
      %521 = vmatpush1.bf16.msra.mxu0 0
      %522 = vmatprep.subr.bf16.mxu0 0
      %523 = vmatpush1.bf16.msra.mxu0 0
      %524 = vmatprep.subr.bf16.mxu0 0
      %525 = vmatpush1.bf16.msra.mxu0 0
      %526 = vmatprep.subr.bf16.mxu0 0
      %527 = vmatpush1.bf16.msra.mxu0 0
      %528 = vmatprep.subr.bf16.mxu0 0
      %529 = vmatpush1.bf16.msra.mxu0 0
      %530 = vmatprep.subr.bf16.mxu0 0
      %531 = vmatpush1.bf16.msra.mxu0 0
      %532 = vmatprep.subr.bf16.mxu0 0
      %533 = vmatpush1.bf16.msra.mxu0 0
      %534 = vmatprep.subr.bf16.mxu0 0
      %535 = vmatpush1.bf16.msra.mxu0 0
      %536 = vmatprep.subr.bf16.mxu0 0
      %537 = vmatpush1.bf16.msra.mxu0 0
      %538 = vmatprep.subr.bf16.mxu0 0
      %539 = vmatpush1.bf16.msra.mxu0 0
      %540 = vmatprep.subr.bf16.mxu0 0
      %541 = vmatpush1.bf16.msra.mxu0 0
      %542 = vmatprep.subr.bf16.mxu0 0
      %543 = vmatpush1.bf16.msra.mxu0 0
      %544 = vmatprep.subr.bf16.mxu0 0
      %545 = vmatpush1.bf16.msra.mxu0 0
      %546 = vmatprep.mubr.bf16.mxu0 0
      %547 = vmatmul.mubr.bf16.gmra.mrb[0].mxu0 %v451
      %v548 = vpop.f32.mrb[0].mxu0
      %v549 = vadd.f32 0.0, %v548
      %v550 = vpop.f32.mrb[0].mxu0
      %v551 = vpop.f32.mrb[0].mxu0
      %v552 = vadd.f32 0.0, %v551
      %v553 = vpop.f32.mrb[0].mxu0
      %554 = vmatprep.mubr.bf16.mxu0 0
      %555 = vmatmul.mubr.bf16.gmra.mrb[0].mxu0 %v454
      %v556 = vpop.f32.mrb[0].mxu0
      %v557 = vadd.f32 0.0, %v556
      %v558 = vpop.f32.mrb[0].mxu0
      %v559 = vpop.f32.mrb[0].mxu0
      %v560 = vadd.f32 0.0, %v559
      %v561 = vpop.f32.mrb[0].mxu0
      %562 = vmatprep.mubr.bf16.mxu0 0
      %563 = vmatmul.mubr.bf16.gmra.mrb[0].mxu0 %v457
      %v564 = vpop.f32.mrb[0].mxu0
      %v565 = vadd.f32 0.0, %v564
      %v566 = vpop.f32.mrb[0].mxu0
      %v567 = vpop.f32.mrb[0].mxu0
      %v568 = vadd.f32 0.0, %v567
      %v569 = vpop.f32.mrb[0].mxu0
      %570 = vmatprep.mubr.bf16.mxu0 0
      %571 = vmatmul.mubr.bf16.gmra.mrb[0].mxu0 %v460
      %v572 = vpop.f32.mrb[0].mxu0
      %v573 = vadd.f32 0.0, %v572
      %v574 = vpop.f32.mrb[0].mxu0
      %v575 = vpop.f32.mrb[0].mxu0
      %v576 = vadd.f32 0.0, %v575
      %v577 = vpop.f32.mrb[0].mxu0
      %578 = vmatprep.mubr.bf16.mxu0 0
      %579 = vmatmul.mubr.bf16.gmra.mrb[0].mxu0 %v463
      %v580 = vpop.f32.mrb[0].mxu0
      %v581 = vadd.f32 0.0, %v580
      %v582 = vpop.f32.mrb[0].mxu0
      %v583 = vpop.f32.mrb[0].mxu0
      %v584 = vadd.f32 0.0, %v583
      %v585 = vpop.f32.mrb[0].mxu0
      %586 = vmatprep.mubr.bf16.mxu0 0
      %587 = vmatmul.mubr.bf16.gmra.mrb[0].mxu0 %v466
      %v588 = vpop.f32.mrb[0].mxu0
      %v589 = vadd.f32 0.0, %v588
      %v590 = vpop.f32.mrb[0].mxu0
      %v591 = vpop.f32.mrb[0].mxu0
      %v592 = vadd.f32 0.0, %v591
      %v593 = vpop.f32.mrb[0].mxu0
      %594 = vmatprep.mubr.bf16.mxu0 0
      %595 = vmatmul.mubr.bf16.gmra.mrb[0].mxu0 %v469
      %v596 = vpop.f32.mrb[0].mxu0
      %v597 = vadd.f32 0.0, %v596
      %v598 = vpop.f32.mrb[0].mxu0
      %v599 = vpop.f32.mrb[0].mxu0
      %v600 = vadd.f32 0.0, %v599
      %v601 = vpop.f32.mrb[0].mxu0
      %602 = vmatprep.mubr.bf16.mxu0 0
      %603 = vmatmul.mubr.bf16.gmra.mrb[0].mxu0 %v472
      %v604 = vpop.f32.mrb[0].mxu0
      %v605 = vadd.f32 0.0, %v604
      %v606 = vpop.f32.mrb[0].mxu0
      %v607 = vpop.f32.mrb[0].mxu0
      %v608 = vadd.f32 0.0, %v607
      %v609 = vpop.f32.mrb[0].mxu0
      %610 = vmatprep.mubr.bf16.mxu0 0
      %611 = vmatmul.mubr.bf16.gmra.mrb[0].mxu0 %v475
      %v612 = vpop.f32.mrb[0].mxu0
      %v613 = vadd.f32 0.0, %v612
      %v614 = vpop.f32.mrb[0].mxu0
      %v615 = vpop.f32.mrb[0].mxu0
      %v616 = vadd.f32 0.0, %v615
      %v617 = vpop.f32.mrb[0].mxu0
      %618 = vmatprep.mubr.bf16.mxu0 0
      %619 = vmatmul.mubr.bf16.gmra.mrb[0].mxu0 %v478
      %v620 = vpop.f32.mrb[0].mxu0
      %v621 = vadd.f32 0.0, %v620
      %v622 = vpop.f32.mrb[0].mxu0
      %v623 = vpop.f32.mrb[0].mxu0
      %v624 = vadd.f32 0.0, %v623
      %v625 = vpop.f32.mrb[0].mxu0
      %626 = vmatprep.mubr.bf16.mxu0 0
      %627 = vmatmul.mubr.bf16.gmra.mrb[0].mxu0 %v481
      %v628 = vpop.f32.mrb[0].mxu0
      %v629 = vadd.f32 0.0, %v628
      %v630 = vpop.f32.mrb[0].mxu0
      %v631 = vpop.f32.mrb[0].mxu0
      %v632 = vadd.f32 0.0, %v631
      %v633 = vpop.f32.mrb[0].mxu0
      %634 = vmatprep.mubr.bf16.mxu0 0
      %635 = vmatmul.mubr.bf16.gmra.mrb[0].mxu0 %v484
      %v636 = vpop.f32.mrb[0].mxu0
      %v637 = vadd.f32 0.0, %v636
      %v638 = vpop.f32.mrb[0].mxu0
      %v639 = vpop.f32.mrb[0].mxu0
      %v640 = vadd.f32 0.0, %v639
      %v641 = vpop.f32.mrb[0].mxu0
      %642 = vmatprep.mubr.bf16.mxu0 0
      %643 = vmatmul.mubr.bf16.gmra.mrb[0].mxu0 %v487
      %v644 = vpop.f32.mrb[0].mxu0
      %v645 = vadd.f32 0.0, %v644
      %v646 = vpop.f32.mrb[0].mxu0
      %v647 = vpop.f32.mrb[0].mxu0
      %v648 = vadd.f32 0.0, %v647
      %v649 = vpop.f32.mrb[0].mxu0
      %650 = vmatprep.mubr.bf16.mxu0 0
      %651 = vmatmul.mubr.bf16.gmra.mrb[0].mxu0 %v490
      %v652 = vpop.f32.mrb[0].mxu0
      %v653 = vadd.f32 0.0, %v652
      %v654 = vpop.f32.mrb[0].mxu0
      %v655 = vpop.f32.mrb[0].mxu0
      %v656 = vadd.f32 0.0, %v655
      %v657 = vpop.f32.mrb[0].mxu0
      %658 = vmatprep.mubr.bf16.mxu0 0
      %659 = vmatmul.mubr.bf16.gmra.mrb[0].mxu0 %v493
      %v660 = vpop.f32.mrb[0].mxu0
      %v661 = vadd.f32 0.0, %v660
      %v662 = vpop.f32.mrb[0].mxu0
      %v663 = vpop.f32.mrb[0].mxu0
      %v664 = vadd.f32 0.0, %v663
      %v665 = vpop.f32.mrb[0].mxu0
      %666 = vmatprep.mubr.bf16.mxu0 0
      %667 = vmatmul.mubr.bf16.gmra.mrb[0].mxu0 %v496
      %v668 = vpop.f32.mrb[0].mxu0
      %v669 = vadd.f32 0.0, %v668
      %v670 = vpop.f32.mrb[0].mxu0
      %v671 = vpop.f32.mrb[0].mxu0
      %v672 = vadd.f32 0.0, %v671
      %v673 = vpop.f32.mrb[0].mxu0
      %674 = vmatprep.mubr.bf16.mxu0 0
      %675 = vmatmul.mubr.bf16.gmra.mrb[0].mxu0 %v499
      %v676 = vpop.f32.mrb[0].mxu0
      %v677 = vadd.f32 0.0, %v676
      %v678 = vpop.f32.mrb[0].mxu0
      %v679 = vpop.f32.mrb[0].mxu0
      %v680 = vadd.f32 0.0, %v679
      %v681 = vpop.f32.mrb[0].mxu0
      %682 = vmatprep.mubr.bf16.mxu0 0
      %683 = vmatmul.mubr.bf16.gmra.mrb[0].mxu0 %v502
      %v684 = vpop.f32.mrb[0].mxu0
      %v685 = vadd.f32 0.0, %v684
      %v686 = vpop.f32.mrb[0].mxu0
      %v687 = vpop.f32.mrb[0].mxu0
      %v688 = vadd.f32 0.0, %v687
      %v689 = vpop.f32.mrb[0].mxu0
      %690 = vmatprep.mubr.bf16.mxu0 0
      %691 = vmatmul.mubr.bf16.gmra.mrb[0].mxu0 %v505
      %v692 = vpop.f32.mrb[0].mxu0
      %v693 = vadd.f32 0.0, %v692
      %v694 = vpop.f32.mrb[0].mxu0
      %v695 = vpop.f32.mrb[0].mxu0
      %v696 = vadd.f32 0.0, %v695
      %v697 = vpop.f32.mrb[0].mxu0
      %698 = vmatprep.mubr.bf16.mxu0 0
      %699 = vmatmul.mubr.bf16.gmra.mrb[0].mxu0 %v508
      %v700 = vpop.f32.mrb[0].mxu0
      %v701 = vadd.f32 0.0, %v700
      %v702 = vpop.f32.mrb[0].mxu0
      %v703 = vpop.f32.mrb[0].mxu0
      %v704 = vadd.f32 0.0, %v703
      %v705 = vpop.f32.mrb[0].mxu0
      %706 = vdwg.mxu0
      %v709 = vunpack.c.l.b16 %v264
      %v710 = vunpack.c.l.b16 %v303
      %v711 = vpack.c.b16 %v350, %v709
      %v712 = vpack.c.b16 %v710, %v387
      %v714 = vsel %vm449, %v711, 0
      %v717 = vsel %vm449, %v390, 0
      %v720 = vsel %vm449, %v391, 0
      %v723 = vsel %vm449, %v392, 0
      %v726 = vsel %vm449, %v393, 0
      %v729 = vsel %vm449, %v394, 0
      %v732 = vsel %vm449, %v395, 0
      %v735 = vsel %vm449, %v396, 0
      %v738 = vsel %vm449, %v397, 0
      %v741 = vsel %vm449, %v398, 0
      %v744 = vsel %vm449, %v399, 0
      %v747 = vsel %vm449, %v400, 0
      %v750 = vsel %vm449, %v401, 0
      %v753 = vsel %vm449, %v402, 0
      %v756 = vsel %vm449, %v403, 0
      %v759 = vsel %vm449, %v404, 0
      %v762 = vsel %vm449, %v405, 0
      %v765 = vsel %vm449, %v406, 0
      %v768 = vsel %vm449, %v407, 0
      %v771 = vsel %vm449, %v712, 0
      %v774 = vsel %vm510, %v304, 0
      %776 = vmatprep.subr.bf16.mxu0 0
      %777 = vmatpush1.bf16.msra.mxu0 %v774
      %778 = vmatprep.subr.bf16.mxu0 0
      %779 = vmatpush1.bf16.msra.mxu0 0
      %780 = vmatprep.subr.bf16.mxu0 0
      %781 = vmatpush1.bf16.msra.mxu0 0
      %782 = vmatprep.subr.bf16.mxu0 0
      %783 = vmatpush1.bf16.msra.mxu0 0
      %784 = vmatprep.subr.bf16.mxu0 0
      %785 = vmatpush1.bf16.msra.mxu0 0
      %786 = vmatprep.subr.bf16.mxu0 0
      %787 = vmatpush1.bf16.msra.mxu0 0
      %788 = vmatprep.subr.bf16.mxu0 0
      %789 = vmatpush1.bf16.msra.mxu0 0
      %790 = vmatprep.subr.bf16.mxu0 0
      %791 = vmatpush1.bf16.msra.mxu0 0
      %792 = vmatprep.subr.bf16.mxu0 0
      %793 = vmatpush1.bf16.msra.mxu0 0
      %794 = vmatprep.subr.bf16.mxu0 0
      %795 = vmatpush1.bf16.msra.mxu0 0
      %796 = vmatprep.subr.bf16.mxu0 0
      %797 = vmatpush1.bf16.msra.mxu0 0
      %798 = vmatprep.subr.bf16.mxu0 0
      %799 = vmatpush1.bf16.msra.mxu0 0
      %800 = vmatprep.subr.bf16.mxu0 0
      %801 = vmatpush1.bf16.msra.mxu0 0
      %802 = vmatprep.subr.bf16.mxu0 0
      %803 = vmatpush1.bf16.msra.mxu0 0
      %804 = vmatprep.subr.bf16.mxu0 0
      %805 = vmatpush1.bf16.msra.mxu0 0
      %806 = vmatprep.subr.bf16.mxu0 0
      %807 = vmatpush1.bf16.msra.mxu0 0
      %808 = vmatprep.mubr.bf16.mxu0 0
      %809 = vmatmul.mubr.bf16.gmra.mrb[0].mxu0 %v714
      %v810 = vpop.f32.mrb[0].mxu0
      %v811 = vadd.f32 %v549, %v810
      %v812 = vpop.f32.mrb[0].mxu0
      %v813 = vpop.f32.mrb[0].mxu0
      %v814 = vadd.f32 %v552, %v813
      %v815 = vpop.f32.mrb[0].mxu0
      %816 = vmatprep.mubr.bf16.mxu0 0
      %817 = vmatmul.mubr.bf16.gmra.mrb[0].mxu0 %v717
      %v818 = vpop.f32.mrb[0].mxu0
      %v819 = vadd.f32 %v557, %v818
      %v820 = vpop.f32.mrb[0].mxu0
      %v821 = vpop.f32.mrb[0].mxu0
      %v822 = vadd.f32 %v560, %v821
      %v823 = vpop.f32.mrb[0].mxu0
      %824 = vmatprep.mubr.bf16.mxu0 0
      %825 = vmatmul.mubr.bf16.gmra.mrb[0].mxu0 %v720
      %v826 = vpop.f32.mrb[0].mxu0
      %v827 = vadd.f32 %v565, %v826
      %v828 = vpop.f32.mrb[0].mxu0
      %v829 = vpop.f32.mrb[0].mxu0
      %v830 = vadd.f32 %v568, %v829
      %v831 = vpop.f32.mrb[0].mxu0
      %832 = vmatprep.mubr.bf16.mxu0 0
      %833 = vmatmul.mubr.bf16.gmra.mrb[0].mxu0 %v723
      %v834 = vpop.f32.mrb[0].mxu0
      %v835 = vadd.f32 %v573, %v834
      %v836 = vpop.f32.mrb[0].mxu0
      %v837 = vpop.f32.mrb[0].mxu0
      %v838 = vadd.f32 %v576, %v837
      %v839 = vpop.f32.mrb[0].mxu0
      %840 = vmatprep.mubr.bf16.mxu0 0
      %841 = vmatmul.mubr.bf16.gmra.mrb[0].mxu0 %v726
      %v842 = vpop.f32.mrb[0].mxu0
      %v843 = vadd.f32 %v581, %v842
      %v844 = vpop.f32.mrb[0].mxu0
      %v845 = vpop.f32.mrb[0].mxu0
      %v846 = vadd.f32 %v584, %v845
      %v847 = vpop.f32.mrb[0].mxu0
      %848 = vmatprep.mubr.bf16.mxu0 0
      %849 = vmatmul.mubr.bf16.gmra.mrb[0].mxu0 %v729
      %v850 = vpop.f32.mrb[0].mxu0
      %v851 = vadd.f32 %v589, %v850
      %v852 = vpop.f32.mrb[0].mxu0
      %v853 = vpop.f32.mrb[0].mxu0
      %v854 = vadd.f32 %v592, %v853
      %v855 = vpop.f32.mrb[0].mxu0
      %856 = vmatprep.mubr.bf16.mxu0 0
      %857 = vmatmul.mubr.bf16.gmra.mrb[0].mxu0 %v732
      %v858 = vpop.f32.mrb[0].mxu0
      %v859 = vadd.f32 %v597, %v858
      %v860 = vpop.f32.mrb[0].mxu0
      %v861 = vpop.f32.mrb[0].mxu0
      %v862 = vadd.f32 %v600, %v861
      %v863 = vpop.f32.mrb[0].mxu0
      %864 = vmatprep.mubr.bf16.mxu0 0
      %865 = vmatmul.mubr.bf16.gmra.mrb[0].mxu0 %v735
      %v866 = vpop.f32.mrb[0].mxu0
      %v867 = vadd.f32 %v605, %v866
      %v868 = vpop.f32.mrb[0].mxu0
      %v869 = vpop.f32.mrb[0].mxu0
      %v870 = vadd.f32 %v608, %v869
      %v871 = vpop.f32.mrb[0].mxu0
      %872 = vmatprep.mubr.bf16.mxu0 0
      %873 = vmatmul.mubr.bf16.gmra.mrb[0].mxu0 %v738
      %v874 = vpop.f32.mrb[0].mxu0
      %v875 = vadd.f32 %v613, %v874
      %v876 = vpop.f32.mrb[0].mxu0
      %v877 = vpop.f32.mrb[0].mxu0
      %v878 = vadd.f32 %v616, %v877
      %v879 = vpop.f32.mrb[0].mxu0
      %880 = vmatprep.mubr.bf16.mxu0 0
      %881 = vmatmul.mubr.bf16.gmra.mrb[0].mxu0 %v741
      %v882 = vpop.f32.mrb[0].mxu0
      %v883 = vadd.f32 %v621, %v882
      %v884 = vpop.f32.mrb[0].mxu0
      %v885 = vpop.f32.mrb[0].mxu0
      %v886 = vadd.f32 %v624, %v885
      %v887 = vpop.f32.mrb[0].mxu0
      %888 = vmatprep.mubr.bf16.mxu0 0
      %889 = vmatmul.mubr.bf16.gmra.mrb[0].mxu0 %v744
      %v890 = vpop.f32.mrb[0].mxu0
      %v891 = vadd.f32 %v629, %v890
      %v892 = vpop.f32.mrb[0].mxu0
      %v893 = vpop.f32.mrb[0].mxu0
      %v894 = vadd.f32 %v632, %v893
      %v895 = vpop.f32.mrb[0].mxu0
      %896 = vmatprep.mubr.bf16.mxu0 0
      %897 = vmatmul.mubr.bf16.gmra.mrb[0].mxu0 %v747
      %v898 = vpop.f32.mrb[0].mxu0
      %v899 = vadd.f32 %v637, %v898
      %v900 = vpop.f32.mrb[0].mxu0
      %v901 = vpop.f32.mrb[0].mxu0
      %v902 = vadd.f32 %v640, %v901
      %v903 = vpop.f32.mrb[0].mxu0
      %904 = vmatprep.mubr.bf16.mxu0 0
      %905 = vmatmul.mubr.bf16.gmra.mrb[0].mxu0 %v750
      %v906 = vpop.f32.mrb[0].mxu0
      %v907 = vadd.f32 %v645, %v906
      %v908 = vpop.f32.mrb[0].mxu0
      %v909 = vpop.f32.mrb[0].mxu0
      %v910 = vadd.f32 %v648, %v909
      %v911 = vpop.f32.mrb[0].mxu0
      %912 = vmatprep.mubr.bf16.mxu0 0
      %913 = vmatmul.mubr.bf16.gmra.mrb[0].mxu0 %v753
      %v914 = vpop.f32.mrb[0].mxu0
      %v915 = vadd.f32 %v653, %v914
      %v916 = vpop.f32.mrb[0].mxu0
      %v917 = vpop.f32.mrb[0].mxu0
      %v918 = vadd.f32 %v656, %v917
      %v919 = vpop.f32.mrb[0].mxu0
      %920 = vmatprep.mubr.bf16.mxu0 0
      %921 = vmatmul.mubr.bf16.gmra.mrb[0].mxu0 %v756
      %v922 = vpop.f32.mrb[0].mxu0
      %v923 = vadd.f32 %v661, %v922
      %v924 = vpop.f32.mrb[0].mxu0
      %v925 = vpop.f32.mrb[0].mxu0
      %v926 = vadd.f32 %v664, %v925
      %v927 = vpop.f32.mrb[0].mxu0
      %928 = vmatprep.mubr.bf16.mxu0 0
      %929 = vmatmul.mubr.bf16.gmra.mrb[0].mxu0 %v759
      %v930 = vpop.f32.mrb[0].mxu0
      %v931 = vadd.f32 %v669, %v930
      %v932 = vpop.f32.mrb[0].mxu0
      %v933 = vpop.f32.mrb[0].mxu0
      %v934 = vadd.f32 %v672, %v933
      %v935 = vpop.f32.mrb[0].mxu0
      %936 = vmatprep.mubr.bf16.mxu0 0
      %937 = vmatmul.mubr.bf16.gmra.mrb[0].mxu0 %v762
      %v938 = vpop.f32.mrb[0].mxu0
      %v939 = vadd.f32 %v677, %v938
      %v940 = vpop.f32.mrb[0].mxu0
      %v941 = vpop.f32.mrb[0].mxu0
      %v942 = vadd.f32 %v680, %v941
      %v943 = vpop.f32.mrb[0].mxu0
      %944 = vmatprep.mubr.bf16.mxu0 0
      %945 = vmatmul.mubr.bf16.gmra.mrb[0].mxu0 %v765
      %v946 = vpop.f32.mrb[0].mxu0
      %v947 = vadd.f32 %v685, %v946
      %v948 = vpop.f32.mrb[0].mxu0
      %v949 = vpop.f32.mrb[0].mxu0
      %v950 = vadd.f32 %v688, %v949
      %v951 = vpop.f32.mrb[0].mxu0
      %952 = vmatprep.mubr.bf16.mxu0 0
      %953 = vmatmul.mubr.bf16.gmra.mrb[0].mxu0 %v768
      %v954 = vpop.f32.mrb[0].mxu0
      %v955 = vadd.f32 %v693, %v954
      %v956 = vpop.f32.mrb[0].mxu0
      %v957 = vpop.f32.mrb[0].mxu0
      %v958 = vadd.f32 %v696, %v957
      %v959 = vpop.f32.mrb[0].mxu0
      %960 = vmatprep.mubr.bf16.mxu0 0
      %961 = vmatmul.mubr.bf16.gmra.mrb[0].mxu0 %v771
      %v962 = vpop.f32.mrb[0].mxu0
      %v963 = vadd.f32 %v701, %v962
      %v964 = vpop.f32.mrb[0].mxu0
      %v965 = vpop.f32.mrb[0].mxu0
      %v966 = vadd.f32 %v704, %v965
      %v967 = vpop.f32.mrb[0].mxu0
      %968 = vdwg.mxu0
      %v969 = vld [vmem:[%s244] sm:$0xc]
      %v970 = vld [vmem:[%s244 + $0x9c] sm:$0xf]
      %s971 = scalar_lea.vmem %s248, 4
      %v972 = vld [vmem:[%s971] sm:$0x3]
      %v975 = vunpack.c.l.b16 %v969
      %v976 = vunpack.c.l.b16 %v970
      %v977 = vpack.c.b16 %v350, %v975
      %v978 = vpack.c.b16 %v976, %v387
      %vm979 = vcmask 1045504
      %v980 = vrot.slane %v977, 2
      %v981 = vrot.slane %v390, 2
      %v982 = vsel %vm979, %v980, %v981
      %v983 = vrot.slane %v391, 2
      %v984 = vsel %vm979, %v981, %v983
      %v985 = vrot.slane %v392, 2
      %v986 = vsel %vm979, %v983, %v985
      %v987 = vrot.slane %v393, 2
      %v988 = vsel %vm979, %v985, %v987
      %v989 = vrot.slane %v394, 2
      %v990 = vsel %vm979, %v987, %v989
      %v991 = vrot.slane %v395, 2
      %v992 = vsel %vm979, %v989, %v991
      %v993 = vrot.slane %v396, 2
      %v994 = vsel %vm979, %v991, %v993
      %v995 = vrot.slane %v397, 2
      %v996 = vsel %vm979, %v993, %v995
      %v997 = vrot.slane %v398, 2
      %v998 = vsel %vm979, %v995, %v997
      %v999 = vrot.slane %v399, 2
      %v1000 = vsel %vm979, %v997, %v999
      %v1001 = vrot.slane %v400, 2
      %v1002 = vsel %vm979, %v999, %v1001
      %v1003 = vrot.slane %v401, 2
      %v1004 = vsel %vm979, %v1001, %v1003
      %v1005 = vrot.slane %v402, 2
      %v1006 = vsel %vm979, %v1003, %v1005
      %v1007 = vrot.slane %v403, 2
      %v1008 = vsel %vm979, %v1005, %v1007
      %v1009 = vrot.slane %v404, 2
      %v1010 = vsel %vm979, %v1007, %v1009
      %v1011 = vrot.slane %v405, 2
      %v1012 = vsel %vm979, %v1009, %v1011
      %v1013 = vrot.slane %v406, 2
      %v1014 = vsel %vm979, %v1011, %v1013
      %v1015 = vrot.slane %v407, 2
      %v1016 = vsel %vm979, %v1013, %v1015
      %v1017 = vrot.slane %v978, 2
      %v1018 = vsel %vm979, %v1015, %v1017
      %v1020 = vsel %vm449, %v982, 0
      %v1023 = vsel %vm449, %v984, 0
      %v1026 = vsel %vm449, %v986, 0
      %v1029 = vsel %vm449, %v988, 0
      %v1032 = vsel %vm449, %v990, 0
      %v1035 = vsel %vm449, %v992, 0
      %v1038 = vsel %vm449, %v994, 0
      %v1041 = vsel %vm449, %v996, 0
      %v1044 = vsel %vm449, %v998, 0
      %v1047 = vsel %vm449, %v1000, 0
      %v1050 = vsel %vm449, %v1002, 0
      %v1053 = vsel %vm449, %v1004, 0
      %v1056 = vsel %vm449, %v1006, 0
      %v1059 = vsel %vm449, %v1008, 0
      %v1062 = vsel %vm449, %v1010, 0
      %v1065 = vsel %vm449, %v1012, 0
      %v1068 = vsel %vm449, %v1014, 0
      %v1071 = vsel %vm449, %v1016, 0
      %v1074 = vsel %vm449, %v1018, 0
      %v1077 = vsel %vm449, %v1017, 0
      %v1080 = vsel %vm510, %v972, 0
      %1082 = vmatprep.subr.bf16.mxu0 0
      %1083 = vmatpush1.bf16.msra.mxu0 %v1080
      %1084 = vmatprep.subr.bf16.mxu0 0
      %1085 = vmatpush1.bf16.msra.mxu0 0
      %1086 = vmatprep.subr.bf16.mxu0 0
      %1087 = vmatpush1.bf16.msra.mxu0 0
      %1088 = vmatprep.subr.bf16.mxu0 0
      %1089 = vmatpush1.bf16.msra.mxu0 0
      %1090 = vmatprep.subr.bf16.mxu0 0
      %1091 = vmatpush1.bf16.msra.mxu0 0
      %1092 = vmatprep.subr.bf16.mxu0 0
      %1093 = vmatpush1.bf16.msra.mxu0 0
      %1094 = vmatprep.subr.bf16.mxu0 0
      %1095 = vmatpush1.bf16.msra.mxu0 0
      %1096 = vmatprep.subr.bf16.mxu0 0
      %1097 = vmatpush1.bf16.msra.mxu0 0
      %1098 = vmatprep.subr.bf16.mxu0 0
      %1099 = vmatpush1.bf16.msra.mxu0 0
      %1100 = vmatprep.subr.bf16.mxu0 0
      %1101 = vmatpush1.bf16.msra.mxu0 0
      %1102 = vmatprep.subr.bf16.mxu0 0
      %1103 = vmatpush1.bf16.msra.mxu0 0
      %1104 = vmatprep.subr.bf16.mxu0 0
      %1105 = vmatpush1.bf16.msra.mxu0 0
      %1106 = vmatprep.subr.bf16.mxu0 0
      %1107 = vmatpush1.bf16.msra.mxu0 0
      %1108 = vmatprep.subr.bf16.mxu0 0
      %1109 = vmatpush1.bf16.msra.mxu0 0
      %1110 = vmatprep.subr.bf16.mxu0 0
      %1111 = vmatpush1.bf16.msra.mxu0 0
      %1112 = vmatprep.subr.bf16.mxu0 0
      %1113 = vmatpush1.bf16.msra.mxu0 0
      %1114 = vmatprep.mubr.bf16.mxu0 0
      %1115 = vmatmul.mubr.bf16.gmra.mrb[0].mxu0 %v1020
      %v1116 = vpop.f32.mrb[0].mxu0
      %v1117 = vadd.f32 0.0, %v1116
      %v1118 = vpop.f32.mrb[0].mxu0
      %v1119 = vpop.f32.mrb[0].mxu0
      %v1120 = vadd.f32 0.0, %v1119
      %v1121 = vpop.f32.mrb[0].mxu0
      %1122 = vmatprep.mubr.bf16.mxu0 0
      %1123 = vmatmul.mubr.bf16.gmra.mrb[0].mxu0 %v1023
      %v1124 = vpop.f32.mrb[0].mxu0
      %v1125 = vadd.f32 0.0, %v1124
      %v1126 = vpop.f32.mrb[0].mxu0
      %v1127 = vpop.f32.mrb[0].mxu0
      %v1128 = vadd.f32 0.0, %v1127
      %v1129 = vpop.f32.mrb[0].mxu0
      %1130 = vmatprep.mubr.bf16.mxu0 0
      %1131 = vmatmul.mubr.bf16.gmra.mrb[0].mxu0 %v1026
      %v1132 = vpop.f32.mrb[0].mxu0
      %v1133 = vadd.f32 0.0, %v1132
      %v1134 = vpop.f32.mrb[0].mxu0
      %v1135 = vpop.f32.mrb[0].mxu0
      %v1136 = vadd.f32 0.0, %v1135
      %v1137 = vpop.f32.mrb[0].mxu0
      %1138 = vmatprep.mubr.bf16.mxu0 0
      %1139 = vmatmul.mubr.bf16.gmra.mrb[0].mxu0 %v1029
      %v1140 = vpop.f32.mrb[0].mxu0
      %v1141 = vadd.f32 0.0, %v1140
      %v1142 = vpop.f32.mrb[0].mxu0
      %v1143 = vpop.f32.mrb[0].mxu0
      %v1144 = vadd.f32 0.0, %v1143
      %v1145 = vpop.f32.mrb[0].mxu0
      %1146 = vmatprep.mubr.bf16.mxu0 0
      %1147 = vmatmul.mubr.bf16.gmra.mrb[0].mxu0 %v1032
      %v1148 = vpop.f32.mrb[0].mxu0
      %v1149 = vadd.f32 0.0, %v1148
      %v1150 = vpop.f32.mrb[0].mxu0
      %v1151 = vpop.f32.mrb[0].mxu0
      %v1152 = vadd.f32 0.0, %v1151
      %v1153 = vpop.f32.mrb[0].mxu0
      %1154 = vmatprep.mubr.bf16.mxu0 0
      %1155 = vmatmul.mubr.bf16.gmra.mrb[0].mxu0 %v1035
      %v1156 = vpop.f32.mrb[0].mxu0
      %v1157 = vadd.f32 0.0, %v1156
      %v1158 = vpop.f32.mrb[0].mxu0
      %v1159 = vpop.f32.mrb[0].mxu0
      %v1160 = vadd.f32 0.0, %v1159
      %v1161 = vpop.f32.mrb[0].mxu0
      %1162 = vmatprep.mubr.bf16.mxu0 0
      %1163 = vmatmul.mubr.bf16.gmra.mrb[0].mxu0 %v1038
      %v1164 = vpop.f32.mrb[0].mxu0
      %v1165 = vadd.f32 0.0, %v1164
      %v1166 = vpop.f32.mrb[0].mxu0
      %v1167 = vpop.f32.mrb[0].mxu0
      %v1168 = vadd.f32 0.0, %v1167
      %v1169 = vpop.f32.mrb[0].mxu0
      %1170 = vmatprep.mubr.bf16.mxu0 0
      %1171 = vmatmul.mubr.bf16.gmra.mrb[0].mxu0 %v1041
      %v1172 = vpop.f32.mrb[0].mxu0
      %v1173 = vadd.f32 0.0, %v1172
      %v1174 = vpop.f32.mrb[0].mxu0
      %v1175 = vpop.f32.mrb[0].mxu0
      %v1176 = vadd.f32 0.0, %v1175
      %v1177 = vpop.f32.mrb[0].mxu0
      %1178 = vmatprep.mubr.bf16.mxu0 0
      %1179 = vmatmul.mubr.bf16.gmra.mrb[0].mxu0 %v1044
      %v1180 = vpop.f32.mrb[0].mxu0
      %v1181 = vadd.f32 0.0, %v1180
      %v1182 = vpop.f32.mrb[0].mxu0
      %v1183 = vpop.f32.mrb[0].mxu0
      %v1184 = vadd.f32 0.0, %v1183
      %v1185 = vpop.f32.mrb[0].mxu0
      %1186 = vmatprep.mubr.bf16.mxu0 0
      %1187 = vmatmul.mubr.bf16.gmra.mrb[0].mxu0 %v1047
      %v1188 = vpop.f32.mrb[0].mxu0
      %v1189 = vadd.f32 0.0, %v1188
      %v1190 = vpop.f32.mrb[0].mxu0
      %v1191 = vpop.f32.mrb[0].mxu0
      %v1192 = vadd.f32 0.0, %v1191
      %v1193 = vpop.f32.mrb[0].mxu0
      %1194 = vmatprep.mubr.bf16.mxu0 0
      %1195 = vmatmul.mubr.bf16.gmra.mrb[0].mxu0 %v1050
      %v1196 = vpop.f32.mrb[0].mxu0
      %v1197 = vadd.f32 0.0, %v1196
      %v1198 = vpop.f32.mrb[0].mxu0
      %v1199 = vpop.f32.mrb[0].mxu0
      %v1200 = vadd.f32 0.0, %v1199
      %v1201 = vpop.f32.mrb[0].mxu0
      %1202 = vmatprep.mubr.bf16.mxu0 0
      %1203 = vmatmul.mubr.bf16.gmra.mrb[0].mxu0 %v1053
      %v1204 = vpop.f32.mrb[0].mxu0
      %v1205 = vadd.f32 0.0, %v1204
      %v1206 = vpop.f32.mrb[0].mxu0
      %v1207 = vpop.f32.mrb[0].mxu0
      %v1208 = vadd.f32 0.0, %v1207
      %v1209 = vpop.f32.mrb[0].mxu0
      %1210 = vmatprep.mubr.bf16.mxu0 0
      %1211 = vmatmul.mubr.bf16.gmra.mrb[0].mxu0 %v1056
      %v1212 = vpop.f32.mrb[0].mxu0
      %v1213 = vadd.f32 0.0, %v1212
      %v1214 = vpop.f32.mrb[0].mxu0
      %v1215 = vpop.f32.mrb[0].mxu0
      %v1216 = vadd.f32 0.0, %v1215
      %v1217 = vpop.f32.mrb[0].mxu0
      %1218 = vmatprep.mubr.bf16.mxu0 0
      %1219 = vmatmul.mubr.bf16.gmra.mrb[0].mxu0 %v1059
      %v1220 = vpop.f32.mrb[0].mxu0
      %v1221 = vadd.f32 0.0, %v1220
      %v1222 = vpop.f32.mrb[0].mxu0
      %v1223 = vpop.f32.mrb[0].mxu0
      %v1224 = vadd.f32 0.0, %v1223
      %v1225 = vpop.f32.mrb[0].mxu0
      %1226 = vmatprep.mubr.bf16.mxu0 0
      %1227 = vmatmul.mubr.bf16.gmra.mrb[0].mxu0 %v1062
      %v1228 = vpop.f32.mrb[0].mxu0
      %v1229 = vadd.f32 0.0, %v1228
      %v1230 = vpop.f32.mrb[0].mxu0
      %v1231 = vpop.f32.mrb[0].mxu0
      %v1232 = vadd.f32 0.0, %v1231
      %v1233 = vpop.f32.mrb[0].mxu0
      %1234 = vmatprep.mubr.bf16.mxu0 0
      %1235 = vmatmul.mubr.bf16.gmra.mrb[0].mxu0 %v1065
      %v1236 = vpop.f32.mrb[0].mxu0
      %v1237 = vadd.f32 0.0, %v1236
      %v1238 = vpop.f32.mrb[0].mxu0
      %v1239 = vpop.f32.mrb[0].mxu0
      %v1240 = vadd.f32 0.0, %v1239
      %v1241 = vpop.f32.mrb[0].mxu0
      %1242 = vmatprep.mubr.bf16.mxu0 0
      %1243 = vmatmul.mubr.bf16.gmra.mrb[0].mxu0 %v1068
      %v1244 = vpop.f32.mrb[0].mxu0
      %v1245 = vadd.f32 0.0, %v1244
      %v1246 = vpop.f32.mrb[0].mxu0
      %v1247 = vpop.f32.mrb[0].mxu0
      %v1248 = vadd.f32 0.0, %v1247
      %v1249 = vpop.f32.mrb[0].mxu0
      %1250 = vmatprep.mubr.bf16.mxu0 0
      %1251 = vmatmul.mubr.bf16.gmra.mrb[0].mxu0 %v1071
      %v1252 = vpop.f32.mrb[0].mxu0
      %v1253 = vadd.f32 0.0, %v1252
      %v1254 = vpop.f32.mrb[0].mxu0
      %v1255 = vpop.f32.mrb[0].mxu0
      %v1256 = vadd.f32 0.0, %v1255
      %v1257 = vpop.f32.mrb[0].mxu0
      %1258 = vmatprep.mubr.bf16.mxu0 0
      %1259 = vmatmul.mubr.bf16.gmra.mrb[0].mxu0 %v1074
      %v1260 = vpop.f32.mrb[0].mxu0
      %v1261 = vadd.f32 0.0, %v1260
      %v1262 = vpop.f32.mrb[0].mxu0
      %v1263 = vpop.f32.mrb[0].mxu0
      %v1264 = vadd.f32 0.0, %v1263
      %v1265 = vpop.f32.mrb[0].mxu0
      %1266 = vmatprep.mubr.bf16.mxu0 0
      %1267 = vmatmul.mubr.bf16.gmra.mrb[0].mxu0 %v1077
      %v1268 = vpop.f32.mrb[0].mxu0
      %v1269 = vadd.f32 0.0, %v1268
      %v1270 = vpop.f32.mrb[0].mxu0
      %v1271 = vpop.f32.mrb[0].mxu0
      %v1272 = vadd.f32 0.0, %v1271
      %v1273 = vpop.f32.mrb[0].mxu0
      %1274 = vdwg.mxu0
      %v1275 = vadd.f32 %v811, %v1117
      %v1276 = vadd.f32 %v814, %v1120
      %v1277 = vadd.f32 %v819, %v1125
      %v1278 = vadd.f32 %v822, %v1128
      %v1279 = vadd.f32 %v827, %v1133
      %v1280 = vadd.f32 %v830, %v1136
      %v1281 = vadd.f32 %v835, %v1141
      %v1282 = vadd.f32 %v838, %v1144
      %v1283 = vadd.f32 %v843, %v1149
      %v1284 = vadd.f32 %v846, %v1152
      %v1285 = vadd.f32 %v851, %v1157
      %v1286 = vadd.f32 %v854, %v1160
      %v1287 = vadd.f32 %v859, %v1165
      %v1288 = vadd.f32 %v862, %v1168
      %v1289 = vadd.f32 %v867, %v1173
      %v1290 = vadd.f32 %v870, %v1176
      %v1291 = vadd.f32 %v875, %v1181
      %v1292 = vadd.f32 %v878, %v1184
      %v1293 = vadd.f32 %v883, %v1189
      %v1294 = vadd.f32 %v886, %v1192
      %v1295 = vadd.f32 %v891, %v1197
      %v1296 = vadd.f32 %v894, %v1200
      %v1297 = vadd.f32 %v899, %v1205
      %v1298 = vadd.f32 %v902, %v1208
      %v1299 = vadd.f32 %v907, %v1213
      %v1300 = vadd.f32 %v910, %v1216
      %v1301 = vadd.f32 %v915, %v1221
      %v1302 = vadd.f32 %v918, %v1224
      %v1303 = vadd.f32 %v923, %v1229
      %v1304 = vadd.f32 %v926, %v1232
      %v1305 = vadd.f32 %v931, %v1237
      %v1306 = vadd.f32 %v934, %v1240
      %v1307 = vadd.f32 %v939, %v1245
      %v1308 = vadd.f32 %v942, %v1248
      %v1309 = vadd.f32 %v947, %v1253
      %v1310 = vadd.f32 %v950, %v1256
      %v1311 = vadd.f32 %v955, %v1261
      %v1312 = vadd.f32 %v958, %v1264
      %v1313 = vadd.f32 %v963, %v1269
      %v1314 = vadd.f32 %v966, %v1272
      %v1315 = vld [vmem:[%s244 + $0x14] sm:$0xf]
      %v1316 = vld [vmem:[%s244 + $0x18] sm:$0xf]
      %v1317 = vld [vmem:[%s244 + $0x1c] sm:$0xf]
      %v1318 = vld [vmem:[%s244 + $0x20] sm:$0xf]
      %v1319 = vld [vmem:[%s244 + $0x24] sm:$0xf]
      %v1320 = vld [vmem:[%s244 + $0x28] sm:$0xf]
      %v1321 = vld [vmem:[%s244 + $0x2c] sm:$0xf]
      %v1322 = vld [vmem:[%s244 + $0x30] sm:$0xf]
      %v1323 = vld [vmem:[%s244 + $0x34] sm:$0xf]
      %v1324 = vld [vmem:[%s244 + $0x38] sm:$0xf]
      %v1325 = vld [vmem:[%s244 + $0x3c] sm:$0xf]
      %v1326 = vld [vmem:[%s244 + $0x40] sm:$0xf]
      %v1327 = vld [vmem:[%s244 + $0x44] sm:$0xf]
      %v1328 = vld [vmem:[%s244 + $0x48] sm:$0xf]
      %v1329 = vld [vmem:[%s244 + $0x4c] sm:$0xf]
      %v1330 = vld [vmem:[%s244 + $0x50] sm:$0xf]
      %v1331 = vld [vmem:[%s244 + $0x54] sm:$0xf]
      %v1332 = vld [vmem:[%s244 + $0x58] sm:$0xf]
      %v1333 = vld [vmem:[%s244 + $0x5c] sm:$0xf]
      %v1334 = vld [vmem:[%s244 + $0x60] sm:$0xf]
      %v1335 = vld [vmem:[%s244 + $0x64] sm:$0xf]
      %v1336 = vld [vmem:[%s244 + $0x68] sm:$0xf]
      %v1337 = vld [vmem:[%s244 + $0x6c] sm:$0xf]
      %v1338 = vld [vmem:[%s244 + $0x70] sm:$0xf]
      %v1339 = vld [vmem:[%s244 + $0x74] sm:$0xf]
      %v1340 = vld [vmem:[%s244 + $0x78] sm:$0xf]
      %v1341 = vld [vmem:[%s244 + $0x7c] sm:$0xf]
      %v1342 = vld [vmem:[%s244 + $0x80] sm:$0xf]
      %v1343 = vld [vmem:[%s244 + $0x84] sm:$0xf]
      %v1344 = vld [vmem:[%s244 + $0x88] sm:$0xf]
      %v1345 = vld [vmem:[%s244 + $0x8c] sm:$0xf]
      %v1346 = vld [vmem:[%s244 + $0x90] sm:$0xf]
      %v1347 = vld [vmem:[%s244 + $0x94] sm:$0xf]
      %v1348 = vld [vmem:[%s244 + $0x98] sm:$0xf]
      %v1349 = vld [vmem:[%s244 + $0x9c] sm:$0xf]
      %v1350 = vld [vmem:[%s244 + $0xa0] sm:$0xf]
      %v1351 = vld [vmem:[%s244 + $0xa4] sm:$0xf]
      %v1352 = vld [vmem:[%s244 + $0xa8] sm:$0xf]
      %v1353 = vld [vmem:[%s244 + $0xac] sm:$0xf]
      %v1354 = vld [vmem:[%s244 + $0xb0] sm:$0x3]
      %s1355 = scalar_lea.vmem %s248, 6
      %v1356 = vld [vmem:[%s1355] sm:$0x3]
      %v1397 = vunpack.c.l.b16 %v1315
      %v1398 = vunpack.c.l.b16 %v1316
      %v1399 = vunpack.c.l.b16 %v1317
      %v1400 = vunpack.c.l.b16 %v1318
      %v1401 = vunpack.c.l.b16 %v1319
      %v1402 = vunpack.c.l.b16 %v1320
      %v1403 = vunpack.c.l.b16 %v1321
      %v1404 = vunpack.c.l.b16 %v1322
      %v1405 = vunpack.c.l.b16 %v1323
      %v1406 = vunpack.c.l.b16 %v1324
      %v1407 = vunpack.c.l.b16 %v1325
      %v1408 = vunpack.c.l.b16 %v1326
      %v1409 = vunpack.c.l.b16 %v1327
      %v1410 = vunpack.c.l.b16 %v1328
      %v1411 = vunpack.c.l.b16 %v1329
      %v1412 = vunpack.c.l.b16 %v1330
      %v1413 = vunpack.c.l.b16 %v1331
      %v1414 = vunpack.c.l.b16 %v1332
      %v1415 = vunpack.c.l.b16 %v1333
      %v1416 = vunpack.c.l.b16 %v1334
      %v1417 = vunpack.c.l.b16 %v1335
      %v1418 = vunpack.c.l.b16 %v1336
      %v1419 = vunpack.c.l.b16 %v1337
      %v1420 = vunpack.c.l.b16 %v1338
      %v1421 = vunpack.c.l.b16 %v1339
      %v1422 = vunpack.c.l.b16 %v1340
      %v1423 = vunpack.c.l.b16 %v1341
      %v1424 = vunpack.c.l.b16 %v1342
      %v1425 = vunpack.c.l.b16 %v1343
      %v1426 = vunpack.c.l.b16 %v1344
      %v1427 = vunpack.c.l.b16 %v1345
      %v1428 = vunpack.c.l.b16 %v1346
      %v1429 = vunpack.c.l.b16 %v1347
      %v1430 = vunpack.c.l.b16 %v1348
      %v1431 = vunpack.c.l.b16 %v1349
      %v1432 = vunpack.c.l.b16 %v1350
      %v1433 = vunpack.c.l.b16 %v1351
      %v1434 = vunpack.c.l.b16 %v1352
      %v1435 = vunpack.c.l.b16 %v1353
      %v1436 = vunpack.c.l.b16 %v1354
      %v1437 = vpack.c.b16 %v1398, %v1397
      %v1438 = vpack.c.b16 %v1400, %v1399
      %v1439 = vpack.c.b16 %v1402, %v1401
      %v1440 = vpack.c.b16 %v1404, %v1403
      %v1441 = vpack.c.b16 %v1406, %v1405
      %v1442 = vpack.c.b16 %v1408, %v1407
      %v1443 = vpack.c.b16 %v1410, %v1409
      %v1444 = vpack.c.b16 %v1412, %v1411
      %v1445 = vpack.c.b16 %v1414, %v1413
      %v1446 = vpack.c.b16 %v1416, %v1415
      %v1447 = vpack.c.b16 %v1418, %v1417
      %v1448 = vpack.c.b16 %v1420, %v1419
      %v1449 = vpack.c.b16 %v1422, %v1421
      %v1450 = vpack.c.b16 %v1424, %v1423
      %v1451 = vpack.c.b16 %v1426, %v1425
      %v1452 = vpack.c.b16 %v1428, %v1427
      %v1453 = vpack.c.b16 %v1430, %v1429
      %v1454 = vpack.c.b16 %v1432, %v1431
      %v1455 = vpack.c.b16 %v1434, %v1433
      %v1456 = vpack.c.b16 %v1436, %v1435
      %v1458 = vsel %vm449, %v1437, 0
      %v1461 = vsel %vm449, %v1438, 0
      %v1464 = vsel %vm449, %v1439, 0
      %v1467 = vsel %vm449, %v1440, 0
      %v1470 = vsel %vm449, %v1441, 0
      %v1473 = vsel %vm449, %v1442, 0
      %v1476 = vsel %vm449, %v1443, 0
      %v1479 = vsel %vm449, %v1444, 0
      %v1482 = vsel %vm449, %v1445, 0
      %v1485 = vsel %vm449, %v1446, 0
      %v1488 = vsel %vm449, %v1447, 0
      %v1491 = vsel %vm449, %v1448, 0
      %v1494 = vsel %vm449, %v1449, 0
      %v1497 = vsel %vm449, %v1450, 0
      %v1500 = vsel %vm449, %v1451, 0
      %v1503 = vsel %vm449, %v1452, 0
      %v1506 = vsel %vm449, %v1453, 0
      %v1509 = vsel %vm449, %v1454, 0
      %v1512 = vsel %vm449, %v1455, 0
      %v1515 = vsel %vm449, %v1456, 0
      %v1518 = vsel %vm510, %v1356, 0
      %1520 = vmatprep.subr.bf16.mxu0 0
      %1521 = vmatpush1.bf16.msra.mxu0 %v1518
      %1522 = vmatprep.subr.bf16.mxu0 0
      %1523 = vmatpush1.bf16.msra.mxu0 0
      %1524 = vmatprep.subr.bf16.mxu0 0
      %1525 = vmatpush1.bf16.msra.mxu0 0
      %1526 = vmatprep.subr.bf16.mxu0 0
      %1527 = vmatpush1.bf16.msra.mxu0 0
      %1528 = vmatprep.subr.bf16.mxu0 0
      %1529 = vmatpush1.bf16.msra.mxu0 0
      %1530 = vmatprep.subr.bf16.mxu0 0
      %1531 = vmatpush1.bf16.msra.mxu0 0
      %1532 = vmatprep.subr.bf16.mxu0 0
      %1533 = vmatpush1.bf16.msra.mxu0 0
      %1534 = vmatprep.subr.bf16.mxu0 0
      %1535 = vmatpush1.bf16.msra.mxu0 0
      %1536 = vmatprep.subr.bf16.mxu0 0
      %1537 = vmatpush1.bf16.msra.mxu0 0
      %1538 = vmatprep.subr.bf16.mxu0 0
      %1539 = vmatpush1.bf16.msra.mxu0 0
      %1540 = vmatprep.subr.bf16.mxu0 0
      %1541 = vmatpush1.bf16.msra.mxu0 0
      %1542 = vmatprep.subr.bf16.mxu0 0
      %1543 = vmatpush1.bf16.msra.mxu0 0
      %1544 = vmatprep.subr.bf16.mxu0 0
      %1545 = vmatpush1.bf16.msra.mxu0 0
      %1546 = vmatprep.subr.bf16.mxu0 0
      %1547 = vmatpush1.bf16.msra.mxu0 0
      %1548 = vmatprep.subr.bf16.mxu0 0
      %1549 = vmatpush1.bf16.msra.mxu0 0
      %1550 = vmatprep.subr.bf16.mxu0 0
      %1551 = vmatpush1.bf16.msra.mxu0 0
      %1552 = vmatprep.mubr.bf16.mxu0 0
      %1553 = vmatmul.mubr.bf16.gmra.mrb[0].mxu0 %v1458
      %v1554 = vpop.f32.mrb[0].mxu0
      %v1555 = vadd.f32 0.0, %v1554
      %v1556 = vpop.f32.mrb[0].mxu0
      %v1557 = vpop.f32.mrb[0].mxu0
      %v1558 = vadd.f32 0.0, %v1557
      %v1559 = vpop.f32.mrb[0].mxu0
      %1560 = vmatprep.mubr.bf16.mxu0 0
      %1561 = vmatmul.mubr.bf16.gmra.mrb[0].mxu0 %v1461
      %v1562 = vpop.f32.mrb[0].mxu0
      %v1563 = vadd.f32 0.0, %v1562
      %v1564 = vpop.f32.mrb[0].mxu0
      %v1565 = vpop.f32.mrb[0].mxu0
      %v1566 = vadd.f32 0.0, %v1565
      %v1567 = vpop.f32.mrb[0].mxu0
      %1568 = vmatprep.mubr.bf16.mxu0 0
      %1569 = vmatmul.mubr.bf16.gmra.mrb[0].mxu0 %v1464
      %v1570 = vpop.f32.mrb[0].mxu0
      %v1571 = vadd.f32 0.0, %v1570
      %v1572 = vpop.f32.mrb[0].mxu0
      %v1573 = vpop.f32.mrb[0].mxu0
      %v1574 = vadd.f32 0.0, %v1573
      %v1575 = vpop.f32.mrb[0].mxu0
      %1576 = vmatprep.mubr.bf16.mxu0 0
      %1577 = vmatmul.mubr.bf16.gmra.mrb[0].mxu0 %v1467
      %v1578 = vpop.f32.mrb[0].mxu0
      %v1579 = vadd.f32 0.0, %v1578
      %v1580 = vpop.f32.mrb[0].mxu0
      %v1581 = vpop.f32.mrb[0].mxu0
      %v1582 = vadd.f32 0.0, %v1581
      %v1583 = vpop.f32.mrb[0].mxu0
      %1584 = vmatprep.mubr.bf16.mxu0 0
      %1585 = vmatmul.mubr.bf16.gmra.mrb[0].mxu0 %v1470
      %v1586 = vpop.f32.mrb[0].mxu0
      %v1587 = vadd.f32 0.0, %v1586
      %v1588 = vpop.f32.mrb[0].mxu0
      %v1589 = vpop.f32.mrb[0].mxu0
      %v1590 = vadd.f32 0.0, %v1589
      %v1591 = vpop.f32.mrb[0].mxu0
      %1592 = vmatprep.mubr.bf16.mxu0 0
      %1593 = vmatmul.mubr.bf16.gmra.mrb[0].mxu0 %v1473
      %v1594 = vpop.f32.mrb[0].mxu0
      %v1595 = vadd.f32 0.0, %v1594
      %v1596 = vpop.f32.mrb[0].mxu0
      %v1597 = vpop.f32.mrb[0].mxu0
      %v1598 = vadd.f32 0.0, %v1597
      %v1599 = vpop.f32.mrb[0].mxu0
      %1600 = vmatprep.mubr.bf16.mxu0 0
      %1601 = vmatmul.mubr.bf16.gmra.mrb[0].mxu0 %v1476
      %v1602 = vpop.f32.mrb[0].mxu0
      %v1603 = vadd.f32 0.0, %v1602
      %v1604 = vpop.f32.mrb[0].mxu0
      %v1605 = vpop.f32.mrb[0].mxu0
      %v1606 = vadd.f32 0.0, %v1605
      %v1607 = vpop.f32.mrb[0].mxu0
      %1608 = vmatprep.mubr.bf16.mxu0 0
      %1609 = vmatmul.mubr.bf16.gmra.mrb[0].mxu0 %v1479
      %v1610 = vpop.f32.mrb[0].mxu0
      %v1611 = vadd.f32 0.0, %v1610
      %v1612 = vpop.f32.mrb[0].mxu0
      %v1613 = vpop.f32.mrb[0].mxu0
      %v1614 = vadd.f32 0.0, %v1613
      %v1615 = vpop.f32.mrb[0].mxu0
      %1616 = vmatprep.mubr.bf16.mxu0 0
      %1617 = vmatmul.mubr.bf16.gmra.mrb[0].mxu0 %v1482
      %v1618 = vpop.f32.mrb[0].mxu0
      %v1619 = vadd.f32 0.0, %v1618
      %v1620 = vpop.f32.mrb[0].mxu0
      %v1621 = vpop.f32.mrb[0].mxu0
      %v1622 = vadd.f32 0.0, %v1621
      %v1623 = vpop.f32.mrb[0].mxu0
      %1624 = vmatprep.mubr.bf16.mxu0 0
      %1625 = vmatmul.mubr.bf16.gmra.mrb[0].mxu0 %v1485
      %v1626 = vpop.f32.mrb[0].mxu0
      %v1627 = vadd.f32 0.0, %v1626
      %v1628 = vpop.f32.mrb[0].mxu0
      %v1629 = vpop.f32.mrb[0].mxu0
      %v1630 = vadd.f32 0.0, %v1629
      %v1631 = vpop.f32.mrb[0].mxu0
      %1632 = vmatprep.mubr.bf16.mxu0 0
      %1633 = vmatmul.mubr.bf16.gmra.mrb[0].mxu0 %v1488
      %v1634 = vpop.f32.mrb[0].mxu0
      %v1635 = vadd.f32 0.0, %v1634
      %v1636 = vpop.f32.mrb[0].mxu0
      %v1637 = vpop.f32.mrb[0].mxu0
      %v1638 = vadd.f32 0.0, %v1637
      %v1639 = vpop.f32.mrb[0].mxu0
      %1640 = vmatprep.mubr.bf16.mxu0 0
      %1641 = vmatmul.mubr.bf16.gmra.mrb[0].mxu0 %v1491
      %v1642 = vpop.f32.mrb[0].mxu0
      %v1643 = vadd.f32 0.0, %v1642
      %v1644 = vpop.f32.mrb[0].mxu0
      %v1645 = vpop.f32.mrb[0].mxu0
      %v1646 = vadd.f32 0.0, %v1645
      %v1647 = vpop.f32.mrb[0].mxu0
      %1648 = vmatprep.mubr.bf16.mxu0 0
      %1649 = vmatmul.mubr.bf16.gmra.mrb[0].mxu0 %v1494
      %v1650 = vpop.f32.mrb[0].mxu0
      %v1651 = vadd.f32 0.0, %v1650
      %v1652 = vpop.f32.mrb[0].mxu0
      %v1653 = vpop.f32.mrb[0].mxu0
      %v1654 = vadd.f32 0.0, %v1653
      %v1655 = vpop.f32.mrb[0].mxu0
      %1656 = vmatprep.mubr.bf16.mxu0 0
      %1657 = vmatmul.mubr.bf16.gmra.mrb[0].mxu0 %v1497
      %v1658 = vpop.f32.mrb[0].mxu0
      %v1659 = vadd.f32 0.0, %v1658
      %v1660 = vpop.f32.mrb[0].mxu0
      %v1661 = vpop.f32.mrb[0].mxu0
      %v1662 = vadd.f32 0.0, %v1661
      %v1663 = vpop.f32.mrb[0].mxu0
      %1664 = vmatprep.mubr.bf16.mxu0 0
      %1665 = vmatmul.mubr.bf16.gmra.mrb[0].mxu0 %v1500
      %v1666 = vpop.f32.mrb[0].mxu0
      %v1667 = vadd.f32 0.0, %v1666
      %v1668 = vpop.f32.mrb[0].mxu0
      %v1669 = vpop.f32.mrb[0].mxu0
      %v1670 = vadd.f32 0.0, %v1669
      %v1671 = vpop.f32.mrb[0].mxu0
      %1672 = vmatprep.mubr.bf16.mxu0 0
      %1673 = vmatmul.mubr.bf16.gmra.mrb[0].mxu0 %v1503
      %v1674 = vpop.f32.mrb[0].mxu0
      %v1675 = vadd.f32 0.0, %v1674
      %v1676 = vpop.f32.mrb[0].mxu0
      %v1677 = vpop.f32.mrb[0].mxu0
      %v1678 = vadd.f32 0.0, %v1677
      %v1679 = vpop.f32.mrb[0].mxu0
      %1680 = vmatprep.mubr.bf16.mxu0 0
      %1681 = vmatmul.mubr.bf16.gmra.mrb[0].mxu0 %v1506
      %v1682 = vpop.f32.mrb[0].mxu0
      %v1683 = vadd.f32 0.0, %v1682
      %v1684 = vpop.f32.mrb[0].mxu0
      %v1685 = vpop.f32.mrb[0].mxu0
      %v1686 = vadd.f32 0.0, %v1685
      %v1687 = vpop.f32.mrb[0].mxu0
      %1688 = vmatprep.mubr.bf16.mxu0 0
      %1689 = vmatmul.mubr.bf16.gmra.mrb[0].mxu0 %v1509
      %v1690 = vpop.f32.mrb[0].mxu0
      %v1691 = vadd.f32 0.0, %v1690
      %v1692 = vpop.f32.mrb[0].mxu0
      %v1693 = vpop.f32.mrb[0].mxu0
      %v1694 = vadd.f32 0.0, %v1693
      %v1695 = vpop.f32.mrb[0].mxu0
      %1696 = vmatprep.mubr.bf16.mxu0 0
      %1697 = vmatmul.mubr.bf16.gmra.mrb[0].mxu0 %v1512
      %v1698 = vpop.f32.mrb[0].mxu0
      %v1699 = vadd.f32 0.0, %v1698
      %v1700 = vpop.f32.mrb[0].mxu0
      %v1701 = vpop.f32.mrb[0].mxu0
      %v1702 = vadd.f32 0.0, %v1701
      %v1703 = vpop.f32.mrb[0].mxu0
      %1704 = vmatprep.mubr.bf16.mxu0 0
      %1705 = vmatmul.mubr.bf16.gmra.mrb[0].mxu0 %v1515
      %v1706 = vpop.f32.mrb[0].mxu0
      %v1707 = vadd.f32 0.0, %v1706
      %v1708 = vpop.f32.mrb[0].mxu0
      %v1709 = vpop.f32.mrb[0].mxu0
      %v1710 = vadd.f32 0.0, %v1709
      %v1711 = vpop.f32.mrb[0].mxu0
      %1712 = vdwg.mxu0
      %v1713 = vadd.f32 %v1275, %v1555
      %v1714 = vadd.f32 %v1276, %v1558
      %v1715 = vadd.f32 %v1277, %v1563
      %v1716 = vadd.f32 %v1278, %v1566
      %v1717 = vadd.f32 %v1279, %v1571
      %v1718 = vadd.f32 %v1280, %v1574
      %v1719 = vadd.f32 %v1281, %v1579
      %v1720 = vadd.f32 %v1282, %v1582
      %v1721 = vadd.f32 %v1283, %v1587
      %v1722 = vadd.f32 %v1284, %v1590
      %v1723 = vadd.f32 %v1285, %v1595
      %v1724 = vadd.f32 %v1286, %v1598
      %v1725 = vadd.f32 %v1287, %v1603
      %v1726 = vadd.f32 %v1288, %v1606
      %v1727 = vadd.f32 %v1289, %v1611
      %v1728 = vadd.f32 %v1290, %v1614
      %v1729 = vadd.f32 %v1291, %v1619
      %v1730 = vadd.f32 %v1292, %v1622
      %v1731 = vadd.f32 %v1293, %v1627
      %v1732 = vadd.f32 %v1294, %v1630
      %v1733 = vadd.f32 %v1295, %v1635
      %v1734 = vadd.f32 %v1296, %v1638
      %v1735 = vadd.f32 %v1297, %v1643
      %v1736 = vadd.f32 %v1298, %v1646
      %v1737 = vadd.f32 %v1299, %v1651
      %v1738 = vadd.f32 %v1300, %v1654
      %v1739 = vadd.f32 %v1301, %v1659
      %v1740 = vadd.f32 %v1302, %v1662
      %v1741 = vadd.f32 %v1303, %v1667
      %v1742 = vadd.f32 %v1304, %v1670
      %v1743 = vadd.f32 %v1305, %v1675
      %v1744 = vadd.f32 %v1306, %v1678
      %v1745 = vadd.f32 %v1307, %v1683
      %v1746 = vadd.f32 %v1308, %v1686
      %v1747 = vadd.f32 %v1309, %v1691
      %v1748 = vadd.f32 %v1310, %v1694
      %v1749 = vadd.f32 %v1311, %v1699
      %v1750 = vadd.f32 %v1312, %v1702
      %v1751 = vadd.f32 %v1313, %v1707
      %v1752 = vadd.f32 %v1314, %v1710
      %v1753 = vld [vmem:[%s244 + $0x14] sm:$0xe]
      %v1754 = vld [vmem:[%s244 + $0xb0] sm:$0x7]
      %s1755 = scalar_lea.vmem %s248, 8
      %v1756 = vld [vmem:[%s1755] sm:$0x3]
      %v1759 = vunpack.c.l.b16 %v1753
      %v1760 = vunpack.c.l.b16 %v1754
      %v1761 = vpack.c.b16 %v1398, %v1759
      %v1762 = vpack.c.b16 %v1760, %v1435
      %v1763 = vrot.slane %v1761, 1
      %v1764 = vrot.slane %v1438, 1
      %v1765 = vsel %vm409, %v1763, %v1764
      %v1766 = vrot.slane %v1439, 1
      %v1767 = vsel %vm409, %v1764, %v1766
      %v1768 = vrot.slane %v1440, 1
      %v1769 = vsel %vm409, %v1766, %v1768
      %v1770 = vrot.slane %v1441, 1
      %v1771 = vsel %vm409, %v1768, %v1770
      %v1772 = vrot.slane %v1442, 1
      %v1773 = vsel %vm409, %v1770, %v1772
      %v1774 = vrot.slane %v1443, 1
      %v1775 = vsel %vm409, %v1772, %v1774
      %v1776 = vrot.slane %v1444, 1
      %v1777 = vsel %vm409, %v1774, %v1776
      %v1778 = vrot.slane %v1445, 1
      %v1779 = vsel %vm409, %v1776, %v1778
      %v1780 = vrot.slane %v1446, 1
      %v1781 = vsel %vm409, %v1778, %v1780
      %v1782 = vrot.slane %v1447, 1
      %v1783 = vsel %vm409, %v1780, %v1782
      %v1784 = vrot.slane %v1448, 1
      %v1785 = vsel %vm409, %v1782, %v1784
      %v1786 = vrot.slane %v1449, 1
      %v1787 = vsel %vm409, %v1784, %v1786
      %v1788 = vrot.slane %v1450, 1
      %v1789 = vsel %vm409, %v1786, %v1788
      %v1790 = vrot.slane %v1451, 1
      %v1791 = vsel %vm409, %v1788, %v1790
      %v1792 = vrot.slane %v1452, 1
      %v1793 = vsel %vm409, %v1790, %v1792
      %v1794 = vrot.slane %v1453, 1
      %v1795 = vsel %vm409, %v1792, %v1794
      %v1796 = vrot.slane %v1454, 1
      %v1797 = vsel %vm409, %v1794, %v1796
      %v1798 = vrot.slane %v1455, 1
      %v1799 = vsel %vm409, %v1796, %v1798
      %v1800 = vrot.slane %v1762, 1
      %v1801 = vsel %vm409, %v1798, %v1800
      %v1803 = vsel %vm449, %v1765, 0
      %v1806 = vsel %vm449, %v1767, 0
      %v1809 = vsel %vm449, %v1769, 0
      %v1812 = vsel %vm449, %v1771, 0
      %v1815 = vsel %vm449, %v1773, 0
      %v1818 = vsel %vm449, %v1775, 0
      %v1821 = vsel %vm449, %v1777, 0
      %v1824 = vsel %vm449, %v1779, 0
      %v1827 = vsel %vm449, %v1781, 0
      %v1830 = vsel %vm449, %v1783, 0
      %v1833 = vsel %vm449, %v1785, 0
      %v1836 = vsel %vm449, %v1787, 0
      %v1839 = vsel %vm449, %v1789, 0
      %v1842 = vsel %vm449, %v1791, 0
      %v1845 = vsel %vm449, %v1793, 0
      %v1848 = vsel %vm449, %v1795, 0
      %v1851 = vsel %vm449, %v1797, 0
      %v1854 = vsel %vm449, %v1799, 0
      %v1857 = vsel %vm449, %v1801, 0
      %v1860 = vsel %vm449, %v1800, 0
      %v1863 = vsel %vm510, %v1756, 0
      %1865 = vmatprep.subr.bf16.mxu0 0
      %1866 = vmatpush1.bf16.msra.mxu0 %v1863
      %1867 = vmatprep.subr.bf16.mxu0 0
      %1868 = vmatpush1.bf16.msra.mxu0 0
      %1869 = vmatprep.subr.bf16.mxu0 0
      %1870 = vmatpush1.bf16.msra.mxu0 0
      %1871 = vmatprep.subr.bf16.mxu0 0
      %1872 = vmatpush1.bf16.msra.mxu0 0
      %1873 = vmatprep.subr.bf16.mxu0 0
      %1874 = vmatpush1.bf16.msra.mxu0 0
      %1875 = vmatprep.subr.bf16.mxu0 0
      %1876 = vmatpush1.bf16.msra.mxu0 0
      %1877 = vmatprep.subr.bf16.mxu0 0
      %1878 = vmatpush1.bf16.msra.mxu0 0
      %1879 = vmatprep.subr.bf16.mxu0 0
      %1880 = vmatpush1.bf16.msra.mxu0 0
      %1881 = vmatprep.subr.bf16.mxu0 0
      %1882 = vmatpush1.bf16.msra.mxu0 0
      %1883 = vmatprep.subr.bf16.mxu0 0
      %1884 = vmatpush1.bf16.msra.mxu0 0
      %1885 = vmatprep.subr.bf16.mxu0 0
      %1886 = vmatpush1.bf16.msra.mxu0 0
      %1887 = vmatprep.subr.bf16.mxu0 0
      %1888 = vmatpush1.bf16.msra.mxu0 0
      %1889 = vmatprep.subr.bf16.mxu0 0
      %1890 = vmatpush1.bf16.msra.mxu0 0
      %1891 = vmatprep.subr.bf16.mxu0 0
      %1892 = vmatpush1.bf16.msra.mxu0 0
      %1893 = vmatprep.subr.bf16.mxu0 0
      %1894 = vmatpush1.bf16.msra.mxu0 0
      %1895 = vmatprep.subr.bf16.mxu0 0
      %1896 = vmatpush1.bf16.msra.mxu0 0
      %1897 = vmatprep.mubr.bf16.mxu0 0
      %1898 = vmatmul.mubr.bf16.gmra.mrb[0].mxu0 %v1803
      %v1899 = vpop.f32.mrb[0].mxu0
      %v1900 = vadd.f32 0.0, %v1899
      %v1901 = vpop.f32.mrb[0].mxu0
      %v1902 = vpop.f32.mrb[0].mxu0
      %v1903 = vadd.f32 0.0, %v1902
      %v1904 = vpop.f32.mrb[0].mxu0
      %1905 = vmatprep.mubr.bf16.mxu0 0
      %1906 = vmatmul.mubr.bf16.gmra.mrb[0].mxu0 %v1806
      %v1907 = vpop.f32.mrb[0].mxu0
      %v1908 = vadd.f32 0.0, %v1907
      %v1909 = vpop.f32.mrb[0].mxu0
      %v1910 = vpop.f32.mrb[0].mxu0
      %v1911 = vadd.f32 0.0, %v1910
      %v1912 = vpop.f32.mrb[0].mxu0
      %1913 = vmatprep.mubr.bf16.mxu0 0
      %1914 = vmatmul.mubr.bf16.gmra.mrb[0].mxu0 %v1809
      %v1915 = vpop.f32.mrb[0].mxu0
      %v1916 = vadd.f32 0.0, %v1915
      %v1917 = vpop.f32.mrb[0].mxu0
      %v1918 = vpop.f32.mrb[0].mxu0
      %v1919 = vadd.f32 0.0, %v1918
      %v1920 = vpop.f32.mrb[0].mxu0
      %1921 = vmatprep.mubr.bf16.mxu0 0
      %1922 = vmatmul.mubr.bf16.gmra.mrb[0].mxu0 %v1812
      %v1923 = vpop.f32.mrb[0].mxu0
      %v1924 = vadd.f32 0.0, %v1923
      %v1925 = vpop.f32.mrb[0].mxu0
      %v1926 = vpop.f32.mrb[0].mxu0
      %v1927 = vadd.f32 0.0, %v1926
      %v1928 = vpop.f32.mrb[0].mxu0
      %1929 = vmatprep.mubr.bf16.mxu0 0
      %1930 = vmatmul.mubr.bf16.gmra.mrb[0].mxu0 %v1815
      %v1931 = vpop.f32.mrb[0].mxu0
      %v1932 = vadd.f32 0.0, %v1931
      %v1933 = vpop.f32.mrb[0].mxu0
      %v1934 = vpop.f32.mrb[0].mxu0
      %v1935 = vadd.f32 0.0, %v1934
      %v1936 = vpop.f32.mrb[0].mxu0
      %1937 = vmatprep.mubr.bf16.mxu0 0
      %1938 = vmatmul.mubr.bf16.gmra.mrb[0].mxu0 %v1818
      %v1939 = vpop.f32.mrb[0].mxu0
      %v1940 = vadd.f32 0.0, %v1939
      %v1941 = vpop.f32.mrb[0].mxu0
      %v1942 = vpop.f32.mrb[0].mxu0
      %v1943 = vadd.f32 0.0, %v1942
      %v1944 = vpop.f32.mrb[0].mxu0
      %1945 = vmatprep.mubr.bf16.mxu0 0
      %1946 = vmatmul.mubr.bf16.gmra.mrb[0].mxu0 %v1821
      %v1947 = vpop.f32.mrb[0].mxu0
      %v1948 = vadd.f32 0.0, %v1947
      %v1949 = vpop.f32.mrb[0].mxu0
      %v1950 = vpop.f32.mrb[0].mxu0
      %v1951 = vadd.f32 0.0, %v1950
      %v1952 = vpop.f32.mrb[0].mxu0
      %1953 = vmatprep.mubr.bf16.mxu0 0
      %1954 = vmatmul.mubr.bf16.gmra.mrb[0].mxu0 %v1824
      %v1955 = vpop.f32.mrb[0].mxu0
      %v1956 = vadd.f32 0.0, %v1955
      %v1957 = vpop.f32.mrb[0].mxu0
      %v1958 = vpop.f32.mrb[0].mxu0
      %v1959 = vadd.f32 0.0, %v1958
      %v1960 = vpop.f32.mrb[0].mxu0
      %1961 = vmatprep.mubr.bf16.mxu0 0
      %1962 = vmatmul.mubr.bf16.gmra.mrb[0].mxu0 %v1827
      %v1963 = vpop.f32.mrb[0].mxu0
      %v1964 = vadd.f32 0.0, %v1963
      %v1965 = vpop.f32.mrb[0].mxu0
      %v1966 = vpop.f32.mrb[0].mxu0
      %v1967 = vadd.f32 0.0, %v1966
      %v1968 = vpop.f32.mrb[0].mxu0
      %1969 = vmatprep.mubr.bf16.mxu0 0
      %1970 = vmatmul.mubr.bf16.gmra.mrb[0].mxu0 %v1830
      %v1971 = vpop.f32.mrb[0].mxu0
      %v1972 = vadd.f32 0.0, %v1971
      %v1973 = vpop.f32.mrb[0].mxu0
      %v1974 = vpop.f32.mrb[0].mxu0
      %v1975 = vadd.f32 0.0, %v1974
      %v1976 = vpop.f32.mrb[0].mxu0
      %1977 = vmatprep.mubr.bf16.mxu0 0
      %1978 = vmatmul.mubr.bf16.gmra.mrb[0].mxu0 %v1833
      %v1979 = vpop.f32.mrb[0].mxu0
      %v1980 = vadd.f32 0.0, %v1979
      %v1981 = vpop.f32.mrb[0].mxu0
      %v1982 = vpop.f32.mrb[0].mxu0
      %v1983 = vadd.f32 0.0, %v1982
      %v1984 = vpop.f32.mrb[0].mxu0
      %1985 = vmatprep.mubr.bf16.mxu0 0
      %1986 = vmatmul.mubr.bf16.gmra.mrb[0].mxu0 %v1836
      %v1987 = vpop.f32.mrb[0].mxu0
      %v1988 = vadd.f32 0.0, %v1987
      %v1989 = vpop.f32.mrb[0].mxu0
      %v1990 = vpop.f32.mrb[0].mxu0
      %v1991 = vadd.f32 0.0, %v1990
      %v1992 = vpop.f32.mrb[0].mxu0
      %1993 = vmatprep.mubr.bf16.mxu0 0
      %1994 = vmatmul.mubr.bf16.gmra.mrb[0].mxu0 %v1839
      %v1995 = vpop.f32.mrb[0].mxu0
      %v1996 = vadd.f32 0.0, %v1995
      %v1997 = vpop.f32.mrb[0].mxu0
      %v1998 = vpop.f32.mrb[0].mxu0
      %v1999 = vadd.f32 0.0, %v1998
      %v2000 = vpop.f32.mrb[0].mxu0
      %2001 = vmatprep.mubr.bf16.mxu0 0
      %2002 = vmatmul.mubr.bf16.gmra.mrb[0].mxu0 %v1842
      %v2003 = vpop.f32.mrb[0].mxu0
      %v2004 = vadd.f32 0.0, %v2003
      %v2005 = vpop.f32.mrb[0].mxu0
      %v2006 = vpop.f32.mrb[0].mxu0
      %v2007 = vadd.f32 0.0, %v2006
      %v2008 = vpop.f32.mrb[0].mxu0
      %2009 = vmatprep.mubr.bf16.mxu0 0
      %2010 = vmatmul.mubr.bf16.gmra.mrb[0].mxu0 %v1845
      %v2011 = vpop.f32.mrb[0].mxu0
      %v2012 = vadd.f32 0.0, %v2011
      %v2013 = vpop.f32.mrb[0].mxu0
      %v2014 = vpop.f32.mrb[0].mxu0
      %v2015 = vadd.f32 0.0, %v2014
      %v2016 = vpop.f32.mrb[0].mxu0
      %2017 = vmatprep.mubr.bf16.mxu0 0
      %2018 = vmatmul.mubr.bf16.gmra.mrb[0].mxu0 %v1848
      %v2019 = vpop.f32.mrb[0].mxu0
      %v2020 = vadd.f32 0.0, %v2019
      %v2021 = vpop.f32.mrb[0].mxu0
      %v2022 = vpop.f32.mrb[0].mxu0
      %v2023 = vadd.f32 0.0, %v2022
      %v2024 = vpop.f32.mrb[0].mxu0
      %2025 = vmatprep.mubr.bf16.mxu0 0
      %2026 = vmatmul.mubr.bf16.gmra.mrb[0].mxu0 %v1851
      %v2027 = vpop.f32.mrb[0].mxu0
      %v2028 = vadd.f32 0.0, %v2027
      %v2029 = vpop.f32.mrb[0].mxu0
      %v2030 = vpop.f32.mrb[0].mxu0
      %v2031 = vadd.f32 0.0, %v2030
      %v2032 = vpop.f32.mrb[0].mxu0
      %2033 = vmatprep.mubr.bf16.mxu0 0
      %2034 = vmatmul.mubr.bf16.gmra.mrb[0].mxu0 %v1854
      %v2035 = vpop.f32.mrb[0].mxu0
      %v2036 = vadd.f32 0.0, %v2035
      %v2037 = vpop.f32.mrb[0].mxu0
      %v2038 = vpop.f32.mrb[0].mxu0
      %v2039 = vadd.f32 0.0, %v2038
      %v2040 = vpop.f32.mrb[0].mxu0
      %2041 = vmatprep.mubr.bf16.mxu0 0
      %2042 = vmatmul.mubr.bf16.gmra.mrb[0].mxu0 %v1857
      %v2043 = vpop.f32.mrb[0].mxu0
      %v2044 = vadd.f32 0.0, %v2043
      %v2045 = vpop.f32.mrb[0].mxu0
      %v2046 = vpop.f32.mrb[0].mxu0
      %v2047 = vadd.f32 0.0, %v2046
      %v2048 = vpop.f32.mrb[0].mxu0
      %2049 = vmatprep.mubr.bf16.mxu0 0
      %2050 = vmatmul.mubr.bf16.gmra.mrb[0].mxu0 %v1860
      %v2051 = vpop.f32.mrb[0].mxu0
      %v2052 = vadd.f32 0.0, %v2051
      %v2053 = vpop.f32.mrb[0].mxu0
      %v2054 = vpop.f32.mrb[0].mxu0
      %v2055 = vadd.f32 0.0, %v2054
      %v2056 = vpop.f32.mrb[0].mxu0
      %2057 = vdwg.mxu0
      %v2058 = vadd.f32 %v1713, %v1900
      %v2059 = vadd.f32 %v1714, %v1903
      %v2060 = vadd.f32 %v1715, %v1908
      %v2061 = vadd.f32 %v1716, %v1911
      %v2062 = vadd.f32 %v1717, %v1916
      %v2063 = vadd.f32 %v1718, %v1919
      %v2064 = vadd.f32 %v1719, %v1924
      %v2065 = vadd.f32 %v1720, %v1927
      %v2066 = vadd.f32 %v1721, %v1932
      %v2067 = vadd.f32 %v1722, %v1935
      %v2068 = vadd.f32 %v1723, %v1940
      %v2069 = vadd.f32 %v1724, %v1943
      %v2070 = vadd.f32 %v1725, %v1948
      %v2071 = vadd.f32 %v1726, %v1951
      %v2072 = vadd.f32 %v1727, %v1956
      %v2073 = vadd.f32 %v1728, %v1959
      %v2074 = vadd.f32 %v1729, %v1964
      %v2075 = vadd.f32 %v1730, %v1967
      %v2076 = vadd.f32 %v1731, %v1972
      %v2077 = vadd.f32 %v1732, %v1975
      %v2078 = vadd.f32 %v1733, %v1980
      %v2079 = vadd.f32 %v1734, %v1983
      %v2080 = vadd.f32 %v1735, %v1988
      %v2081 = vadd.f32 %v1736, %v1991
      %v2082 = vadd.f32 %v1737, %v1996
      %v2083 = vadd.f32 %v1738, %v1999
      %v2084 = vadd.f32 %v1739, %v2004
      %v2085 = vadd.f32 %v1740, %v2007
      %v2086 = vadd.f32 %v1741, %v2012
      %v2087 = vadd.f32 %v1742, %v2015
      %v2088 = vadd.f32 %v1743, %v2020
      %v2089 = vadd.f32 %v1744, %v2023
      %v2090 = vadd.f32 %v1745, %v2028
      %v2091 = vadd.f32 %v1746, %v2031
      %v2092 = vadd.f32 %v1747, %v2036
      %v2093 = vadd.f32 %v1748, %v2039
      %v2094 = vadd.f32 %v1749, %v2044
      %v2095 = vadd.f32 %v1750, %v2047
      %v2096 = vadd.f32 %v1751, %v2052
      %v2097 = vadd.f32 %v1752, %v2055
      %v2098 = vld [vmem:[%s244 + $0x14] sm:$0xc]
      %v2099 = vld [vmem:[%s244 + $0xb0] sm:$0xf]
      %s2100 = scalar_lea.vmem %s248, 10
      %v2101 = vld [vmem:[%s2100] sm:$0x3]
      %v2104 = vunpack.c.l.b16 %v2098
      %v2105 = vunpack.c.l.b16 %v2099
      %v2106 = vpack.c.b16 %v1398, %v2104
      %v2107 = vpack.c.b16 %v2105, %v1435
      %v2108 = vrot.slane %v2106, 2
      %v2109 = vrot.slane %v1438, 2
      %v2110 = vsel %vm979, %v2108, %v2109
      %v2111 = vrot.slane %v1439, 2
      %v2112 = vsel %vm979, %v2109, %v2111
      %v2113 = vrot.slane %v1440, 2
      %v2114 = vsel %vm979, %v2111, %v2113
      %v2115 = vrot.slane %v1441, 2
      %v2116 = vsel %vm979, %v2113, %v2115
      %v2117 = vrot.slane %v1442, 2
      %v2118 = vsel %vm979, %v2115, %v2117
      %v2119 = vrot.slane %v1443, 2
      %v2120 = vsel %vm979, %v2117, %v2119
      %v2121 = vrot.slane %v1444, 2
      %v2122 = vsel %vm979, %v2119, %v2121
      %v2123 = vrot.slane %v1445, 2
      %v2124 = vsel %vm979, %v2121, %v2123
      %v2125 = vrot.slane %v1446, 2
      %v2126 = vsel %vm979, %v2123, %v2125
      %v2127 = vrot.slane %v1447, 2
      %v2128 = vsel %vm979, %v2125, %v2127
      %v2129 = vrot.slane %v1448, 2
      %v2130 = vsel %vm979, %v2127, %v2129
      %v2131 = vrot.slane %v1449, 2
      %v2132 = vsel %vm979, %v2129, %v2131
      %v2133 = vrot.slane %v1450, 2
      %v2134 = vsel %vm979, %v2131, %v2133
      %v2135 = vrot.slane %v1451, 2
      %v2136 = vsel %vm979, %v2133, %v2135
      %v2137 = vrot.slane %v1452, 2
      %v2138 = vsel %vm979, %v2135, %v2137
      %v2139 = vrot.slane %v1453, 2
      %v2140 = vsel %vm979, %v2137, %v2139
      %v2141 = vrot.slane %v1454, 2
      %v2142 = vsel %vm979, %v2139, %v2141
      %v2143 = vrot.slane %v1455, 2
      %v2144 = vsel %vm979, %v2141, %v2143
      %v2145 = vrot.slane %v2107, 2
      %v2146 = vsel %vm979, %v2143, %v2145
      %v2148 = vsel %vm449, %v2110, 0
      %v2151 = vsel %vm449, %v2112, 0
      %v2154 = vsel %vm449, %v2114, 0
      %v2157 = vsel %vm449, %v2116, 0
      %v2160 = vsel %vm449, %v2118, 0
      %v2163 = vsel %vm449, %v2120, 0
      %v2166 = vsel %vm449, %v2122, 0
      %v2169 = vsel %vm449, %v2124, 0
      %v2172 = vsel %vm449, %v2126, 0
      %v2175 = vsel %vm449, %v2128, 0
      %v2178 = vsel %vm449, %v2130, 0
      %v2181 = vsel %vm449, %v2132, 0
      %v2184 = vsel %vm449, %v2134, 0
      %v2187 = vsel %vm449, %v2136, 0
      %v2190 = vsel %vm449, %v2138, 0
      %v2193 = vsel %vm449, %v2140, 0
      %v2196 = vsel %vm449, %v2142, 0
      %v2199 = vsel %vm449, %v2144, 0
      %v2202 = vsel %vm449, %v2146, 0
      %v2205 = vsel %vm449, %v2145, 0
      %v2208 = vsel %vm510, %v2101, 0
      %2210 = vmatprep.subr.bf16.mxu0 0
      %2211 = vmatpush1.bf16.msra.mxu0 %v2208
      %2212 = vmatprep.subr.bf16.mxu0 0
      %2213 = vmatpush1.bf16.msra.mxu0 0
      %2214 = vmatprep.subr.bf16.mxu0 0
      %2215 = vmatpush1.bf16.msra.mxu0 0
      %2216 = vmatprep.subr.bf16.mxu0 0
      %2217 = vmatpush1.bf16.msra.mxu0 0
      %2218 = vmatprep.subr.bf16.mxu0 0
      %2219 = vmatpush1.bf16.msra.mxu0 0
      %2220 = vmatprep.subr.bf16.mxu0 0
      %2221 = vmatpush1.bf16.msra.mxu0 0
      %2222 = vmatprep.subr.bf16.mxu0 0
      %2223 = vmatpush1.bf16.msra.mxu0 0
      %2224 = vmatprep.subr.bf16.mxu0 0
      %2225 = vmatpush1.bf16.msra.mxu0 0
      %2226 = vmatprep.subr.bf16.mxu0 0
      %2227 = vmatpush1.bf16.msra.mxu0 0
      %2228 = vmatprep.subr.bf16.mxu0 0
      %2229 = vmatpush1.bf16.msra.mxu0 0
      %2230 = vmatprep.subr.bf16.mxu0 0
      %2231 = vmatpush1.bf16.msra.mxu0 0
      %2232 = vmatprep.subr.bf16.mxu0 0
      %2233 = vmatpush1.bf16.msra.mxu0 0
      %2234 = vmatprep.subr.bf16.mxu0 0
      %2235 = vmatpush1.bf16.msra.mxu0 0
      %2236 = vmatprep.subr.bf16.mxu0 0
      %2237 = vmatpush1.bf16.msra.mxu0 0
      %2238 = vmatprep.subr.bf16.mxu0 0
      %2239 = vmatpush1.bf16.msra.mxu0 0
      %2240 = vmatprep.subr.bf16.mxu0 0
      %2241 = vmatpush1.bf16.msra.mxu0 0
      %2242 = vmatprep.mubr.bf16.mxu0 0
      %2243 = vmatmul.mubr.bf16.gmra.mrb[0].mxu0 %v2148
      %v2244 = vpop.f32.mrb[0].mxu0
      %v2245 = vadd.f32 0.0, %v2244
      %v2246 = vpop.f32.mrb[0].mxu0
      %v2247 = vpop.f32.mrb[0].mxu0
      %v2248 = vadd.f32 0.0, %v2247
      %v2249 = vpop.f32.mrb[0].mxu0
      %2250 = vmatprep.mubr.bf16.mxu0 0
      %2251 = vmatmul.mubr.bf16.gmra.mrb[0].mxu0 %v2151
      %v2252 = vpop.f32.mrb[0].mxu0
      %v2253 = vadd.f32 0.0, %v2252
      %v2254 = vpop.f32.mrb[0].mxu0
      %v2255 = vpop.f32.mrb[0].mxu0
      %v2256 = vadd.f32 0.0, %v2255
      %v2257 = vpop.f32.mrb[0].mxu0
      %2258 = vmatprep.mubr.bf16.mxu0 0
      %2259 = vmatmul.mubr.bf16.gmra.mrb[0].mxu0 %v2154
      %v2260 = vpop.f32.mrb[0].mxu0
      %v2261 = vadd.f32 0.0, %v2260
      %v2262 = vpop.f32.mrb[0].mxu0
      %v2263 = vpop.f32.mrb[0].mxu0
      %v2264 = vadd.f32 0.0, %v2263
      %v2265 = vpop.f32.mrb[0].mxu0
      %2266 = vmatprep.mubr.bf16.mxu0 0
      %2267 = vmatmul.mubr.bf16.gmra.mrb[0].mxu0 %v2157
      %v2268 = vpop.f32.mrb[0].mxu0
      %v2269 = vadd.f32 0.0, %v2268
      %v2270 = vpop.f32.mrb[0].mxu0
      %v2271 = vpop.f32.mrb[0].mxu0
      %v2272 = vadd.f32 0.0, %v2271
      %v2273 = vpop.f32.mrb[0].mxu0
      %2274 = vmatprep.mubr.bf16.mxu0 0
      %2275 = vmatmul.mubr.bf16.gmra.mrb[0].mxu0 %v2160
      %v2276 = vpop.f32.mrb[0].mxu0
      %v2277 = vadd.f32 0.0, %v2276
      %v2278 = vpop.f32.mrb[0].mxu0
      %v2279 = vpop.f32.mrb[0].mxu0
      %v2280 = vadd.f32 0.0, %v2279
      %v2281 = vpop.f32.mrb[0].mxu0
      %2282 = vmatprep.mubr.bf16.mxu0 0
      %2283 = vmatmul.mubr.bf16.gmra.mrb[0].mxu0 %v2163
      %v2284 = vpop.f32.mrb[0].mxu0
      %v2285 = vadd.f32 0.0, %v2284
      %v2286 = vpop.f32.mrb[0].mxu0
      %v2287 = vpop.f32.mrb[0].mxu0
      %v2288 = vadd.f32 0.0, %v2287
      %v2289 = vpop.f32.mrb[0].mxu0
      %2290 = vmatprep.mubr.bf16.mxu0 0
      %2291 = vmatmul.mubr.bf16.gmra.mrb[0].mxu0 %v2166
      %v2292 = vpop.f32.mrb[0].mxu0
      %v2293 = vadd.f32 0.0, %v2292
      %v2294 = vpop.f32.mrb[0].mxu0
      %v2295 = vpop.f32.mrb[0].mxu0
      %v2296 = vadd.f32 0.0, %v2295
      %v2297 = vpop.f32.mrb[0].mxu0
      %2298 = vmatprep.mubr.bf16.mxu0 0
      %2299 = vmatmul.mubr.bf16.gmra.mrb[0].mxu0 %v2169
      %v2300 = vpop.f32.mrb[0].mxu0
      %v2301 = vadd.f32 0.0, %v2300
      %v2302 = vpop.f32.mrb[0].mxu0
      %v2303 = vpop.f32.mrb[0].mxu0
      %v2304 = vadd.f32 0.0, %v2303
      %v2305 = vpop.f32.mrb[0].mxu0
      %2306 = vmatprep.mubr.bf16.mxu0 0
      %2307 = vmatmul.mubr.bf16.gmra.mrb[0].mxu0 %v2172
      %v2308 = vpop.f32.mrb[0].mxu0
      %v2309 = vadd.f32 0.0, %v2308
      %v2310 = vpop.f32.mrb[0].mxu0
      %v2311 = vpop.f32.mrb[0].mxu0
      %v2312 = vadd.f32 0.0, %v2311
      %v2313 = vpop.f32.mrb[0].mxu0
      %2314 = vmatprep.mubr.bf16.mxu0 0
      %2315 = vmatmul.mubr.bf16.gmra.mrb[0].mxu0 %v2175
      %v2316 = vpop.f32.mrb[0].mxu0
      %v2317 = vadd.f32 0.0, %v2316
      %v2318 = vpop.f32.mrb[0].mxu0
      %v2319 = vpop.f32.mrb[0].mxu0
      %v2320 = vadd.f32 0.0, %v2319
      %v2321 = vpop.f32.mrb[0].mxu0
      %2322 = vmatprep.mubr.bf16.mxu0 0
      %2323 = vmatmul.mubr.bf16.gmra.mrb[0].mxu0 %v2178
      %v2324 = vpop.f32.mrb[0].mxu0
      %v2325 = vadd.f32 0.0, %v2324
      %v2326 = vpop.f32.mrb[0].mxu0
      %v2327 = vpop.f32.mrb[0].mxu0
      %v2328 = vadd.f32 0.0, %v2327
      %v2329 = vpop.f32.mrb[0].mxu0
      %2330 = vmatprep.mubr.bf16.mxu0 0
      %2331 = vmatmul.mubr.bf16.gmra.mrb[0].mxu0 %v2181
      %v2332 = vpop.f32.mrb[0].mxu0
      %v2333 = vadd.f32 0.0, %v2332
      %v2334 = vpop.f32.mrb[0].mxu0
      %v2335 = vpop.f32.mrb[0].mxu0
      %v2336 = vadd.f32 0.0, %v2335
      %v2337 = vpop.f32.mrb[0].mxu0
      %2338 = vmatprep.mubr.bf16.mxu0 0
      %2339 = vmatmul.mubr.bf16.gmra.mrb[0].mxu0 %v2184
      %v2340 = vpop.f32.mrb[0].mxu0
      %v2341 = vadd.f32 0.0, %v2340
      %v2342 = vpop.f32.mrb[0].mxu0
      %v2343 = vpop.f32.mrb[0].mxu0
      %v2344 = vadd.f32 0.0, %v2343
      %v2345 = vpop.f32.mrb[0].mxu0
      %2346 = vmatprep.mubr.bf16.mxu0 0
      %2347 = vmatmul.mubr.bf16.gmra.mrb[0].mxu0 %v2187
      %v2348 = vpop.f32.mrb[0].mxu0
      %v2349 = vadd.f32 0.0, %v2348
      %v2350 = vpop.f32.mrb[0].mxu0
      %v2351 = vpop.f32.mrb[0].mxu0
      %v2352 = vadd.f32 0.0, %v2351
      %v2353 = vpop.f32.mrb[0].mxu0
      %2354 = vmatprep.mubr.bf16.mxu0 0
      %2355 = vmatmul.mubr.bf16.gmra.mrb[0].mxu0 %v2190
      %v2356 = vpop.f32.mrb[0].mxu0
      %v2357 = vadd.f32 0.0, %v2356
      %v2358 = vpop.f32.mrb[0].mxu0
      %v2359 = vpop.f32.mrb[0].mxu0
      %v2360 = vadd.f32 0.0, %v2359
      %v2361 = vpop.f32.mrb[0].mxu0
      %2362 = vmatprep.mubr.bf16.mxu0 0
      %2363 = vmatmul.mubr.bf16.gmra.mrb[0].mxu0 %v2193
      %v2364 = vpop.f32.mrb[0].mxu0
      %v2365 = vadd.f32 0.0, %v2364
      %v2366 = vpop.f32.mrb[0].mxu0
      %v2367 = vpop.f32.mrb[0].mxu0
      %v2368 = vadd.f32 0.0, %v2367
      %v2369 = vpop.f32.mrb[0].mxu0
      %2370 = vmatprep.mubr.bf16.mxu0 0
      %2371 = vmatmul.mubr.bf16.gmra.mrb[0].mxu0 %v2196
      %v2372 = vpop.f32.mrb[0].mxu0
      %v2373 = vadd.f32 0.0, %v2372
      %v2374 = vpop.f32.mrb[0].mxu0
      %v2375 = vpop.f32.mrb[0].mxu0
      %v2376 = vadd.f32 0.0, %v2375
      %v2377 = vpop.f32.mrb[0].mxu0
      %2378 = vmatprep.mubr.bf16.mxu0 0
      %2379 = vmatmul.mubr.bf16.gmra.mrb[0].mxu0 %v2199
      %v2380 = vpop.f32.mrb[0].mxu0
      %v2381 = vadd.f32 0.0, %v2380
      %v2382 = vpop.f32.mrb[0].mxu0
      %v2383 = vpop.f32.mrb[0].mxu0
      %v2384 = vadd.f32 0.0, %v2383
      %v2385 = vpop.f32.mrb[0].mxu0
      %2386 = vmatprep.mubr.bf16.mxu0 0
      %2387 = vmatmul.mubr.bf16.gmra.mrb[0].mxu0 %v2202
      %v2388 = vpop.f32.mrb[0].mxu0
      %v2389 = vadd.f32 0.0, %v2388
      %v2390 = vpop.f32.mrb[0].mxu0
      %v2391 = vpop.f32.mrb[0].mxu0
      %v2392 = vadd.f32 0.0, %v2391
      %v2393 = vpop.f32.mrb[0].mxu0
      %2394 = vmatprep.mubr.bf16.mxu0 0
      %2395 = vmatmul.mubr.bf16.gmra.mrb[0].mxu0 %v2205
      %v2396 = vpop.f32.mrb[0].mxu0
      %v2397 = vadd.f32 0.0, %v2396
      %v2398 = vpop.f32.mrb[0].mxu0
      %v2399 = vpop.f32.mrb[0].mxu0
      %v2400 = vadd.f32 0.0, %v2399
      %v2401 = vpop.f32.mrb[0].mxu0
      %2402 = vdwg.mxu0
      %v2403 = vadd.f32 %v2058, %v2245
      %v2404 = vadd.f32 %v2059, %v2248
      %v2405 = vadd.f32 %v2060, %v2253
      %v2406 = vadd.f32 %v2061, %v2256
      %v2407 = vadd.f32 %v2062, %v2261
      %v2408 = vadd.f32 %v2063, %v2264
      %v2409 = vadd.f32 %v2064, %v2269
      %v2410 = vadd.f32 %v2065, %v2272
      %v2411 = vadd.f32 %v2066, %v2277
      %v2412 = vadd.f32 %v2067, %v2280
      %v2413 = vadd.f32 %v2068, %v2285
      %v2414 = vadd.f32 %v2069, %v2288
      %v2415 = vadd.f32 %v2070, %v2293
      %v2416 = vadd.f32 %v2071, %v2296
      %v2417 = vadd.f32 %v2072, %v2301
      %v2418 = vadd.f32 %v2073, %v2304
      %v2419 = vadd.f32 %v2074, %v2309
      %v2420 = vadd.f32 %v2075, %v2312
      %v2421 = vadd.f32 %v2076, %v2317
      %v2422 = vadd.f32 %v2077, %v2320
      %v2423 = vadd.f32 %v2078, %v2325
      %v2424 = vadd.f32 %v2079, %v2328
      %v2425 = vadd.f32 %v2080, %v2333
      %v2426 = vadd.f32 %v2081, %v2336
      %v2427 = vadd.f32 %v2082, %v2341
      %v2428 = vadd.f32 %v2083, %v2344
      %v2429 = vadd.f32 %v2084, %v2349
      %v2430 = vadd.f32 %v2085, %v2352
      %v2431 = vadd.f32 %v2086, %v2357
      %v2432 = vadd.f32 %v2087, %v2360
      %v2433 = vadd.f32 %v2088, %v2365
      %v2434 = vadd.f32 %v2089, %v2368
      %v2435 = vadd.f32 %v2090, %v2373
      %v2436 = vadd.f32 %v2091, %v2376
      %v2437 = vadd.f32 %v2092, %v2381
      %v2438 = vadd.f32 %v2093, %v2384
      %v2439 = vadd.f32 %v2094, %v2389
      %v2440 = vadd.f32 %v2095, %v2392
      %v2441 = vadd.f32 %v2096, %v2397
      %v2442 = vadd.f32 %v2097, %v2400
      %v2443 = vld [vmem:[%s244 + $0x28] sm:$0xf]
      %v2444 = vld [vmem:[%s244 + $0x2c] sm:$0xf]
      %v2445 = vld [vmem:[%s244 + $0x30] sm:$0xf]
      %v2446 = vld [vmem:[%s244 + $0x34] sm:$0xf]
      %v2447 = vld [vmem:[%s244 + $0x38] sm:$0xf]
      %v2448 = vld [vmem:[%s244 + $0x3c] sm:$0xf]
      %v2449 = vld [vmem:[%s244 + $0x40] sm:$0xf]
      %v2450 = vld [vmem:[%s244 + $0x44] sm:$0xf]
      %v2451 = vld [vmem:[%s244 + $0x48] sm:$0xf]
      %v2452 = vld [vmem:[%s244 + $0x4c] sm:$0xf]
      %v2453 = vld [vmem:[%s244 + $0x50] sm:$0xf]
      %v2454 = vld [vmem:[%s244 + $0x54] sm:$0xf]
      %v2455 = vld [vmem:[%s244 + $0x58] sm:$0xf]
      %v2456 = vld [vmem:[%s244 + $0x5c] sm:$0xf]
      %v2457 = vld [vmem:[%s244 + $0x60] sm:$0xf]
      %v2458 = vld [vmem:[%s244 + $0x64] sm:$0xf]
      %v2459 = vld [vmem:[%s244 + $0x68] sm:$0xf]
      %v2460 = vld [vmem:[%s244 + $0x6c] sm:$0xf]
      %v2461 = vld [vmem:[%s244 + $0x70] sm:$0xf]
      %v2462 = vld [vmem:[%s244 + $0x74] sm:$0xf]
      %v2463 = vld [vmem:[%s244 + $0x78] sm:$0xf]
      %v2464 = vld [vmem:[%s244 + $0x7c] sm:$0xf]
      %v2465 = vld [vmem:[%s244 + $0x80] sm:$0xf]
      %v2466 = vld [vmem:[%s244 + $0x84] sm:$0xf]
      %v2467 = vld [vmem:[%s244 + $0x88] sm:$0xf]
      %v2468 = vld [vmem:[%s244 + $0x8c] sm:$0xf]
      %v2469 = vld [vmem:[%s244 + $0x90] sm:$0xf]
      %v2470 = vld [vmem:[%s244 + $0x94] sm:$0xf]
      %v2471 = vld [vmem:[%s244 + $0x98] sm:$0xf]
      %v2472 = vld [vmem:[%s244 + $0x9c] sm:$0xf]
      %v2473 = vld [vmem:[%s244 + $0xa0] sm:$0xf]
      %v2474 = vld [vmem:[%s244 + $0xa4] sm:$0xf]
      %v2475 = vld [vmem:[%s244 + $0xa8] sm:$0xf]
      %v2476 = vld [vmem:[%s244 + $0xac] sm:$0xf]
      %v2477 = vld [vmem:[%s244 + $0xb0] sm:$0xf]
      %v2478 = vld [vmem:[%s244 + $0xb4] sm:$0xf]
      %v2479 = vld [vmem:[%s244 + $0xb8] sm:$0xf]
      %v2480 = vld [vmem:[%s244 + $0xbc] sm:$0xf]
      %v2481 = vld [vmem:[%s244 + $0xc0] sm:$0xf]
      %v2482 = vld [vmem:[%s244 + $0xc4] sm:$0x3]
      %s2483 = scalar_lea.vmem %s248, 12
      %v2484 = vld [vmem:[%s2483] sm:$0x3]
      %v2525 = vunpack.c.l.b16 %v2443
      %v2526 = vunpack.c.l.b16 %v2444
      %v2527 = vunpack.c.l.b16 %v2445
      %v2528 = vunpack.c.l.b16 %v2446
      %v2529 = vunpack.c.l.b16 %v2447
      %v2530 = vunpack.c.l.b16 %v2448
      %v2531 = vunpack.c.l.b16 %v2449
      %v2532 = vunpack.c.l.b16 %v2450
      %v2533 = vunpack.c.l.b16 %v2451
      %v2534 = vunpack.c.l.b16 %v2452
      %v2535 = vunpack.c.l.b16 %v2453
      %v2536 = vunpack.c.l.b16 %v2454
      %v2537 = vunpack.c.l.b16 %v2455
      %v2538 = vunpack.c.l.b16 %v2456
      %v2539 = vunpack.c.l.b16 %v2457
      %v2540 = vunpack.c.l.b16 %v2458
      %v2541 = vunpack.c.l.b16 %v2459
      %v2542 = vunpack.c.l.b16 %v2460
      %v2543 = vunpack.c.l.b16 %v2461
      %v2544 = vunpack.c.l.b16 %v2462
      %v2545 = vunpack.c.l.b16 %v2463
      %v2546 = vunpack.c.l.b16 %v2464
      %v2547 = vunpack.c.l.b16 %v2465
      %v2548 = vunpack.c.l.b16 %v2466
      %v2549 = vunpack.c.l.b16 %v2467
      %v2550 = vunpack.c.l.b16 %v2468
      %v2551 = vunpack.c.l.b16 %v2469
      %v2552 = vunpack.c.l.b16 %v2470
      %v2553 = vunpack.c.l.b16 %v2471
      %v2554 = vunpack.c.l.b16 %v2472
      %v2555 = vunpack.c.l.b16 %v2473
      %v2556 = vunpack.c.l.b16 %v2474
      %v2557 = vunpack.c.l.b16 %v2475
      %v2558 = vunpack.c.l.b16 %v2476
      %v2559 = vunpack.c.l.b16 %v2477
      %v2560 = vunpack.c.l.b16 %v2478
      %v2561 = vunpack.c.l.b16 %v2479
      %v2562 = vunpack.c.l.b16 %v2480
      %v2563 = vunpack.c.l.b16 %v2481
      %v2564 = vunpack.c.l.b16 %v2482
      %v2565 = vpack.c.b16 %v2526, %v2525
      %v2566 = vpack.c.b16 %v2528, %v2527
      %v2567 = vpack.c.b16 %v2530, %v2529
      %v2568 = vpack.c.b16 %v2532, %v2531
      %v2569 = vpack.c.b16 %v2534, %v2533
      %v2570 = vpack.c.b16 %v2536, %v2535
      %v2571 = vpack.c.b16 %v2538, %v2537
      %v2572 = vpack.c.b16 %v2540, %v2539
      %v2573 = vpack.c.b16 %v2542, %v2541
      %v2574 = vpack.c.b16 %v2544, %v2543
      %v2575 = vpack.c.b16 %v2546, %v2545
      %v2576 = vpack.c.b16 %v2548, %v2547
      %v2577 = vpack.c.b16 %v2550, %v2549
      %v2578 = vpack.c.b16 %v2552, %v2551
      %v2579 = vpack.c.b16 %v2554, %v2553
      %v2580 = vpack.c.b16 %v2556, %v2555
      %v2581 = vpack.c.b16 %v2558, %v2557
      %v2582 = vpack.c.b16 %v2560, %v2559
      %v2583 = vpack.c.b16 %v2562, %v2561
      %v2584 = vpack.c.b16 %v2564, %v2563
      %v2586 = vsel %vm449, %v2565, 0
      %v2589 = vsel %vm449, %v2566, 0
      %v2592 = vsel %vm449, %v2567, 0
      %v2595 = vsel %vm449, %v2568, 0
      %v2598 = vsel %vm449, %v2569, 0
      %v2601 = vsel %vm449, %v2570, 0
      %v2604 = vsel %vm449, %v2571, 0
      %v2607 = vsel %vm449, %v2572, 0
      %v2610 = vsel %vm449, %v2573, 0
      %v2613 = vsel %vm449, %v2574, 0
      %v2616 = vsel %vm449, %v2575, 0
      %v2619 = vsel %vm449, %v2576, 0
      %v2622 = vsel %vm449, %v2577, 0
      %v2625 = vsel %vm449, %v2578, 0
      %v2628 = vsel %vm449, %v2579, 0
      %v2631 = vsel %vm449, %v2580, 0
      %v2634 = vsel %vm449, %v2581, 0
      %v2637 = vsel %vm449, %v2582, 0
      %v2640 = vsel %vm449, %v2583, 0
      %v2643 = vsel %vm449, %v2584, 0
      %v2646 = vsel %vm510, %v2484, 0
      %2648 = vmatprep.subr.bf16.mxu0 0
      %2649 = vmatpush1.bf16.msra.mxu0 %v2646
      %2650 = vmatprep.subr.bf16.mxu0 0
      %2651 = vmatpush1.bf16.msra.mxu0 0
      %2652 = vmatprep.subr.bf16.mxu0 0
      %2653 = vmatpush1.bf16.msra.mxu0 0
      %2654 = vmatprep.subr.bf16.mxu0 0
      %2655 = vmatpush1.bf16.msra.mxu0 0
      %2656 = vmatprep.subr.bf16.mxu0 0
      %2657 = vmatpush1.bf16.msra.mxu0 0
      %2658 = vmatprep.subr.bf16.mxu0 0
      %2659 = vmatpush1.bf16.msra.mxu0 0
      %2660 = vmatprep.subr.bf16.mxu0 0
      %2661 = vmatpush1.bf16.msra.mxu0 0
      %2662 = vmatprep.subr.bf16.mxu0 0
      %2663 = vmatpush1.bf16.msra.mxu0 0
      %2664 = vmatprep.subr.bf16.mxu0 0
      %2665 = vmatpush1.bf16.msra.mxu0 0
      %2666 = vmatprep.subr.bf16.mxu0 0
      %2667 = vmatpush1.bf16.msra.mxu0 0
      %2668 = vmatprep.subr.bf16.mxu0 0
      %2669 = vmatpush1.bf16.msra.mxu0 0
      %2670 = vmatprep.subr.bf16.mxu0 0
      %2671 = vmatpush1.bf16.msra.mxu0 0
      %2672 = vmatprep.subr.bf16.mxu0 0
      %2673 = vmatpush1.bf16.msra.mxu0 0
      %2674 = vmatprep.subr.bf16.mxu0 0
      %2675 = vmatpush1.bf16.msra.mxu0 0
      %2676 = vmatprep.subr.bf16.mxu0 0
      %2677 = vmatpush1.bf16.msra.mxu0 0
      %2678 = vmatprep.subr.bf16.mxu0 0
      %2679 = vmatpush1.bf16.msra.mxu0 0
      %2680 = vmatprep.mubr.bf16.mxu0 0
      %2681 = vmatmul.mubr.bf16.gmra.mrb[0].mxu0 %v2586
      %v2682 = vpop.f32.mrb[0].mxu0
      %v2683 = vadd.f32 0.0, %v2682
      %v2684 = vpop.f32.mrb[0].mxu0
      %v2685 = vpop.f32.mrb[0].mxu0
      %v2686 = vadd.f32 0.0, %v2685
      %v2687 = vpop.f32.mrb[0].mxu0
      %2688 = vmatprep.mubr.bf16.mxu0 0
      %2689 = vmatmul.mubr.bf16.gmra.mrb[0].mxu0 %v2589
      %v2690 = vpop.f32.mrb[0].mxu0
      %v2691 = vadd.f32 0.0, %v2690
      %v2692 = vpop.f32.mrb[0].mxu0
      %v2693 = vpop.f32.mrb[0].mxu0
      %v2694 = vadd.f32 0.0, %v2693
      %v2695 = vpop.f32.mrb[0].mxu0
      %2696 = vmatprep.mubr.bf16.mxu0 0
      %2697 = vmatmul.mubr.bf16.gmra.mrb[0].mxu0 %v2592
      %v2698 = vpop.f32.mrb[0].mxu0
      %v2699 = vadd.f32 0.0, %v2698
      %v2700 = vpop.f32.mrb[0].mxu0
      %v2701 = vpop.f32.mrb[0].mxu0
      %v2702 = vadd.f32 0.0, %v2701
      %v2703 = vpop.f32.mrb[0].mxu0
      %2704 = vmatprep.mubr.bf16.mxu0 0
      %2705 = vmatmul.mubr.bf16.gmra.mrb[0].mxu0 %v2595
      %v2706 = vpop.f32.mrb[0].mxu0
      %v2707 = vadd.f32 0.0, %v2706
      %v2708 = vpop.f32.mrb[0].mxu0
      %v2709 = vpop.f32.mrb[0].mxu0
      %v2710 = vadd.f32 0.0, %v2709
      %v2711 = vpop.f32.mrb[0].mxu0
      %2712 = vmatprep.mubr.bf16.mxu0 0
      %2713 = vmatmul.mubr.bf16.gmra.mrb[0].mxu0 %v2598
      %v2714 = vpop.f32.mrb[0].mxu0
      %v2715 = vadd.f32 0.0, %v2714
      %v2716 = vpop.f32.mrb[0].mxu0
      %v2717 = vpop.f32.mrb[0].mxu0
      %v2718 = vadd.f32 0.0, %v2717
      %v2719 = vpop.f32.mrb[0].mxu0
      %2720 = vmatprep.mubr.bf16.mxu0 0
      %2721 = vmatmul.mubr.bf16.gmra.mrb[0].mxu0 %v2601
      %v2722 = vpop.f32.mrb[0].mxu0
      %v2723 = vadd.f32 0.0, %v2722
      %v2724 = vpop.f32.mrb[0].mxu0
      %v2725 = vpop.f32.mrb[0].mxu0
      %v2726 = vadd.f32 0.0, %v2725
      %v2727 = vpop.f32.mrb[0].mxu0
      %2728 = vmatprep.mubr.bf16.mxu0 0
      %2729 = vmatmul.mubr.bf16.gmra.mrb[0].mxu0 %v2604
      %v2730 = vpop.f32.mrb[0].mxu0
      %v2731 = vadd.f32 0.0, %v2730
      %v2732 = vpop.f32.mrb[0].mxu0
      %v2733 = vpop.f32.mrb[0].mxu0
      %v2734 = vadd.f32 0.0, %v2733
      %v2735 = vpop.f32.mrb[0].mxu0
      %2736 = vmatprep.mubr.bf16.mxu0 0
      %2737 = vmatmul.mubr.bf16.gmra.mrb[0].mxu0 %v2607
      %v2738 = vpop.f32.mrb[0].mxu0
      %v2739 = vadd.f32 0.0, %v2738
      %v2740 = vpop.f32.mrb[0].mxu0
      %v2741 = vpop.f32.mrb[0].mxu0
      %v2742 = vadd.f32 0.0, %v2741
      %v2743 = vpop.f32.mrb[0].mxu0
      %2744 = vmatprep.mubr.bf16.mxu0 0
      %2745 = vmatmul.mubr.bf16.gmra.mrb[0].mxu0 %v2610
      %v2746 = vpop.f32.mrb[0].mxu0
      %v2747 = vadd.f32 0.0, %v2746
      %v2748 = vpop.f32.mrb[0].mxu0
      %v2749 = vpop.f32.mrb[0].mxu0
      %v2750 = vadd.f32 0.0, %v2749
      %v2751 = vpop.f32.mrb[0].mxu0
      %2752 = vmatprep.mubr.bf16.mxu0 0
      %2753 = vmatmul.mubr.bf16.gmra.mrb[0].mxu0 %v2613
      %v2754 = vpop.f32.mrb[0].mxu0
      %v2755 = vadd.f32 0.0, %v2754
      %v2756 = vpop.f32.mrb[0].mxu0
      %v2757 = vpop.f32.mrb[0].mxu0
      %v2758 = vadd.f32 0.0, %v2757
      %v2759 = vpop.f32.mrb[0].mxu0
      %2760 = vmatprep.mubr.bf16.mxu0 0
      %2761 = vmatmul.mubr.bf16.gmra.mrb[0].mxu0 %v2616
      %v2762 = vpop.f32.mrb[0].mxu0
      %v2763 = vadd.f32 0.0, %v2762
      %v2764 = vpop.f32.mrb[0].mxu0
      %v2765 = vpop.f32.mrb[0].mxu0
      %v2766 = vadd.f32 0.0, %v2765
      %v2767 = vpop.f32.mrb[0].mxu0
      %2768 = vmatprep.mubr.bf16.mxu0 0
      %2769 = vmatmul.mubr.bf16.gmra.mrb[0].mxu0 %v2619
      %v2770 = vpop.f32.mrb[0].mxu0
      %v2771 = vadd.f32 0.0, %v2770
      %v2772 = vpop.f32.mrb[0].mxu0
      %v2773 = vpop.f32.mrb[0].mxu0
      %v2774 = vadd.f32 0.0, %v2773
      %v2775 = vpop.f32.mrb[0].mxu0
      %2776 = vmatprep.mubr.bf16.mxu0 0
      %2777 = vmatmul.mubr.bf16.gmra.mrb[0].mxu0 %v2622
      %v2778 = vpop.f32.mrb[0].mxu0
      %v2779 = vadd.f32 0.0, %v2778
      %v2780 = vpop.f32.mrb[0].mxu0
      %v2781 = vpop.f32.mrb[0].mxu0
      %v2782 = vadd.f32 0.0, %v2781
      %v2783 = vpop.f32.mrb[0].mxu0
      %2784 = vmatprep.mubr.bf16.mxu0 0
      %2785 = vmatmul.mubr.bf16.gmra.mrb[0].mxu0 %v2625
      %v2786 = vpop.f32.mrb[0].mxu0
      %v2787 = vadd.f32 0.0, %v2786
      %v2788 = vpop.f32.mrb[0].mxu0
      %v2789 = vpop.f32.mrb[0].mxu0
      %v2790 = vadd.f32 0.0, %v2789
      %v2791 = vpop.f32.mrb[0].mxu0
      %2792 = vmatprep.mubr.bf16.mxu0 0
      %2793 = vmatmul.mubr.bf16.gmra.mrb[0].mxu0 %v2628
      %v2794 = vpop.f32.mrb[0].mxu0
      %v2795 = vadd.f32 0.0, %v2794
      %v2796 = vpop.f32.mrb[0].mxu0
      %v2797 = vpop.f32.mrb[0].mxu0
      %v2798 = vadd.f32 0.0, %v2797
      %v2799 = vpop.f32.mrb[0].mxu0
      %2800 = vmatprep.mubr.bf16.mxu0 0
      %2801 = vmatmul.mubr.bf16.gmra.mrb[0].mxu0 %v2631
      %v2802 = vpop.f32.mrb[0].mxu0
      %v2803 = vadd.f32 0.0, %v2802
      %v2804 = vpop.f32.mrb[0].mxu0
      %v2805 = vpop.f32.mrb[0].mxu0
      %v2806 = vadd.f32 0.0, %v2805
      %v2807 = vpop.f32.mrb[0].mxu0
      %2808 = vmatprep.mubr.bf16.mxu0 0
      %2809 = vmatmul.mubr.bf16.gmra.mrb[0].mxu0 %v2634
      %v2810 = vpop.f32.mrb[0].mxu0
      %v2811 = vadd.f32 0.0, %v2810
      %v2812 = vpop.f32.mrb[0].mxu0
      %v2813 = vpop.f32.mrb[0].mxu0
      %v2814 = vadd.f32 0.0, %v2813
      %v2815 = vpop.f32.mrb[0].mxu0
      %2816 = vmatprep.mubr.bf16.mxu0 0
      %2817 = vmatmul.mubr.bf16.gmra.mrb[0].mxu0 %v2637
      %v2818 = vpop.f32.mrb[0].mxu0
      %v2819 = vadd.f32 0.0, %v2818
      %v2820 = vpop.f32.mrb[0].mxu0
      %v2821 = vpop.f32.mrb[0].mxu0
      %v2822 = vadd.f32 0.0, %v2821
      %v2823 = vpop.f32.mrb[0].mxu0
      %2824 = vmatprep.mubr.bf16.mxu0 0
      %2825 = vmatmul.mubr.bf16.gmra.mrb[0].mxu0 %v2640
      %v2826 = vpop.f32.mrb[0].mxu0
      %v2827 = vadd.f32 0.0, %v2826
      %v2828 = vpop.f32.mrb[0].mxu0
      %v2829 = vpop.f32.mrb[0].mxu0
      %v2830 = vadd.f32 0.0, %v2829
      %v2831 = vpop.f32.mrb[0].mxu0
      %2832 = vmatprep.mubr.bf16.mxu0 0
      %2833 = vmatmul.mubr.bf16.gmra.mrb[0].mxu0 %v2643
      %v2834 = vpop.f32.mrb[0].mxu0
      %v2835 = vadd.f32 0.0, %v2834
      %v2836 = vpop.f32.mrb[0].mxu0
      %v2837 = vpop.f32.mrb[0].mxu0
      %v2838 = vadd.f32 0.0, %v2837
      %v2839 = vpop.f32.mrb[0].mxu0
      %2840 = vdwg.mxu0
      %v2841 = vadd.f32 %v2403, %v2683
      %v2842 = vadd.f32 %v2404, %v2686
      %v2843 = vadd.f32 %v2405, %v2691
      %v2844 = vadd.f32 %v2406, %v2694
      %v2845 = vadd.f32 %v2407, %v2699
      %v2846 = vadd.f32 %v2408, %v2702
      %v2847 = vadd.f32 %v2409, %v2707
      %v2848 = vadd.f32 %v2410, %v2710
      %v2849 = vadd.f32 %v2411, %v2715
      %v2850 = vadd.f32 %v2412, %v2718
      %v2851 = vadd.f32 %v2413, %v2723
      %v2852 = vadd.f32 %v2414, %v2726
      %v2853 = vadd.f32 %v2415, %v2731
      %v2854 = vadd.f32 %v2416, %v2734
      %v2855 = vadd.f32 %v2417, %v2739
      %v2856 = vadd.f32 %v2418, %v2742
      %v2857 = vadd.f32 %v2419, %v2747
      %v2858 = vadd.f32 %v2420, %v2750
      %v2859 = vadd.f32 %v2421, %v2755
      %v2860 = vadd.f32 %v2422, %v2758
      %v2861 = vadd.f32 %v2423, %v2763
      %v2862 = vadd.f32 %v2424, %v2766
      %v2863 = vadd.f32 %v2425, %v2771
      %v2864 = vadd.f32 %v2426, %v2774
      %v2865 = vadd.f32 %v2427, %v2779
      %v2866 = vadd.f32 %v2428, %v2782
      %v2867 = vadd.f32 %v2429, %v2787
      %v2868 = vadd.f32 %v2430, %v2790
      %v2869 = vadd.f32 %v2431, %v2795
      %v2870 = vadd.f32 %v2432, %v2798
      %v2871 = vadd.f32 %v2433, %v2803
      %v2872 = vadd.f32 %v2434, %v2806
      %v2873 = vadd.f32 %v2435, %v2811
      %v2874 = vadd.f32 %v2436, %v2814
      %v2875 = vadd.f32 %v2437, %v2819
      %v2876 = vadd.f32 %v2438, %v2822
      %v2877 = vadd.f32 %v2439, %v2827
      %v2878 = vadd.f32 %v2440, %v2830
      %v2879 = vadd.f32 %v2441, %v2835
      %v2880 = vadd.f32 %v2442, %v2838
      %v2881 = vld [vmem:[%s244 + $0x28] sm:$0xe]
      %v2882 = vld [vmem:[%s244 + $0xc4] sm:$0x7]
      %s2883 = scalar_lea.vmem %s248, 14
      %v2884 = vld [vmem:[%s2883] sm:$0x3]
      %v2887 = vunpack.c.l.b16 %v2881
      %v2888 = vunpack.c.l.b16 %v2882
      %v2889 = vpack.c.b16 %v2526, %v2887
      %v2890 = vpack.c.b16 %v2888, %v2563
      %v2891 = vrot.slane %v2889, 1
      %v2892 = vrot.slane %v2566, 1
      %v2893 = vsel %vm409, %v2891, %v2892
      %v2894 = vrot.slane %v2567, 1
      %v2895 = vsel %vm409, %v2892, %v2894
      %v2896 = vrot.slane %v2568, 1
      %v2897 = vsel %vm409, %v2894, %v2896
      %v2898 = vrot.slane %v2569, 1
      %v2899 = vsel %vm409, %v2896, %v2898
      %v2900 = vrot.slane %v2570, 1
      %v2901 = vsel %vm409, %v2898, %v2900
      %v2902 = vrot.slane %v2571, 1
      %v2903 = vsel %vm409, %v2900, %v2902
      %v2904 = vrot.slane %v2572, 1
      %v2905 = vsel %vm409, %v2902, %v2904
      %v2906 = vrot.slane %v2573, 1
      %v2907 = vsel %vm409, %v2904, %v2906
      %v2908 = vrot.slane %v2574, 1
      %v2909 = vsel %vm409, %v2906, %v2908
      %v2910 = vrot.slane %v2575, 1
      %v2911 = vsel %vm409, %v2908, %v2910
      %v2912 = vrot.slane %v2576, 1
      %v2913 = vsel %vm409, %v2910, %v2912
      %v2914 = vrot.slane %v2577, 1
      %v2915 = vsel %vm409, %v2912, %v2914
      %v2916 = vrot.slane %v2578, 1
      %v2917 = vsel %vm409, %v2914, %v2916
      %v2918 = vrot.slane %v2579, 1
      %v2919 = vsel %vm409, %v2916, %v2918
      %v2920 = vrot.slane %v2580, 1
      %v2921 = vsel %vm409, %v2918, %v2920
      %v2922 = vrot.slane %v2581, 1
      %v2923 = vsel %vm409, %v2920, %v2922
      %v2924 = vrot.slane %v2582, 1
      %v2925 = vsel %vm409, %v2922, %v2924
      %v2926 = vrot.slane %v2583, 1
      %v2927 = vsel %vm409, %v2924, %v2926
      %v2928 = vrot.slane %v2890, 1
      %v2929 = vsel %vm409, %v2926, %v2928
      %v2931 = vsel %vm449, %v2893, 0
      %v2934 = vsel %vm449, %v2895, 0
      %v2937 = vsel %vm449, %v2897, 0
      %v2940 = vsel %vm449, %v2899, 0
      %v2943 = vsel %vm449, %v2901, 0
      %v2946 = vsel %vm449, %v2903, 0
      %v2949 = vsel %vm449, %v2905, 0
      %v2952 = vsel %vm449, %v2907, 0
      %v2955 = vsel %vm449, %v2909, 0
      %v2958 = vsel %vm449, %v2911, 0
      %v2961 = vsel %vm449, %v2913, 0
      %v2964 = vsel %vm449, %v2915, 0
      %v2967 = vsel %vm449, %v2917, 0
      %v2970 = vsel %vm449, %v2919, 0
      %v2973 = vsel %vm449, %v2921, 0
      %v2976 = vsel %vm449, %v2923, 0
      %v2979 = vsel %vm449, %v2925, 0
      %v2982 = vsel %vm449, %v2927, 0
      %v2985 = vsel %vm449, %v2929, 0
      %v2988 = vsel %vm449, %v2928, 0
      %v2991 = vsel %vm510, %v2884, 0
      %2993 = vmatprep.subr.bf16.mxu0 0
      %2994 = vmatpush1.bf16.msra.mxu0 %v2991
      %2995 = vmatprep.subr.bf16.mxu0 0
      %2996 = vmatpush1.bf16.msra.mxu0 0
      %2997 = vmatprep.subr.bf16.mxu0 0
      %2998 = vmatpush1.bf16.msra.mxu0 0
      %2999 = vmatprep.subr.bf16.mxu0 0
      %3000 = vmatpush1.bf16.msra.mxu0 0
      %3001 = vmatprep.subr.bf16.mxu0 0
      %3002 = vmatpush1.bf16.msra.mxu0 0
      %3003 = vmatprep.subr.bf16.mxu0 0
      %3004 = vmatpush1.bf16.msra.mxu0 0
      %3005 = vmatprep.subr.bf16.mxu0 0
      %3006 = vmatpush1.bf16.msra.mxu0 0
      %3007 = vmatprep.subr.bf16.mxu0 0
      %3008 = vmatpush1.bf16.msra.mxu0 0
      %3009 = vmatprep.subr.bf16.mxu0 0
      %3010 = vmatpush1.bf16.msra.mxu0 0
      %3011 = vmatprep.subr.bf16.mxu0 0
      %3012 = vmatpush1.bf16.msra.mxu0 0
      %3013 = vmatprep.subr.bf16.mxu0 0
      %3014 = vmatpush1.bf16.msra.mxu0 0
      %3015 = vmatprep.subr.bf16.mxu0 0
      %3016 = vmatpush1.bf16.msra.mxu0 0
      %3017 = vmatprep.subr.bf16.mxu0 0
      %3018 = vmatpush1.bf16.msra.mxu0 0
      %3019 = vmatprep.subr.bf16.mxu0 0
      %3020 = vmatpush1.bf16.msra.mxu0 0
      %3021 = vmatprep.subr.bf16.mxu0 0
      %3022 = vmatpush1.bf16.msra.mxu0 0
      %3023 = vmatprep.subr.bf16.mxu0 0
      %3024 = vmatpush1.bf16.msra.mxu0 0
      %3025 = vmatprep.mubr.bf16.mxu0 0
      %3026 = vmatmul.mubr.bf16.gmra.mrb[0].mxu0 %v2931
      %v3027 = vpop.f32.mrb[0].mxu0
      %v3028 = vadd.f32 0.0, %v3027
      %v3029 = vpop.f32.mrb[0].mxu0
      %v3030 = vpop.f32.mrb[0].mxu0
      %v3031 = vadd.f32 0.0, %v3030
      %v3032 = vpop.f32.mrb[0].mxu0
      %3033 = vmatprep.mubr.bf16.mxu0 0
      %3034 = vmatmul.mubr.bf16.gmra.mrb[0].mxu0 %v2934
      %v3035 = vpop.f32.mrb[0].mxu0
      %v3036 = vadd.f32 0.0, %v3035
      %v3037 = vpop.f32.mrb[0].mxu0
      %v3038 = vpop.f32.mrb[0].mxu0
      %v3039 = vadd.f32 0.0, %v3038
      %v3040 = vpop.f32.mrb[0].mxu0
      %3041 = vmatprep.mubr.bf16.mxu0 0
      %3042 = vmatmul.mubr.bf16.gmra.mrb[0].mxu0 %v2937
      %v3043 = vpop.f32.mrb[0].mxu0
      %v3044 = vadd.f32 0.0, %v3043
      %v3045 = vpop.f32.mrb[0].mxu0
      %v3046 = vpop.f32.mrb[0].mxu0
      %v3047 = vadd.f32 0.0, %v3046
      %v3048 = vpop.f32.mrb[0].mxu0
      %3049 = vmatprep.mubr.bf16.mxu0 0
      %3050 = vmatmul.mubr.bf16.gmra.mrb[0].mxu0 %v2940
      %v3051 = vpop.f32.mrb[0].mxu0
      %v3052 = vadd.f32 0.0, %v3051
      %v3053 = vpop.f32.mrb[0].mxu0
      %v3054 = vpop.f32.mrb[0].mxu0
      %v3055 = vadd.f32 0.0, %v3054
      %v3056 = vpop.f32.mrb[0].mxu0
      %3057 = vmatprep.mubr.bf16.mxu0 0
      %3058 = vmatmul.mubr.bf16.gmra.mrb[0].mxu0 %v2943
      %v3059 = vpop.f32.mrb[0].mxu0
      %v3060 = vadd.f32 0.0, %v3059
      %v3061 = vpop.f32.mrb[0].mxu0
      %v3062 = vpop.f32.mrb[0].mxu0
      %v3063 = vadd.f32 0.0, %v3062
      %v3064 = vpop.f32.mrb[0].mxu0
      %3065 = vmatprep.mubr.bf16.mxu0 0
      %3066 = vmatmul.mubr.bf16.gmra.mrb[0].mxu0 %v2946
      %v3067 = vpop.f32.mrb[0].mxu0
      %v3068 = vadd.f32 0.0, %v3067
      %v3069 = vpop.f32.mrb[0].mxu0
      %v3070 = vpop.f32.mrb[0].mxu0
      %v3071 = vadd.f32 0.0, %v3070
      %v3072 = vpop.f32.mrb[0].mxu0
      %3073 = vmatprep.mubr.bf16.mxu0 0
      %3074 = vmatmul.mubr.bf16.gmra.mrb[0].mxu0 %v2949
      %v3075 = vpop.f32.mrb[0].mxu0
      %v3076 = vadd.f32 0.0, %v3075
      %v3077 = vpop.f32.mrb[0].mxu0
      %v3078 = vpop.f32.mrb[0].mxu0
      %v3079 = vadd.f32 0.0, %v3078
      %v3080 = vpop.f32.mrb[0].mxu0
      %3081 = vmatprep.mubr.bf16.mxu0 0
      %3082 = vmatmul.mubr.bf16.gmra.mrb[0].mxu0 %v2952
      %v3083 = vpop.f32.mrb[0].mxu0
      %v3084 = vadd.f32 0.0, %v3083
      %v3085 = vpop.f32.mrb[0].mxu0
      %v3086 = vpop.f32.mrb[0].mxu0
      %v3087 = vadd.f32 0.0, %v3086
      %v3088 = vpop.f32.mrb[0].mxu0
      %3089 = vmatprep.mubr.bf16.mxu0 0
      %3090 = vmatmul.mubr.bf16.gmra.mrb[0].mxu0 %v2955
      %v3091 = vpop.f32.mrb[0].mxu0
      %v3092 = vadd.f32 0.0, %v3091
      %v3093 = vpop.f32.mrb[0].mxu0
      %v3094 = vpop.f32.mrb[0].mxu0
      %v3095 = vadd.f32 0.0, %v3094
      %v3096 = vpop.f32.mrb[0].mxu0
      %3097 = vmatprep.mubr.bf16.mxu0 0
      %3098 = vmatmul.mubr.bf16.gmra.mrb[0].mxu0 %v2958
      %v3099 = vpop.f32.mrb[0].mxu0
      %v3100 = vadd.f32 0.0, %v3099
      %v3101 = vpop.f32.mrb[0].mxu0
      %v3102 = vpop.f32.mrb[0].mxu0
      %v3103 = vadd.f32 0.0, %v3102
      %v3104 = vpop.f32.mrb[0].mxu0
      %3105 = vmatprep.mubr.bf16.mxu0 0
      %3106 = vmatmul.mubr.bf16.gmra.mrb[0].mxu0 %v2961
      %v3107 = vpop.f32.mrb[0].mxu0
      %v3108 = vadd.f32 0.0, %v3107
      %v3109 = vpop.f32.mrb[0].mxu0
      %v3110 = vpop.f32.mrb[0].mxu0
      %v3111 = vadd.f32 0.0, %v3110
      %v3112 = vpop.f32.mrb[0].mxu0
      %3113 = vmatprep.mubr.bf16.mxu0 0
      %3114 = vmatmul.mubr.bf16.gmra.mrb[0].mxu0 %v2964
      %v3115 = vpop.f32.mrb[0].mxu0
      %v3116 = vadd.f32 0.0, %v3115
      %v3117 = vpop.f32.mrb[0].mxu0
      %v3118 = vpop.f32.mrb[0].mxu0
      %v3119 = vadd.f32 0.0, %v3118
      %v3120 = vpop.f32.mrb[0].mxu0
      %3121 = vmatprep.mubr.bf16.mxu0 0
      %3122 = vmatmul.mubr.bf16.gmra.mrb[0].mxu0 %v2967
      %v3123 = vpop.f32.mrb[0].mxu0
      %v3124 = vadd.f32 0.0, %v3123
      %v3125 = vpop.f32.mrb[0].mxu0
      %v3126 = vpop.f32.mrb[0].mxu0
      %v3127 = vadd.f32 0.0, %v3126
      %v3128 = vpop.f32.mrb[0].mxu0
      %3129 = vmatprep.mubr.bf16.mxu0 0
      %3130 = vmatmul.mubr.bf16.gmra.mrb[0].mxu0 %v2970
      %v3131 = vpop.f32.mrb[0].mxu0
      %v3132 = vadd.f32 0.0, %v3131
      %v3133 = vpop.f32.mrb[0].mxu0
      %v3134 = vpop.f32.mrb[0].mxu0
      %v3135 = vadd.f32 0.0, %v3134
      %v3136 = vpop.f32.mrb[0].mxu0
      %3137 = vmatprep.mubr.bf16.mxu0 0
      %3138 = vmatmul.mubr.bf16.gmra.mrb[0].mxu0 %v2973
      %v3139 = vpop.f32.mrb[0].mxu0
      %v3140 = vadd.f32 0.0, %v3139
      %v3141 = vpop.f32.mrb[0].mxu0
      %v3142 = vpop.f32.mrb[0].mxu0
      %v3143 = vadd.f32 0.0, %v3142
      %v3144 = vpop.f32.mrb[0].mxu0
      %3145 = vmatprep.mubr.bf16.mxu0 0
      %3146 = vmatmul.mubr.bf16.gmra.mrb[0].mxu0 %v2976
      %v3147 = vpop.f32.mrb[0].mxu0
      %v3148 = vadd.f32 0.0, %v3147
      %v3149 = vpop.f32.mrb[0].mxu0
      %v3150 = vpop.f32.mrb[0].mxu0
      %v3151 = vadd.f32 0.0, %v3150
      %v3152 = vpop.f32.mrb[0].mxu0
      %3153 = vmatprep.mubr.bf16.mxu0 0
      %3154 = vmatmul.mubr.bf16.gmra.mrb[0].mxu0 %v2979
      %v3155 = vpop.f32.mrb[0].mxu0
      %v3156 = vadd.f32 0.0, %v3155
      %v3157 = vpop.f32.mrb[0].mxu0
      %v3158 = vpop.f32.mrb[0].mxu0
      %v3159 = vadd.f32 0.0, %v3158
      %v3160 = vpop.f32.mrb[0].mxu0
      %3161 = vmatprep.mubr.bf16.mxu0 0
      %3162 = vmatmul.mubr.bf16.gmra.mrb[0].mxu0 %v2982
      %v3163 = vpop.f32.mrb[0].mxu0
      %v3164 = vadd.f32 0.0, %v3163
      %v3165 = vpop.f32.mrb[0].mxu0
      %v3166 = vpop.f32.mrb[0].mxu0
      %v3167 = vadd.f32 0.0, %v3166
      %v3168 = vpop.f32.mrb[0].mxu0
      %3169 = vmatprep.mubr.bf16.mxu0 0
      %3170 = vmatmul.mubr.bf16.gmra.mrb[0].mxu0 %v2985
      %v3171 = vpop.f32.mrb[0].mxu0
      %v3172 = vadd.f32 0.0, %v3171
      %v3173 = vpop.f32.mrb[0].mxu0
      %v3174 = vpop.f32.mrb[0].mxu0
      %v3175 = vadd.f32 0.0, %v3174
      %v3176 = vpop.f32.mrb[0].mxu0
      %3177 = vmatprep.mubr.bf16.mxu0 0
      %3178 = vmatmul.mubr.bf16.gmra.mrb[0].mxu0 %v2988
      %v3179 = vpop.f32.mrb[0].mxu0
      %v3180 = vadd.f32 0.0, %v3179
      %v3181 = vpop.f32.mrb[0].mxu0
      %v3182 = vpop.f32.mrb[0].mxu0
      %v3183 = vadd.f32 0.0, %v3182
      %v3184 = vpop.f32.mrb[0].mxu0
      %3185 = vdwg.mxu0
      %v3186 = vadd.f32 %v2841, %v3028
      %v3187 = vadd.f32 %v2842, %v3031
      %v3188 = vadd.f32 %v2843, %v3036
      %v3189 = vadd.f32 %v2844, %v3039
      %v3190 = vadd.f32 %v2845, %v3044
      %v3191 = vadd.f32 %v2846, %v3047
      %v3192 = vadd.f32 %v2847, %v3052
      %v3193 = vadd.f32 %v2848, %v3055
      %v3194 = vadd.f32 %v2849, %v3060
      %v3195 = vadd.f32 %v2850, %v3063
      %v3196 = vadd.f32 %v2851, %v3068
      %v3197 = vadd.f32 %v2852, %v3071
      %v3198 = vadd.f32 %v2853, %v3076
      %v3199 = vadd.f32 %v2854, %v3079
      %v3200 = vadd.f32 %v2855, %v3084
      %v3201 = vadd.f32 %v2856, %v3087
      %v3202 = vadd.f32 %v2857, %v3092
      %v3203 = vadd.f32 %v2858, %v3095
      %v3204 = vadd.f32 %v2859, %v3100
      %v3205 = vadd.f32 %v2860, %v3103
      %v3206 = vadd.f32 %v2861, %v3108
      %v3207 = vadd.f32 %v2862, %v3111
      %v3208 = vadd.f32 %v2863, %v3116
      %v3209 = vadd.f32 %v2864, %v3119
      %v3210 = vadd.f32 %v2865, %v3124
      %v3211 = vadd.f32 %v2866, %v3127
      %v3212 = vadd.f32 %v2867, %v3132
      %v3213 = vadd.f32 %v2868, %v3135
      %v3214 = vadd.f32 %v2869, %v3140
      %v3215 = vadd.f32 %v2870, %v3143
      %v3216 = vadd.f32 %v2871, %v3148
      %v3217 = vadd.f32 %v2872, %v3151
      %v3218 = vadd.f32 %v2873, %v3156
      %v3219 = vadd.f32 %v2874, %v3159
      %v3220 = vadd.f32 %v2875, %v3164
      %v3221 = vadd.f32 %v2876, %v3167
      %v3222 = vadd.f32 %v2877, %v3172
      %v3223 = vadd.f32 %v2878, %v3175
      %v3224 = vadd.f32 %v2879, %v3180
      %v3225 = vadd.f32 %v2880, %v3183
      %v3226 = vld [vmem:[%s244 + $0x28] sm:$0xc]
      %v3227 = vld [vmem:[%s244 + $0xc4] sm:$0xf]
      %s3228 = scalar_lea.vmem %s248, 16
      %v3229 = vld [vmem:[%s3228] sm:$0x3]
      %v3232 = vunpack.c.l.b16 %v3226
      %v3233 = vunpack.c.l.b16 %v3227
      %v3234 = vpack.c.b16 %v2526, %v3232
      %v3235 = vpack.c.b16 %v3233, %v2563
      %v3236 = vrot.slane %v3234, 2
      %v3237 = vrot.slane %v2566, 2
      %v3238 = vsel %vm979, %v3236, %v3237
      %v3239 = vrot.slane %v2567, 2
      %v3240 = vsel %vm979, %v3237, %v3239
      %v3241 = vrot.slane %v2568, 2
      %v3242 = vsel %vm979, %v3239, %v3241
      %v3243 = vrot.slane %v2569, 2
      %v3244 = vsel %vm979, %v3241, %v3243
      %v3245 = vrot.slane %v2570, 2
      %v3246 = vsel %vm979, %v3243, %v3245
      %v3247 = vrot.slane %v2571, 2
      %v3248 = vsel %vm979, %v3245, %v3247
      %v3249 = vrot.slane %v2572, 2
      %v3250 = vsel %vm979, %v3247, %v3249
      %v3251 = vrot.slane %v2573, 2
      %v3252 = vsel %vm979, %v3249, %v3251
      %v3253 = vrot.slane %v2574, 2
      %v3254 = vsel %vm979, %v3251, %v3253
      %v3255 = vrot.slane %v2575, 2
      %v3256 = vsel %vm979, %v3253, %v3255
      %v3257 = vrot.slane %v2576, 2
      %v3258 = vsel %vm979, %v3255, %v3257
      %v3259 = vrot.slane %v2577, 2
      %v3260 = vsel %vm979, %v3257, %v3259
      %v3261 = vrot.slane %v2578, 2
      %v3262 = vsel %vm979, %v3259, %v3261
      %v3263 = vrot.slane %v2579, 2
      %v3264 = vsel %vm979, %v3261, %v3263
      %v3265 = vrot.slane %v2580, 2
      %v3266 = vsel %vm979, %v3263, %v3265
      %v3267 = vrot.slane %v2581, 2
      %v3268 = vsel %vm979, %v3265, %v3267
      %v3269 = vrot.slane %v2582, 2
      %v3270 = vsel %vm979, %v3267, %v3269
      %v3271 = vrot.slane %v2583, 2
      %v3272 = vsel %vm979, %v3269, %v3271
      %v3273 = vrot.slane %v3235, 2
      %v3274 = vsel %vm979, %v3271, %v3273
      %v3276 = vsel %vm449, %v3238, 0
      %v3279 = vsel %vm449, %v3240, 0
      %v3282 = vsel %vm449, %v3242, 0
      %v3285 = vsel %vm449, %v3244, 0
      %v3288 = vsel %vm449, %v3246, 0
      %v3291 = vsel %vm449, %v3248, 0
      %v3294 = vsel %vm449, %v3250, 0
      %v3297 = vsel %vm449, %v3252, 0
      %v3300 = vsel %vm449, %v3254, 0
      %v3303 = vsel %vm449, %v3256, 0
      %v3306 = vsel %vm449, %v3258, 0
      %v3309 = vsel %vm449, %v3260, 0
      %v3312 = vsel %vm449, %v3262, 0
      %v3315 = vsel %vm449, %v3264, 0
      %v3318 = vsel %vm449, %v3266, 0
      %v3321 = vsel %vm449, %v3268, 0
      %v3324 = vsel %vm449, %v3270, 0
      %v3327 = vsel %vm449, %v3272, 0
      %v3330 = vsel %vm449, %v3274, 0
      %v3333 = vsel %vm449, %v3273, 0
      %v3336 = vsel %vm510, %v3229, 0
      %3338 = vmatprep.subr.bf16.mxu0 0
      %3339 = vmatpush1.bf16.msra.mxu0 %v3336
      %3340 = vmatprep.subr.bf16.mxu0 0
      %3341 = vmatpush1.bf16.msra.mxu0 0
      %3342 = vmatprep.subr.bf16.mxu0 0
      %3343 = vmatpush1.bf16.msra.mxu0 0
      %3344 = vmatprep.subr.bf16.mxu0 0
      %3345 = vmatpush1.bf16.msra.mxu0 0
      %3346 = vmatprep.subr.bf16.mxu0 0
      %3347 = vmatpush1.bf16.msra.mxu0 0
      %3348 = vmatprep.subr.bf16.mxu0 0
      %3349 = vmatpush1.bf16.msra.mxu0 0
      %3350 = vmatprep.subr.bf16.mxu0 0
      %3351 = vmatpush1.bf16.msra.mxu0 0
      %3352 = vmatprep.subr.bf16.mxu0 0
      %3353 = vmatpush1.bf16.msra.mxu0 0
      %3354 = vmatprep.subr.bf16.mxu0 0
      %3355 = vmatpush1.bf16.msra.mxu0 0
      %3356 = vmatprep.subr.bf16.mxu0 0
      %3357 = vmatpush1.bf16.msra.mxu0 0
      %3358 = vmatprep.subr.bf16.mxu0 0
      %3359 = vmatpush1.bf16.msra.mxu0 0
      %3360 = vmatprep.subr.bf16.mxu0 0
      %3361 = vmatpush1.bf16.msra.mxu0 0
      %3362 = vmatprep.subr.bf16.mxu0 0
      %3363 = vmatpush1.bf16.msra.mxu0 0
      %3364 = vmatprep.subr.bf16.mxu0 0
      %3365 = vmatpush1.bf16.msra.mxu0 0
      %3366 = vmatprep.subr.bf16.mxu0 0
      %3367 = vmatpush1.bf16.msra.mxu0 0
      %3368 = vmatprep.subr.bf16.mxu0 0
      %3369 = vmatpush1.bf16.msra.mxu0 0
      %3370 = vmatprep.mubr.bf16.mxu0 0
      %3371 = vmatmul.mubr.bf16.gmra.mrb[0].mxu0 %v3276
      %v3372 = vpop.f32.mrb[0].mxu0
      %v3373 = vadd.f32 0.0, %v3372
      %v3374 = vpop.f32.mrb[0].mxu0
      %v3375 = vpop.f32.mrb[0].mxu0
      %v3376 = vadd.f32 0.0, %v3375
      %v3377 = vpop.f32.mrb[0].mxu0
      %3378 = vmatprep.mubr.bf16.mxu0 0
      %3379 = vmatmul.mubr.bf16.gmra.mrb[0].mxu0 %v3279
      %v3380 = vpop.f32.mrb[0].mxu0
      %v3381 = vadd.f32 0.0, %v3380
      %v3382 = vpop.f32.mrb[0].mxu0
      %v3383 = vpop.f32.mrb[0].mxu0
      %v3384 = vadd.f32 0.0, %v3383
      %v3385 = vpop.f32.mrb[0].mxu0
      %3386 = vmatprep.mubr.bf16.mxu0 0
      %3387 = vmatmul.mubr.bf16.gmra.mrb[0].mxu0 %v3282
      %v3388 = vpop.f32.mrb[0].mxu0
      %v3389 = vadd.f32 0.0, %v3388
      %v3390 = vpop.f32.mrb[0].mxu0
      %v3391 = vpop.f32.mrb[0].mxu0
      %v3392 = vadd.f32 0.0, %v3391
      %v3393 = vpop.f32.mrb[0].mxu0
      %3394 = vmatprep.mubr.bf16.mxu0 0
      %3395 = vmatmul.mubr.bf16.gmra.mrb[0].mxu0 %v3285
      %v3396 = vpop.f32.mrb[0].mxu0
      %v3397 = vadd.f32 0.0, %v3396
      %v3398 = vpop.f32.mrb[0].mxu0
      %v3399 = vpop.f32.mrb[0].mxu0
      %v3400 = vadd.f32 0.0, %v3399
      %v3401 = vpop.f32.mrb[0].mxu0
      %3402 = vmatprep.mubr.bf16.mxu0 0
      %3403 = vmatmul.mubr.bf16.gmra.mrb[0].mxu0 %v3288
      %v3404 = vpop.f32.mrb[0].mxu0
      %v3405 = vadd.f32 0.0, %v3404
      %v3406 = vpop.f32.mrb[0].mxu0
      %v3407 = vpop.f32.mrb[0].mxu0
      %v3408 = vadd.f32 0.0, %v3407
      %v3409 = vpop.f32.mrb[0].mxu0
      %3410 = vmatprep.mubr.bf16.mxu0 0
      %3411 = vmatmul.mubr.bf16.gmra.mrb[0].mxu0 %v3291
      %v3412 = vpop.f32.mrb[0].mxu0
      %v3413 = vadd.f32 0.0, %v3412
      %v3414 = vpop.f32.mrb[0].mxu0
      %v3415 = vpop.f32.mrb[0].mxu0
      %v3416 = vadd.f32 0.0, %v3415
      %v3417 = vpop.f32.mrb[0].mxu0
      %3418 = vmatprep.mubr.bf16.mxu0 0
      %3419 = vmatmul.mubr.bf16.gmra.mrb[0].mxu0 %v3294
      %v3420 = vpop.f32.mrb[0].mxu0
      %v3421 = vadd.f32 0.0, %v3420
      %v3422 = vpop.f32.mrb[0].mxu0
      %v3423 = vpop.f32.mrb[0].mxu0
      %v3424 = vadd.f32 0.0, %v3423
      %v3425 = vpop.f32.mrb[0].mxu0
      %3426 = vmatprep.mubr.bf16.mxu0 0
      %3427 = vmatmul.mubr.bf16.gmra.mrb[0].mxu0 %v3297
      %v3428 = vpop.f32.mrb[0].mxu0
      %v3429 = vadd.f32 0.0, %v3428
      %v3430 = vpop.f32.mrb[0].mxu0
      %v3431 = vpop.f32.mrb[0].mxu0
      %v3432 = vadd.f32 0.0, %v3431
      %v3433 = vpop.f32.mrb[0].mxu0
      %3434 = vmatprep.mubr.bf16.mxu0 0
      %3435 = vmatmul.mubr.bf16.gmra.mrb[0].mxu0 %v3300
      %v3436 = vpop.f32.mrb[0].mxu0
      %v3437 = vadd.f32 0.0, %v3436
      %v3438 = vpop.f32.mrb[0].mxu0
      %v3439 = vpop.f32.mrb[0].mxu0
      %v3440 = vadd.f32 0.0, %v3439
      %v3441 = vpop.f32.mrb[0].mxu0
      %3442 = vmatprep.mubr.bf16.mxu0 0
      %3443 = vmatmul.mubr.bf16.gmra.mrb[0].mxu0 %v3303
      %v3444 = vpop.f32.mrb[0].mxu0
      %v3445 = vadd.f32 0.0, %v3444
      %v3446 = vpop.f32.mrb[0].mxu0
      %v3447 = vpop.f32.mrb[0].mxu0
      %v3448 = vadd.f32 0.0, %v3447
      %v3449 = vpop.f32.mrb[0].mxu0
      %3450 = vmatprep.mubr.bf16.mxu0 0
      %3451 = vmatmul.mubr.bf16.gmra.mrb[0].mxu0 %v3306
      %v3452 = vpop.f32.mrb[0].mxu0
      %v3453 = vadd.f32 0.0, %v3452
      %v3454 = vpop.f32.mrb[0].mxu0
      %v3455 = vpop.f32.mrb[0].mxu0
      %v3456 = vadd.f32 0.0, %v3455
      %v3457 = vpop.f32.mrb[0].mxu0
      %3458 = vmatprep.mubr.bf16.mxu0 0
      %3459 = vmatmul.mubr.bf16.gmra.mrb[0].mxu0 %v3309
      %v3460 = vpop.f32.mrb[0].mxu0
      %v3461 = vadd.f32 0.0, %v3460
      %v3462 = vpop.f32.mrb[0].mxu0
      %v3463 = vpop.f32.mrb[0].mxu0
      %v3464 = vadd.f32 0.0, %v3463
      %v3465 = vpop.f32.mrb[0].mxu0
      %3466 = vmatprep.mubr.bf16.mxu0 0
      %3467 = vmatmul.mubr.bf16.gmra.mrb[0].mxu0 %v3312
      %v3468 = vpop.f32.mrb[0].mxu0
      %v3469 = vadd.f32 0.0, %v3468
      %v3470 = vpop.f32.mrb[0].mxu0
      %v3471 = vpop.f32.mrb[0].mxu0
      %v3472 = vadd.f32 0.0, %v3471
      %v3473 = vpop.f32.mrb[0].mxu0
      %3474 = vmatprep.mubr.bf16.mxu0 0
      %3475 = vmatmul.mubr.bf16.gmra.mrb[0].mxu0 %v3315
      %v3476 = vpop.f32.mrb[0].mxu0
      %v3477 = vadd.f32 0.0, %v3476
      %v3478 = vpop.f32.mrb[0].mxu0
      %v3479 = vpop.f32.mrb[0].mxu0
      %v3480 = vadd.f32 0.0, %v3479
      %v3481 = vpop.f32.mrb[0].mxu0
      %3482 = vmatprep.mubr.bf16.mxu0 0
      %3483 = vmatmul.mubr.bf16.gmra.mrb[0].mxu0 %v3318
      %v3484 = vpop.f32.mrb[0].mxu0
      %v3485 = vadd.f32 0.0, %v3484
      %v3486 = vpop.f32.mrb[0].mxu0
      %v3487 = vpop.f32.mrb[0].mxu0
      %v3488 = vadd.f32 0.0, %v3487
      %v3489 = vpop.f32.mrb[0].mxu0
      %3490 = vmatprep.mubr.bf16.mxu0 0
      %3491 = vmatmul.mubr.bf16.gmra.mrb[0].mxu0 %v3321
      %v3492 = vpop.f32.mrb[0].mxu0
      %v3493 = vadd.f32 0.0, %v3492
      %v3494 = vpop.f32.mrb[0].mxu0
      %v3495 = vpop.f32.mrb[0].mxu0
      %v3496 = vadd.f32 0.0, %v3495
      %v3497 = vpop.f32.mrb[0].mxu0
      %3498 = vmatprep.mubr.bf16.mxu0 0
      %3499 = vmatmul.mubr.bf16.gmra.mrb[0].mxu0 %v3324
      %v3500 = vpop.f32.mrb[0].mxu0
      %v3501 = vadd.f32 0.0, %v3500
      %v3502 = vpop.f32.mrb[0].mxu0
      %v3503 = vpop.f32.mrb[0].mxu0
      %v3504 = vadd.f32 0.0, %v3503
      %v3505 = vpop.f32.mrb[0].mxu0
      %3506 = vmatprep.mubr.bf16.mxu0 0
      %3507 = vmatmul.mubr.bf16.gmra.mrb[0].mxu0 %v3327
      %v3508 = vpop.f32.mrb[0].mxu0
      %v3509 = vadd.f32 0.0, %v3508
      %v3510 = vpop.f32.mrb[0].mxu0
      %v3511 = vpop.f32.mrb[0].mxu0
      %v3512 = vadd.f32 0.0, %v3511
      %v3513 = vpop.f32.mrb[0].mxu0
      %3514 = vmatprep.mubr.bf16.mxu0 0
      %3515 = vmatmul.mubr.bf16.gmra.mrb[0].mxu0 %v3330
      %v3516 = vpop.f32.mrb[0].mxu0
      %v3517 = vadd.f32 0.0, %v3516
      %v3518 = vpop.f32.mrb[0].mxu0
      %v3519 = vpop.f32.mrb[0].mxu0
      %v3520 = vadd.f32 0.0, %v3519
      %v3521 = vpop.f32.mrb[0].mxu0
      %3522 = vmatprep.mubr.bf16.mxu0 0
      %3523 = vmatmul.mubr.bf16.gmra.mrb[0].mxu0 %v3333
      %v3524 = vpop.f32.mrb[0].mxu0
      %v3525 = vadd.f32 0.0, %v3524
      %v3526 = vpop.f32.mrb[0].mxu0
      %v3527 = vpop.f32.mrb[0].mxu0
      %v3528 = vadd.f32 0.0, %v3527
      %v3529 = vpop.f32.mrb[0].mxu0
      %3530 = vdwg.mxu0
      %v3531 = vadd.f32 %v3186, %v3373
      %v3532 = vadd.f32 %v3187, %v3376
      %v3533 = vadd.f32 %v3188, %v3381
      %v3534 = vadd.f32 %v3189, %v3384
      %v3535 = vadd.f32 %v3190, %v3389
      %v3536 = vadd.f32 %v3191, %v3392
      %v3537 = vadd.f32 %v3192, %v3397
      %v3538 = vadd.f32 %v3193, %v3400
      %v3539 = vadd.f32 %v3194, %v3405
      %v3540 = vadd.f32 %v3195, %v3408
      %v3541 = vadd.f32 %v3196, %v3413
      %v3542 = vadd.f32 %v3197, %v3416
      %v3543 = vadd.f32 %v3198, %v3421
      %v3544 = vadd.f32 %v3199, %v3424
      %v3545 = vadd.f32 %v3200, %v3429
      %v3546 = vadd.f32 %v3201, %v3432
      %v3547 = vadd.f32 %v3202, %v3437
      %v3548 = vadd.f32 %v3203, %v3440
      %v3549 = vadd.f32 %v3204, %v3445
      %v3550 = vadd.f32 %v3205, %v3448
      %v3551 = vadd.f32 %v3206, %v3453
      %v3552 = vadd.f32 %v3207, %v3456
      %v3553 = vadd.f32 %v3208, %v3461
      %v3554 = vadd.f32 %v3209, %v3464
      %v3555 = vadd.f32 %v3210, %v3469
      %v3556 = vadd.f32 %v3211, %v3472
      %v3557 = vadd.f32 %v3212, %v3477
      %v3558 = vadd.f32 %v3213, %v3480
      %v3559 = vadd.f32 %v3214, %v3485
      %v3560 = vadd.f32 %v3215, %v3488
      %v3561 = vadd.f32 %v3216, %v3493
      %v3562 = vadd.f32 %v3217, %v3496
      %v3563 = vadd.f32 %v3218, %v3501
      %v3564 = vadd.f32 %v3219, %v3504
      %v3565 = vadd.f32 %v3220, %v3509
      %v3566 = vadd.f32 %v3221, %v3512
      %v3567 = vadd.f32 %v3222, %v3517
      %v3568 = vadd.f32 %v3223, %v3520
      %v3569 = vadd.f32 %v3224, %v3525
      %v3570 = vadd.f32 %v3225, %v3528
      %v3571 = vld [vmem:[%s251] sm:$0x1]
      %v3573 = vlaneseq
      %v3574 = vshrl.u32 %v3573, 7
      %v3575 = vsub.s32 0, %v3574
      %v3576 = vrot.slane %v3571, %v3575
      %v3578 = vmul.f32 %v3531, %v3576
      %v3579 = vmul.f32 %v3532, %v3576
      %v3580 = vmul.f32 %v3533, %v3576
      %v3581 = vmul.f32 %v3534, %v3576
      %v3582 = vmul.f32 %v3535, %v3576
      %v3583 = vmul.f32 %v3536, %v3576
      %v3584 = vmul.f32 %v3537, %v3576
      %v3585 = vmul.f32 %v3538, %v3576
      %v3586 = vmul.f32 %v3539, %v3576
      %v3587 = vmul.f32 %v3540, %v3576
      %v3588 = vmul.f32 %v3541, %v3576
      %v3589 = vmul.f32 %v3542, %v3576
      %v3590 = vmul.f32 %v3543, %v3576
      %v3591 = vmul.f32 %v3544, %v3576
      %v3592 = vmul.f32 %v3545, %v3576
      %v3593 = vmul.f32 %v3546, %v3576
      %v3594 = vmul.f32 %v3547, %v3576
      %v3595 = vmul.f32 %v3548, %v3576
      %v3596 = vmul.f32 %v3549, %v3576
      %v3597 = vmul.f32 %v3550, %v3576
      %v3598 = vmul.f32 %v3551, %v3576
      %v3599 = vmul.f32 %v3552, %v3576
      %v3600 = vmul.f32 %v3553, %v3576
      %v3601 = vmul.f32 %v3554, %v3576
      %v3602 = vmul.f32 %v3555, %v3576
      %v3603 = vmul.f32 %v3556, %v3576
      %v3604 = vmul.f32 %v3557, %v3576
      %v3605 = vmul.f32 %v3558, %v3576
      %v3606 = vmul.f32 %v3559, %v3576
      %v3607 = vmul.f32 %v3560, %v3576
      %v3608 = vmul.f32 %v3561, %v3576
      %v3609 = vmul.f32 %v3562, %v3576
      %v3610 = vmul.f32 %v3563, %v3576
      %v3611 = vmul.f32 %v3564, %v3576
      %v3612 = vmul.f32 %v3565, %v3576
      %v3613 = vmul.f32 %v3566, %v3576
      %v3614 = vmul.f32 %v3567, %v3576
      %v3615 = vmul.f32 %v3568, %v3576
      %v3616 = vmul.f32 %v3569, %v3576
      %v3617 = vmul.f32 %v3570, %v3576
      %v3618 = vld [vmem:[%s254] sm:$0x1]
      %v3620 = vlaneseq
      %v3621 = vshrl.u32 %v3620, 7
      %v3622 = vsub.s32 0, %v3621
      %v3623 = vrot.slane %v3618, %v3622
      %v3625 = vadd.f32 %v3578, %v3623
      %v3626 = vadd.f32 %v3579, %v3623
      %v3627 = vadd.f32 %v3580, %v3623
      %v3628 = vadd.f32 %v3581, %v3623
      %v3629 = vadd.f32 %v3582, %v3623
      %v3630 = vadd.f32 %v3583, %v3623
      %v3631 = vadd.f32 %v3584, %v3623
      %v3632 = vadd.f32 %v3585, %v3623
      %v3633 = vadd.f32 %v3586, %v3623
      %v3634 = vadd.f32 %v3587, %v3623
      %v3635 = vadd.f32 %v3588, %v3623
      %v3636 = vadd.f32 %v3589, %v3623
      %v3637 = vadd.f32 %v3590, %v3623
      %v3638 = vadd.f32 %v3591, %v3623
      %v3639 = vadd.f32 %v3592, %v3623
      %v3640 = vadd.f32 %v3593, %v3623
      %v3641 = vadd.f32 %v3594, %v3623
      %v3642 = vadd.f32 %v3595, %v3623
      %v3643 = vadd.f32 %v3596, %v3623
      %v3644 = vadd.f32 %v3597, %v3623
      %v3645 = vadd.f32 %v3598, %v3623
      %v3646 = vadd.f32 %v3599, %v3623
      %v3647 = vadd.f32 %v3600, %v3623
      %v3648 = vadd.f32 %v3601, %v3623
      %v3649 = vadd.f32 %v3602, %v3623
      %v3650 = vadd.f32 %v3603, %v3623
      %v3651 = vadd.f32 %v3604, %v3623
      %v3652 = vadd.f32 %v3605, %v3623
      %v3653 = vadd.f32 %v3606, %v3623
      %v3654 = vadd.f32 %v3607, %v3623
      %v3655 = vadd.f32 %v3608, %v3623
      %v3656 = vadd.f32 %v3609, %v3623
      %v3657 = vadd.f32 %v3610, %v3623
      %v3658 = vadd.f32 %v3611, %v3623
      %v3659 = vadd.f32 %v3612, %v3623
      %v3660 = vadd.f32 %v3613, %v3623
      %v3661 = vadd.f32 %v3614, %v3623
      %v3662 = vadd.f32 %v3615, %v3623
      %v3663 = vadd.f32 %v3616, %v3623
      %v3664 = vadd.f32 %v3617, %v3623
      %v3665 = vmax.f32 %v3625, 0.0
      %v3666 = vmax.f32 %v3626, 0.0
      %v3667 = vmax.f32 %v3627, 0.0
      %v3668 = vmax.f32 %v3628, 0.0
      %v3669 = vmax.f32 %v3629, 0.0
      %v3670 = vmax.f32 %v3630, 0.0
      %v3671 = vmax.f32 %v3631, 0.0
      %v3672 = vmax.f32 %v3632, 0.0
      %v3673 = vmax.f32 %v3633, 0.0
      %v3674 = vmax.f32 %v3634, 0.0
      %v3675 = vmax.f32 %v3635, 0.0
      %v3676 = vmax.f32 %v3636, 0.0
      %v3677 = vmax.f32 %v3637, 0.0
      %v3678 = vmax.f32 %v3638, 0.0
      %v3679 = vmax.f32 %v3639, 0.0
      %v3680 = vmax.f32 %v3640, 0.0
      %v3681 = vmax.f32 %v3641, 0.0
      %v3682 = vmax.f32 %v3642, 0.0
      %v3683 = vmax.f32 %v3643, 0.0
      %v3684 = vmax.f32 %v3644, 0.0
      %v3685 = vmax.f32 %v3645, 0.0
      %v3686 = vmax.f32 %v3646, 0.0
      %v3687 = vmax.f32 %v3647, 0.0
      %v3688 = vmax.f32 %v3648, 0.0
      %v3689 = vmax.f32 %v3649, 0.0
      %v3690 = vmax.f32 %v3650, 0.0
      %v3691 = vmax.f32 %v3651, 0.0
      %v3692 = vmax.f32 %v3652, 0.0
      %v3693 = vmax.f32 %v3653, 0.0
      %v3694 = vmax.f32 %v3654, 0.0
      %v3695 = vmax.f32 %v3655, 0.0
      %v3696 = vmax.f32 %v3656, 0.0
      %v3697 = vmax.f32 %v3657, 0.0
      %v3698 = vmax.f32 %v3658, 0.0
      %v3699 = vmax.f32 %v3659, 0.0
      %v3700 = vmax.f32 %v3660, 0.0
      %v3701 = vmax.f32 %v3661, 0.0
      %v3702 = vmax.f32 %v3662, 0.0
      %v3703 = vmax.f32 %v3663, 0.0
      %v3704 = vmax.f32 %v3664, 0.0
      %3705 = vst [vmem:[%s262] sm:$0xff] %v3665
      %3706 = vst [vmem:[%s262 + $0x8] sm:$0xff] %v3666
      %3707 = vst [vmem:[%s262 + $0x10] sm:$0xff] %v3667
      %3708 = vst [vmem:[%s262 + $0x18] sm:$0xff] %v3668
      %3709 = vst [vmem:[%s262 + $0x20] sm:$0xff] %v3669
      %3710 = vst [vmem:[%s262 + $0x28] sm:$0xff] %v3670
      %3711 = vst [vmem:[%s262 + $0x30] sm:$0xff] %v3671
      %3712 = vst [vmem:[%s262 + $0x38] sm:$0xff] %v3672
      %3713 = vst [vmem:[%s262 + $0x40] sm:$0xff] %v3673
      %3714 = vst [vmem:[%s262 + $0x48] sm:$0xff] %v3674
      %3715 = vst [vmem:[%s262 + $0x50] sm:$0xff] %v3675
      %3716 = vst [vmem:[%s262 + $0x58] sm:$0xff] %v3676
      %3717 = vst [vmem:[%s262 + $0x60] sm:$0xff] %v3677
      %3718 = vst [vmem:[%s262 + $0x68] sm:$0xff] %v3678
      %3719 = vst [vmem:[%s262 + $0x70] sm:$0xff] %v3679
      %3720 = vst [vmem:[%s262 + $0x78] sm:$0xff] %v3680
      %3721 = vst [vmem:[%s262 + $0x80] sm:$0xff] %v3681
      %3722 = vst [vmem:[%s262 + $0x88] sm:$0xff] %v3682
      %3723 = vst [vmem:[%s262 + $0x90] sm:$0xff] %v3683
      %3724 = vst [vmem:[%s262 + $0x98] sm:$0xff] %v3684
      %3725 = vst [vmem:[%s262 + $0xa0] sm:$0xff] %v3685
      %3726 = vst [vmem:[%s262 + $0xa8] sm:$0xff] %v3686
      %3727 = vst [vmem:[%s262 + $0xb0] sm:$0xff] %v3687
      %3728 = vst [vmem:[%s262 + $0xb8] sm:$0xff] %v3688
      %3729 = vst [vmem:[%s262 + $0xc0] sm:$0xff] %v3689
      %3730 = vst [vmem:[%s262 + $0xc8] sm:$0xff] %v3690
      %3731 = vst [vmem:[%s262 + $0xd0] sm:$0xff] %v3691
      %3732 = vst [vmem:[%s262 + $0xd8] sm:$0xff] %v3692
      %3733 = vst [vmem:[%s262 + $0xe0] sm:$0xff] %v3693
      %3734 = vst [vmem:[%s262 + $0xe8] sm:$0xff] %v3694
      %3735 = vst [vmem:[%s262 + $0xf0] sm:$0xff] %v3695
      %3736 = vst [vmem:[%s262 + $0xf8] sm:$0xff] %v3696
      %3737 = vst [vmem:[%s262 + $0x100] sm:$0xff] %v3697
      %3738 = vst [vmem:[%s262 + $0x108] sm:$0xff] %v3698
      %3739 = vst [vmem:[%s262 + $0x110] sm:$0xff] %v3699
      %3740 = vst [vmem:[%s262 + $0x118] sm:$0xff] %v3700
      %3741 = vst [vmem:[%s262 + $0x120] sm:$0xff] %v3701
      %3742 = vst [vmem:[%s262 + $0x128] sm:$0xff] %v3702
      %3743 = vst [vmem:[%s262 + $0x130] sm:$0xff] %v3703
      %3744 = vst [vmem:[%s262 + $0x138] sm:$0xf] %v3704
      %p3745 = scmp.lt.s32.totalorder %s19, 1
      %s3746 = scalar_select %p3745, %s19, 1
      %p3747 = scmp.lt.s32.totalorder %s20, 0
      %s3748 = scalar_select %p3747, %s20, 0
      %s3749 = smul.addr %s3746, 40
      %s3750 = sadd.s32 %s3748, %s3749
      %s3751 = smul.addr %s3750, 8
      %s3752 = scalar_lea.vmem %s4, %s3751
      // Predicated region
      $region37: #{aspp_conv_forward.1} parent=35 // pred_check
        %p3753 = pneg %p151
      $region38: #{aspp_conv_forward.1} parent=35 // pred_check_branch
        %3755 = sbr.rel (%p3753) target = $region40
      $region39: #{aspp_conv_forward.1} parent=35 // pred_region
        _
      $region40: #{aspp_conv_forward.1} parent=35 // pred_fallthru
        _
    $region36: #{aspp_conv_forward.1} parent=5 // pred_fallthru
      _
    %p3756 = scmp.le.s32.totalorder 2, %s10
    // Predicated region
    $region41: #{aspp_conv_forward.1} parent=5 // pred_check
      %p3757 = pneg %p3756
    $region42: #{aspp_conv_forward.1} parent=5 // pred_check_branch
      %3759 = sbr.rel (%p3757) target = $region44
    $region43: #{aspp_conv_forward.1} parent=5 // pred_region
      %s3760 = ssub.s32 %s10, 2
      // Predicated region
      $region45: #{aspp_conv_forward.1} parent=43 // pred_check
        %p3761 = pneg %p157
      $region46: #{aspp_conv_forward.1} parent=43 // pred_check_branch
        %3763 = sbr.rel (%p3761) target = $region48
      $region47: #{aspp_conv_forward.1} parent=43 // pred_region
        %p3764 = scmp.lt.s32.totalorder %s21, 1
        %s3765 = scalar_select %p3764, %s21, 1
        %p3766 = scmp.lt.s32.totalorder %s22, 0
        %s3767 = scalar_select %p3766, %s22, 0
        %s3768 = smul.addr %s3765, 40
        %s3769 = sadd.s32 %s3767, %s3768
        %s3770 = smul.addr %s3769, 8
        %s3771 = scalar_lea.vmem %s4, %s3770
      $region48: #{aspp_conv_forward.1} parent=43 // pred_fallthru
        _
    $region44: #{aspp_conv_forward.1} parent=5 // pred_fallthru
      _
  $region6: #{aspp_conv_forward.1} parent=0 // loop_footer
    %s14 = sadd.s32 1, %s10
  $region7: #{aspp_conv_forward.1} parent=0 // loop_footer_branch
    %9 = sbr.rel target = $region3
  $region8: #{aspp_conv_forward.1} parent=0 // loop_exit
    _

</llo_original>
